<compile_context>
chip_gen: v5e
topology: v5e:2x2
jax: 0.10.0
libtpu: 0.0.40
codegen_flags: <defaults>
</compile_context>

<pallas_src>
import math
import jax
import jax.numpy as jnp
import numpy as np
from jax.experimental import pallas as pl
from jax.experimental.pallas import tpu as pltpu

# --- small, deterministic problem sizes (task_id = 4 style output head) ---
B, N, H, E, A = 2, 8, 8, 2, 1
N_STEPS = 2
LN_EPS = 1e-5
_LOG_SQRT_2PI = 0.5 * math.log(2.0 * math.pi)
BN = B * N


# ---------------------------------------------------------------------------
# Fused kernel: one grid point == one full forward (N_STEPS x {proj + MDL + LN +
# gated propagation} + output head).  Grid axis = super-batch of independent forwards.
# ---------------------------------------------------------------------------
def ggnn_fused_kernel(x_ref, a_ref, adj_ref,
                      wp_ref, bp_ref, gp_ref, bep_ref,      # per (dir, edge) projection + LN
                      wzr_ref, bzr_ref, wt_ref, bt_ref,     # de-concatenated gate weights
                      w1x_ref, w1a_ref, b1_ref, w2_ref, b2_ref,   # output head
                      out_ref, stats_ref):
    x2 = x_ref[0]                                            # (B*N, H)
    col = jax.lax.broadcasted_iota(jnp.int32, (1, 8), 1)
    n_feat = float(H * E)
    n_tot = float(BN * H * E)

    def mdl_ln_dir(s_list, g_list, be_list):
        # --- one-pass row moments, shared by the global MDL stats and the LayerNorm ---
        row_s = jnp.sum(s_list[0], axis=-1, keepdims=True)              # (B*N, 1)
        row_s2 = jnp.sum(s_list[0] * s_list[0], axis=-1, keepdims=True)
        for p in s_list[1:]:
            row_s = row_s + jnp.sum(p, axis=-1, keepdims=True)
            row_s2 = row_s2 + jnp.sum(p * p, axis=-1, keepdims=True)
        tot = jnp.sum(row_s, keepdims=True)                              # (1, 1)
        tot2 = jnp.sum(row_s2, keepdims=True)                            # (1, 1)
        mean = tot / n_tot
        var_u = jnp.maximum((tot2 - n_tot * mean * mean) / (n_tot - 1.0), 1e-30)
        std = jnp.sqrt(var_u)                                            # torch.std (unbiased)
        inv_std = jax.lax.rsqrt(var_u)
        log_std = jnp.log(std)
        # --- getMDL (history=None): Normal(mean,std).log_prob, log-sum-exp, COMP, NML length
        logp = [-0.5 * jnp.square((p - mean) * inv_std) - log_std - _LOG_SQRT_2PI
                for p in s_list]
        lmax = jnp.max(logp[0], keepdims=True)
        for lp in logp[1:]:
            lmax = jnp.maximum(lmax, jnp.max(lp, keepdims=True))
        sumexp = jnp.sum(jnp.exp(logp[0] - lmax), keepdims=True)
        for lp in logp[1:]:
            sumexp = sumexp + jnp.sum(jnp.exp(lp - lmax), keepdims=True)
        sum_p = lmax + jnp.log(sumexp)
        # COMP starts at 0.0; keep the two branches separate (both are evaluated).
        comp_gt = jnp.log(1.0 + jnp.exp(lmax) * sumexp)                  # 0 > lmax branch
        comp_le = lmax + jnp.log(jnp.exp(-lmax) + sumexp)                # lmax >= 0 branch
        comp = jnp.where(lmax < 0.0, comp_gt, comp_le)
        l_nml = comp - sum_p
        # --- RN scaling + LayerNorm(H*E), stats derived from the shared row moments ---
        mu_s = row_s / n_feat
        var_s = jnp.maximum(row_s2 / n_feat - mu_s * mu_s, 0.0)
        inv_ln = jax.lax.rsqrt(l_nml * l_nml * var_s + LN_EPS)
        mu_rn = l_nml * mu_s
        y = [(l_nml * p - mu_rn) * inv_ln * g + b
             for p, g, b in zip(s_list, g_list, be_list)]
        return y, (mean, std, comp, l_nml)

    def pack_row(st):
        mean, std, comp, l_nml = st
        r = jnp.where(col == 0, mean, 0.0)
        r = r + jnp.where(col == 1, std, 0.0)
        r = r + jnp.where(col == 2, n_tot, 0.0)
        r = r + jnp.where(col == 3, comp, 0.0)
        r = r + jnp.where(col == 4, l_nml, 0.0)
        return r.astype(jnp.float32)

    stat_rows = []
    for _step in range(N_STEPS):                 # tiny fixed trip count -> unrolled
        # per (direction, edge) projections; all independent -> MXU pipelines them,
        # and every downstream operand is lane-aligned at 0 (no lane slices).
        y_dir = []
        for d in range(2):                       # 0 = fc_in, 1 = fc_out
            s_list = [jnp.dot(x2, wp_ref[d * E + e], preferred_element_type=jnp.float32)
                      + bp_ref[d * E + e]
                      for e in range(E)]
            g_list = [gp_ref[d * E + e] for e in range(E)]
            be_list = [bep_ref[d * E + e] for e in range(E)]
            y, st = mdl_ln_dir(s_list, g_list, be_list)
            y_dir.append(y)
            stat_rows.append(pack_row(st))

        # adjacency bmm via host-packed block-diagonal-per-batch matrices:
        # one (B*N,B*N)@(B*N,H) dot per (direction, edge) -> 4 dots, no concatenates.
        a_in = jnp.dot(adj_ref[0, 0], y_dir[0][0], preferred_element_type=jnp.float32)
        for e in range(1, E):
            a_in = a_in + jnp.dot(adj_ref[0, e], y_dir[0][e],
                                  preferred_element_type=jnp.float32)
        a_out = jnp.dot(adj_ref[0, E], y_dir[1][0], preferred_element_type=jnp.float32)
        for e in range(1, E):
            a_out = a_out + jnp.dot(adj_ref[0, E + e], y_dir[1][e],
                                    preferred_element_type=jnp.float32)

        # GRU-style gates, de-concatenated (3 small dots + VPU adds, no lane concats)
        zr = (jnp.dot(a_in, wzr_ref[0], preferred_element_type=jnp.float32)
              + jnp.dot(a_out, wzr_ref[1], preferred_element_type=jnp.float32)
              + jnp.dot(x2, wzr_ref[2], preferred_element_type=jnp.float32)
              + bzr_ref[...])
        zr = jax.nn.sigmoid(zr)
        zg = zr[:, :H]
        rg = zr[:, H:]
        h_hat = jnp.tanh(jnp.dot(a_in, wt_ref[0], preferred_element_type=jnp.float32)
                         + jnp.dot(a_out, wt_ref[1], preferred_element_type=jnp.float32)
                         + jnp.dot(rg * x2, wt_ref[2], preferred_element_type=jnp.float32)
                         + bt_ref[...])
        x2 = (1.0 - zg) * x2 + zg * h_hat

    # output head (task_id not in {18, 19}): fc1 -> tanh -> fc2 (MXU dot) -> sum(out dim)
    a2 = a_ref[0]                                                        # (B*N, A=1)
    hdn = jnp.tanh(jnp.dot(x2, w1x_ref[...], preferred_element_type=jnp.float32)
                   + a2 * w1a_ref[...] + b1_ref[...])                    # A==1 -> broadcast
    out_ref[0] = jnp.dot(hdn, w2_ref[...], preferred_element_type=jnp.float32) + b2_ref[...]

    # per (step, projection) scalars: [mean, std, numel, COMP, l, 0, 0, 0]
    stats_ref[0] = jnp.concatenate(stat_rows, axis=0)                    # (2*N_STEPS, 8)


# ---------------------------------------------------------------------------
# pallas_call wrapper: ONE launch for a super-batch of G independent forwards
# ---------------------------------------------------------------------------
@jax.jit
def ggnn_fused_batched(xs, anno, adjs, pp):
    G = xs.shape[0]
    weight_specs = [pl.BlockSpec(memory_space=pltpu.MemorySpace.VMEM) for _ in range(13)]
    out, stats = pl.pallas_call(
        ggnn_fused_kernel,
        out_shape=(jax.ShapeDtypeStruct((G, BN, 1), jnp.float32),
                   jax.ShapeDtypeStruct((G, 2 * N_STEPS, 8), jnp.float32)),
        grid=(G,),
        in_specs=[pl.BlockSpec((1, BN, H), lambda g: (g, 0, 0)),
                  pl.BlockSpec((1, BN, A), lambda g: (g, 0, 0)),
                  pl.BlockSpec((1, 2 * E, BN, BN), lambda g: (g, 0, 0, 0))]
                 + weight_specs,
        out_specs=(pl.BlockSpec((1, BN, 1), lambda g: (g, 0, 0)),
                   pl.BlockSpec((1, 2 * N_STEPS, 8), lambda g: (g, 0, 0))),
        compiler_params=pltpu.CompilerParams(dimension_semantics=("parallel",)),
    )(xs.reshape(G, BN, H), anno.reshape(G, BN, A), adjs,
      pp['w_proj'], pp['b_proj'], pp['g_proj'], pp['be_proj'],
      pp['w_zr'], pp['b_zr'], pp['w_t'], pp['b_t'],
      pp['w1x'], pp['w1a'], pp['b1'], pp['w2'], pp['b2'])
    return out.reshape(G, B, N), stats


def ggnn_rnln_forward(x, a, m, packed):
    """Single-call API matching GGNNRNLN.forward(x, a, m) (history=None, isTrain=True)."""
    adj = pack_adjacency(m)[None]
    out, stats = ggnn_fused_batched(x[None], a[None], adj, packed)
    out, stats = out[0], stats[0]
    x_history_new = [(stats[r, 0], stats[r, 1], stats[r, 2]) for r in range(2 * N_STEPS)]
    comp_new = [stats[r, 3] for r in range(2 * N_STEPS)]
    l_new = [stats[r, 4] for r in range(2 * N_STEPS)]
    return out, x_history_new, comp_new, l_new


# ---------------------------------------------------------------------------
# One-time host-side packing (layout plumbing, done once per model / per batch)
# ---------------------------------------------------------------------------
def pack_params(p):
    def per_edge(w):            # (R, H*E) -> (E, R, H); edge e takes columns h*E + e
        return jnp.stack([w[:, e::E] for e in range(E)], axis=0)

    return {
        'w_proj':  jnp.concatenate([per_edge(p['w_in']), per_edge(p['w_out'])], axis=0),
        'b_proj':  jnp.concatenate([per_edge(p['b_in']), per_edge(p['b_out'])], axis=0),
        'g_proj':  jnp.concatenate([per_edge(p['g_in']), per_edge(p['g_out'])], axis=0),
        'be_proj': jnp.concatenate([per_edge(p['be_in']), per_edge(p['be_out'])], axis=0),
        'w_zr': jnp.stack([jnp.concatenate([p['wz1'], p['wr1']], axis=1),
                           jnp.concatenate([p['wz2'], p['wr2']], axis=1),
                           jnp.concatenate([p['wz3'], p['wr3']], axis=1)], axis=0),
        'b_zr': jnp.concatenate([p['bz'], p['br']], axis=1),
        'w_t':  jnp.stack([p['wt1'], p['wt2'], p['wt3']], axis=0),
        'b_t':  p['bt'],
        'w1x': p['w1x'], 'w1a': p['w1a'], 'b1': p['b1'],
        'w2':  p['w2'].T,            # (H, 1) so the head reduce is an MXU dot
        'b2':  p['b2'],
    }


def pack_adjacency(m):
    """(B, N, 2*N*E) -> (2*E, B*N, B*N) block-diagonal-per-batch adjacency matrices.

    Order: in-direction edges 0..E-1, then out-direction edges 0..E-1."""
    eye_b = jnp.eye(B, dtype=jnp.float32)
    blocks = []
    for d in range(2):
        for e in range(E):
            sub = m[:, :, d * N * E + e * N: d * N * E + (e + 1) * N]    # (B, N, N)
            bd = jnp.einsum('bc,bij->bicj', eye_b, sub).reshape(BN, BN)
            blocks.append(bd)
    return jnp.stack(blocks, axis=0).astype(jnp.float32)


# ---------------------------------------------------------------------------
# Pure-JAX reference (mirrors the PyTorch forward) for a sanity check
# ---------------------------------------------------------------------------
def _edge_major(s):
    # view(-1,N,H,E).transpose(2,3).transpose(1,2).contiguous().view(-1,N*E,H)
    return jnp.transpose(s.reshape(B, N, H, E), (0, 3, 1, 2)).reshape(B, N * E, H)


def reference_forward(x, a, m, p):
    def proj(x2, w, b, gamma, beta):
        s = x2 @ w + b
        mean = jnp.mean(s)
        std = jnp.std(s, ddof=1)
        logp = -0.5 * ((s - mean) / std) ** 2 - jnp.log(std) - _LOG_SQRT_2PI
        lmax = jnp.max(logp)
        sum_p = lmax + jnp.log(jnp.sum(jnp.exp(logp - lmax)))
        comp = jnp.where(0.0 > lmax,
                         jnp.log(1.0 + jnp.sum(jnp.exp(logp))),
                         lmax + jnp.log(jnp.exp(-lmax) + jnp.sum(jnp.exp(logp - lmax))))
        l = comp - sum_p
        s = l * s
        mu = jnp.mean(s, -1, keepdims=True)
        var = jnp.mean((s - mu) ** 2, -1, keepdims=True)
        return (s - mu) / jnp.sqrt(var + LN_EPS) * gamma + beta, (mean, std, comp, l)

    xc = x
    comps, ls = [], []
    for _ in range(N_STEPS):
        x2 = xc.reshape(BN, H)
        in_ln, st_i = proj(x2, p['w_in'], p['b_in'], p['g_in'], p['be_in'])
        out_ln, st_o = proj(x2, p['w_out'], p['b_out'], p['g_out'], p['be_out'])
        comps += [st_i[2], st_o[2]]
        ls += [st_i[3], st_o[3]]
        in_re, out_re = _edge_major(in_ln.reshape(B, N, H * E)), _edge_major(out_ln.reshape(B, N, H * E))
        a_in = jnp.einsum('bij,bjh->bih', m[:, :, :N * E], in_re)
        a_out = jnp.einsum('bij,bjh->bih', m[:, :, N * E:], out_re)
        acat = jnp.concatenate([a_in, a_out, xc], -1)
        wz = jnp.concatenate([p['wz1'], p['wz2'], p['wz3']], 0)
        wr = jnp.concatenate([p['wr1'], p['wr2'], p['wr3']], 0)
        wt = jnp.concatenate([p['wt1'], p['wt2'], p['wt3']], 0)
        z = jax.nn.sigmoid(acat @ wz + p['bz'])
        r = jax.nn.sigmoid(acat @ wr + p['br'])
        joint = jnp.concatenate([a_in, a_out, r * xc], -1)
        h_hat = jnp.tanh(joint @ wt + p['bt'])
        xc = (1.0 - z) * xc + z * h_hat
    w1 = jnp.concatenate([p['w1x'], p['w1a']], 0)
    hdn = jnp.tanh(jnp.concatenate([xc, a], -1) @ w1 + p['b1'])
    out = (hdn @ p['w2'].T + p['b2']).sum(-1)
    return out, comps, ls


# ---------------------------------------------------------------------------
if __name__ == "__main__":
    key = jax.random.PRNGKey(0)
    ks = jax.random.split(key, 24)
    f32 = jnp.float32
    sc = 0.1

    params = {
        'w_in':  jax.random.normal(ks[0], (H, H * E), f32) * sc,
        'b_in':  jax.random.normal(ks[1], (1, H * E), f32) * sc,
        'g_in':  jnp.ones((1, H * E), f32),
        'be_in': jnp.zeros((1, H * E), f32),
        'w_out': jax.random.normal(ks[2], (H, H * E), f32) * sc,
        'b_out': jax.random.normal(ks[3], (1, H * E), f32) * sc,
        'g_out': jnp.ones((1, H * E), f32),
        'be_out': jnp.zeros((1, H * E), f32),
        'wz1': jax.random.normal(ks[4], (H, H), f32) * sc,
        'wz2': jax.random.normal(ks[5], (H, H), f32) * sc,
        'wz3': jax.random.normal(ks[6], (H, H), f32) * sc,
        'bz':  jax.random.normal(ks[7], (1, H), f32) * sc,
        'wr1': jax.random.normal(ks[8], (H, H), f32) * sc,
        'wr2': jax.random.normal(ks[9], (H, H), f32) * sc,
        'wr3': jax.random.normal(ks[10], (H, H), f32) * sc,
        'br':  jax.random.normal(ks[11], (1, H), f32) * sc,
        'wt1': jax.random.normal(ks[12], (H, H), f32) * sc,
        'wt2': jax.random.normal(ks[13], (H, H), f32) * sc,
        'wt3': jax.random.normal(ks[14], (H, H), f32) * sc,
        'bt':  jax.random.normal(ks[15], (1, H), f32) * sc,
        'w1x': jax.random.normal(ks[16], (H, H), f32) * sc,
        'w1a': jax.random.normal(ks[17], (A, H), f32) * sc,
        'b1':  jax.random.normal(ks[18], (1, H), f32) * sc,
        'w2':  jax.random.normal(ks[19], (1, H), f32) * sc,    # fc2 weight (out=1)
        'b2':  jax.random.normal(ks[20], (1, 1), f32) * sc,
    }

    # super-batch of G independent forward passes -> one pallas_call, parallel grid
    G = 8
    xs = jax.random.normal(ks[21], (G, B, N, H), f32)
    anno = jax.random.normal(ks[22], (G, B, N, A), f32)
    ms = (jax.random.uniform(ks[23], (G, B, N, 2 * N * E)) < 0.3).astype(f32)

    packed = pack_params(params)
    adjs = jnp.stack([pack_adjacency(ms[g]) for g in range(G)], axis=0)

    out_sb, stats_sb = ggnn_fused_batched(xs, anno, adjs, packed)
    jax.block_until_ready(out_sb)
    jax.block_until_ready(stats_sb)

    # verify every forward of the super-batch against the pure-JAX mirror of PyTorch
    for g in range(G):
        out_ref, comps_ref, ls_ref = reference_forward(xs[g], anno[g], ms[g], params)
        np.testing.assert_allclose(np.asarray(out_sb[g]), np.asarray(out_ref),
                                   rtol=3e-3, atol=3e-3)
        np.testing.assert_allclose(np.asarray(stats_sb[g, :, 3]),
                                   np.asarray(jnp.stack(comps_ref)), rtol=3e-3, atol=3e-3)
        np.testing.assert_allclose(np.asarray(stats_sb[g, :, 4]),
                                   np.asarray(jnp.stack(ls_ref)), rtol=3e-3, atol=3e-3)

    # module-style single-forward API (returns out, x_history_new, COMP_new, l_new)
    out1, hist1, comp1, l1 = ggnn_rnln_forward(xs[0], anno[0], ms[0], packed)
    jax.block_until_ready(out1)
    for c in comp1 + l1:
        jax.block_until_ready(c)

    print("KERNEL_OK")
</pallas_src>

<mosaic_0001>
module attributes {stable_mosaic.version = 11 : i64} {
  func.func @ggnn_fused_kernel(%arg0: i32, %arg1: memref<1x16x8xf32, #tpu.memory_space<vmem>>, %arg2: memref<1x16x1xf32, #tpu.memory_space<vmem>>, %arg3: memref<1x4x16x16xf32, #tpu.memory_space<vmem>>, %arg4: memref<4x8x8xf32, #tpu.memory_space<vmem>>, %arg5: memref<4x1x8xf32, #tpu.memory_space<vmem>>, %arg6: memref<4x1x8xf32, #tpu.memory_space<vmem>>, %arg7: memref<4x1x8xf32, #tpu.memory_space<vmem>>, %arg8: memref<3x8x16xf32, #tpu.memory_space<vmem>>, %arg9: memref<1x16xf32, #tpu.memory_space<vmem>>, %arg10: memref<3x8x8xf32, #tpu.memory_space<vmem>>, %arg11: memref<1x8xf32, #tpu.memory_space<vmem>>, %arg12: memref<8x8xf32, #tpu.memory_space<vmem>>, %arg13: memref<1x8xf32, #tpu.memory_space<vmem>>, %arg14: memref<1x8xf32, #tpu.memory_space<vmem>>, %arg15: memref<8x1xf32, #tpu.memory_space<vmem>>, %arg16: memref<1x1xf32, #tpu.memory_space<vmem>>, %arg17: memref<1x16x1xf32, #tpu.memory_space<vmem>>, %arg18: memref<1x4x8xf32, #tpu.memory_space<vmem>>) attributes {dimension_semantics = [#tpu.dimension_semantics<parallel>], iteration_bounds = array<i64: 8>, scalar_prefetch = 0 : i64, scratch_operands = 0 : i64, tpu.core_type = #tpu.core_type<tc>, window_params = [{transform_indices = @transform_0, window_bounds = array<i64: 1, 16, 8>}, {transform_indices = @transform_1, window_bounds = array<i64: 1, 16, 1>}, {transform_indices = @transform_2, window_bounds = array<i64: 1, 4, 16, 16>}, {pipeline_mode = #tpu.pipeline_mode<synchronous>, transform_indices = @transform_3, window_bounds = array<i64: 4, 8, 8>}, {pipeline_mode = #tpu.pipeline_mode<synchronous>, transform_indices = @transform_4, window_bounds = array<i64: 4, 1, 8>}, {pipeline_mode = #tpu.pipeline_mode<synchronous>, transform_indices = @transform_5, window_bounds = array<i64: 4, 1, 8>}, {pipeline_mode = #tpu.pipeline_mode<synchronous>, transform_indices = @transform_6, window_bounds = array<i64: 4, 1, 8>}, {pipeline_mode = #tpu.pipeline_mode<synchronous>, transform_indices = @transform_7, window_bounds = array<i64: 3, 8, 16>}, {pipeline_mode = #tpu.pipeline_mode<synchronous>, transform_indices = @transform_8, window_bounds = array<i64: 1, 16>}, {pipeline_mode = #tpu.pipeline_mode<synchronous>, transform_indices = @transform_9, window_bounds = array<i64: 3, 8, 8>}, {pipeline_mode = #tpu.pipeline_mode<synchronous>, transform_indices = @transform_10, window_bounds = array<i64: 1, 8>}, {pipeline_mode = #tpu.pipeline_mode<synchronous>, transform_indices = @transform_11, window_bounds = array<i64: 8, 8>}, {pipeline_mode = #tpu.pipeline_mode<synchronous>, transform_indices = @transform_12, window_bounds = array<i64: 1, 8>}, {pipeline_mode = #tpu.pipeline_mode<synchronous>, transform_indices = @transform_13, window_bounds = array<i64: 1, 8>}, {pipeline_mode = #tpu.pipeline_mode<synchronous>, transform_indices = @transform_14, window_bounds = array<i64: 8, 1>}, {pipeline_mode = #tpu.pipeline_mode<synchronous>, transform_indices = @transform_15, window_bounds = array<i64: 1, 1>}, {transform_indices = @transform_16, window_bounds = array<i64: 1, 16, 1>}, {transform_indices = @transform_17, window_bounds = array<i64: 1, 4, 8>}]} {
    %c0 = arith.constant 0 : index
    %c0_0 = arith.constant 0 : index
    %c0_1 = arith.constant 0 : index
    %0 = vector.load %arg1[%c0, %c0_0, %c0_1] : memref<1x16x8xf32, #tpu.memory_space<vmem>>, vector<1x16x8xf32>
    %1 = vector.shape_cast %0 : vector<1x16x8xf32> to vector<16x8xf32>
    %2 = tpu.iota {dimensions = array<i32: 1>} : vector<1x8xi32>
    %c0_2 = arith.constant 0 : index
    %c0_3 = arith.constant 0 : index
    %c0_4 = arith.constant 0 : index
    %3 = vector.load %arg4[%c0_2, %c0_3, %c0_4] : memref<4x8x8xf32, #tpu.memory_space<vmem>>, vector<1x8x8xf32>
    %4 = vector.shape_cast %3 : vector<1x8x8xf32> to vector<8x8xf32>
    %cst = arith.constant dense<0.000000e+00> : vector<16x8xf32>
    %5 = tpu.matmul %1, %4, %cst {dimension_numbers = #tpu.dot_dimension_numbers<[1], [0], [0], [1], [0, 0, 1, 1], [], []>} : vector<16x8xf32>, vector<8x8xf32>, vector<16x8xf32> -> vector<16x8xf32>
    %c0_5 = arith.constant 0 : index
    %c0_6 = arith.constant 0 : index
    %c0_7 = arith.constant 0 : index
    %6 = vector.load %arg5[%c0_5, %c0_6, %c0_7] : memref<4x1x8xf32, #tpu.memory_space<vmem>>, vector<1x1x8xf32>
    %7 = vector.shape_cast %6 : vector<1x1x8xf32> to vector<1x8xf32>
    %8 = vector.broadcast %7 : vector<1x8xf32> to vector<16x8xf32>
    %9 = arith.addf %5, %8 : vector<16x8xf32>
    %c1 = arith.constant 1 : index
    %c0_8 = arith.constant 0 : index
    %c0_9 = arith.constant 0 : index
    %10 = vector.load %arg4[%c1, %c0_8, %c0_9] : memref<4x8x8xf32, #tpu.memory_space<vmem>>, vector<1x8x8xf32>
    %11 = vector.shape_cast %10 : vector<1x8x8xf32> to vector<8x8xf32>
    %cst_10 = arith.constant dense<0.000000e+00> : vector<16x8xf32>
    %12 = tpu.matmul %1, %11, %cst_10 {dimension_numbers = #tpu.dot_dimension_numbers<[1], [0], [0], [1], [0, 0, 1, 1], [], []>} : vector<16x8xf32>, vector<8x8xf32>, vector<16x8xf32> -> vector<16x8xf32>
    %c1_11 = arith.constant 1 : index
    %c0_12 = arith.constant 0 : index
    %c0_13 = arith.constant 0 : index
    %13 = vector.load %arg5[%c1_11, %c0_12, %c0_13] : memref<4x1x8xf32, #tpu.memory_space<vmem>>, vector<1x1x8xf32>
    %14 = vector.shape_cast %13 : vector<1x1x8xf32> to vector<1x8xf32>
    %15 = vector.broadcast %14 : vector<1x8xf32> to vector<16x8xf32>
    %16 = arith.addf %12, %15 : vector<16x8xf32>
    %c0_14 = arith.constant 0 : index
    %c0_15 = arith.constant 0 : index
    %c0_16 = arith.constant 0 : index
    %17 = vector.load %arg6[%c0_14, %c0_15, %c0_16] : memref<4x1x8xf32, #tpu.memory_space<vmem>>, vector<1x1x8xf32>
    %18 = vector.shape_cast %17 : vector<1x1x8xf32> to vector<1x8xf32>
    %c1_17 = arith.constant 1 : index
    %c0_18 = arith.constant 0 : index
    %c0_19 = arith.constant 0 : index
    %19 = vector.load %arg6[%c1_17, %c0_18, %c0_19] : memref<4x1x8xf32, #tpu.memory_space<vmem>>, vector<1x1x8xf32>
    %20 = vector.shape_cast %19 : vector<1x1x8xf32> to vector<1x8xf32>
    %c0_20 = arith.constant 0 : index
    %c0_21 = arith.constant 0 : index
    %c0_22 = arith.constant 0 : index
    %21 = vector.load %arg7[%c0_20, %c0_21, %c0_22] : memref<4x1x8xf32, #tpu.memory_space<vmem>>, vector<1x1x8xf32>
    %22 = vector.shape_cast %21 : vector<1x1x8xf32> to vector<1x8xf32>
    %c1_23 = arith.constant 1 : index
    %c0_24 = arith.constant 0 : index
    %c0_25 = arith.constant 0 : index
    %23 = vector.load %arg7[%c1_23, %c0_24, %c0_25] : memref<4x1x8xf32, #tpu.memory_space<vmem>>, vector<1x1x8xf32>
    %24 = vector.shape_cast %23 : vector<1x1x8xf32> to vector<1x8xf32>
    %cst_26 = arith.constant dense<0.000000e+00> : vector<16xf32>
    %25 = vector.multi_reduction <add>, %9, %cst_26 [1] : vector<16x8xf32> to vector<16xf32>
    %26 = vector.shape_cast %25 : vector<16xf32> to vector<16x1xf32>
    %27 = arith.mulf %9, %9 : vector<16x8xf32>
    %cst_27 = arith.constant dense<0.000000e+00> : vector<16xf32>
    %28 = vector.multi_reduction <add>, %27, %cst_27 [1] : vector<16x8xf32> to vector<16xf32>
    %29 = vector.shape_cast %28 : vector<16xf32> to vector<16x1xf32>
    %cst_28 = arith.constant dense<0.000000e+00> : vector<16xf32>
    %30 = vector.multi_reduction <add>, %16, %cst_28 [1] : vector<16x8xf32> to vector<16xf32>
    %31 = vector.shape_cast %30 : vector<16xf32> to vector<16x1xf32>
    %32 = arith.addf %26, %31 : vector<16x1xf32>
    %33 = arith.mulf %16, %16 : vector<16x8xf32>
    %cst_29 = arith.constant dense<0.000000e+00> : vector<16xf32>
    %34 = vector.multi_reduction <add>, %33, %cst_29 [1] : vector<16x8xf32> to vector<16xf32>
    %35 = vector.shape_cast %34 : vector<16xf32> to vector<16x1xf32>
    %36 = arith.addf %29, %35 : vector<16x1xf32>
    %37 = vector.shape_cast %32 : vector<16x1xf32> to vector<1x16x1xf32>
    %cst_30 = arith.constant dense<0.000000e+00> : vector<1xf32>
    %38 = vector.multi_reduction <add>, %37, %cst_30 [1, 2] : vector<1x16x1xf32> to vector<1xf32>
    %39 = vector.shape_cast %38 : vector<1xf32> to vector<1x1x1xf32>
    %40 = vector.extract %39[0, 0, 0] : f32 from vector<1x1x1xf32>
    %41 = vector.broadcast %40 : f32 to vector<1x1xf32>
    %42 = vector.shape_cast %36 : vector<16x1xf32> to vector<1x16x1xf32>
    %cst_31 = arith.constant dense<0.000000e+00> : vector<1xf32>
    %43 = vector.multi_reduction <add>, %42, %cst_31 [1, 2] : vector<1x16x1xf32> to vector<1xf32>
    %44 = vector.shape_cast %43 : vector<1xf32> to vector<1x1x1xf32>
    %45 = vector.extract %44[0, 0, 0] : f32 from vector<1x1x1xf32>
    %46 = vector.broadcast %45 : f32 to vector<1x1xf32>
    %cst_32 = arith.constant 2.560000e+02 : f32
    %47 = vector.broadcast %cst_32 : f32 to vector<1x1xf32>
    %48 = arith.divf %41, %47 : vector<1x1xf32>
    %cst_33 = arith.constant 2.560000e+02 : f32
    %49 = vector.broadcast %cst_33 : f32 to vector<1x1xf32>
    %50 = arith.mulf %49, %48 : vector<1x1xf32>
    %51 = arith.mulf %50, %48 : vector<1x1xf32>
    %52 = arith.subf %46, %51 : vector<1x1xf32>
    %cst_34 = arith.constant 2.550000e+02 : f32
    %53 = vector.broadcast %cst_34 : f32 to vector<1x1xf32>
    %54 = arith.divf %52, %53 : vector<1x1xf32>
    %cst_35 = arith.constant 1.000000e-30 : f32
    %55 = vector.broadcast %cst_35 : f32 to vector<1x1xf32>
    %56 = arith.maximumf %54, %55 : vector<1x1xf32>
    %57 = math.sqrt %56 : vector<1x1xf32>
    %58 = math.rsqrt %56 : vector<1x1xf32>
    %59 = math.log %57 : vector<1x1xf32>
    %60 = vector.broadcast %48 : vector<1x1xf32> to vector<16x8xf32>
    %61 = arith.subf %9, %60 : vector<16x8xf32>
    %62 = vector.broadcast %58 : vector<1x1xf32> to vector<16x8xf32>
    %63 = arith.mulf %61, %62 : vector<16x8xf32>
    %64 = arith.mulf %63, %63 : vector<16x8xf32>
    %cst_36 = arith.constant -5.000000e-01 : f32
    %65 = vector.broadcast %cst_36 : f32 to vector<16x8xf32>
    %66 = arith.mulf %65, %64 : vector<16x8xf32>
    %67 = vector.broadcast %59 : vector<1x1xf32> to vector<16x8xf32>
    %68 = arith.subf %66, %67 : vector<16x8xf32>
    %cst_37 = arith.constant 0.918938517 : f32
    %69 = vector.broadcast %cst_37 : f32 to vector<16x8xf32>
    %70 = arith.subf %68, %69 : vector<16x8xf32>
    %71 = vector.broadcast %48 : vector<1x1xf32> to vector<16x8xf32>
    %72 = arith.subf %16, %71 : vector<16x8xf32>
    %73 = vector.broadcast %58 : vector<1x1xf32> to vector<16x8xf32>
    %74 = arith.mulf %72, %73 : vector<16x8xf32>
    %75 = arith.mulf %74, %74 : vector<16x8xf32>
    %cst_38 = arith.constant -5.000000e-01 : f32
    %76 = vector.broadcast %cst_38 : f32 to vector<16x8xf32>
    %77 = arith.mulf %76, %75 : vector<16x8xf32>
    %78 = vector.broadcast %59 : vector<1x1xf32> to vector<16x8xf32>
    %79 = arith.subf %77, %78 : vector<16x8xf32>
    %cst_39 = arith.constant 0.918938517 : f32
    %80 = vector.broadcast %cst_39 : f32 to vector<16x8xf32>
    %81 = arith.subf %79, %80 : vector<16x8xf32>
    %82 = vector.shape_cast %70 : vector<16x8xf32> to vector<1x16x8xf32>
    %cst_40 = arith.constant dense<0xFF800000> : vector<1xf32>
    %83 = vector.multi_reduction <maximumf>, %82, %cst_40 [1, 2] : vector<1x16x8xf32> to vector<1xf32>
    %84 = vector.shape_cast %83 : vector<1xf32> to vector<1x1x1xf32>
    %85 = vector.extract %84[0, 0, 0] : f32 from vector<1x1x1xf32>
    %86 = vector.broadcast %85 : f32 to vector<1x1xf32>
    %87 = vector.shape_cast %81 : vector<16x8xf32> to vector<1x16x8xf32>
    %cst_41 = arith.constant dense<0xFF800000> : vector<1xf32>
    %88 = vector.multi_reduction <maximumf>, %87, %cst_41 [1, 2] : vector<1x16x8xf32> to vector<1xf32>
    %89 = vector.shape_cast %88 : vector<1xf32> to vector<1x1x1xf32>
    %90 = vector.extract %89[0, 0, 0] : f32 from vector<1x1x1xf32>
    %91 = vector.broadcast %90 : f32 to vector<1x1xf32>
    %92 = arith.maximumf %86, %91 : vector<1x1xf32>
    %93 = vector.broadcast %92 : vector<1x1xf32> to vector<16x8xf32>
    %94 = arith.subf %70, %93 : vector<16x8xf32>
    %95 = math.exp %94 : vector<16x8xf32>
    %96 = vector.shape_cast %95 : vector<16x8xf32> to vector<1x16x8xf32>
    %cst_42 = arith.constant dense<0.000000e+00> : vector<1xf32>
    %97 = vector.multi_reduction <add>, %96, %cst_42 [1, 2] : vector<1x16x8xf32> to vector<1xf32>
    %98 = vector.shape_cast %97 : vector<1xf32> to vector<1x1x1xf32>
    %99 = vector.extract %98[0, 0, 0] : f32 from vector<1x1x1xf32>
    %100 = vector.broadcast %99 : f32 to vector<1x1xf32>
    %101 = vector.broadcast %92 : vector<1x1xf32> to vector<16x8xf32>
    %102 = arith.subf %81, %101 : vector<16x8xf32>
    %103 = math.exp %102 : vector<16x8xf32>
    %104 = vector.shape_cast %103 : vector<16x8xf32> to vector<1x16x8xf32>
    %cst_43 = arith.constant dense<0.000000e+00> : vector<1xf32>
    %105 = vector.multi_reduction <add>, %104, %cst_43 [1, 2] : vector<1x16x8xf32> to vector<1xf32>
    %106 = vector.shape_cast %105 : vector<1xf32> to vector<1x1x1xf32>
    %107 = vector.extract %106[0, 0, 0] : f32 from vector<1x1x1xf32>
    %108 = vector.broadcast %107 : f32 to vector<1x1xf32>
    %109 = arith.addf %100, %108 : vector<1x1xf32>
    %110 = math.log %109 : vector<1x1xf32>
    %111 = arith.addf %92, %110 : vector<1x1xf32>
    %112 = math.exp %92 : vector<1x1xf32>
    %113 = arith.mulf %112, %109 : vector<1x1xf32>
    %cst_44 = arith.constant 1.000000e+00 : f32
    %114 = vector.broadcast %cst_44 : f32 to vector<1x1xf32>
    %115 = arith.addf %114, %113 : vector<1x1xf32>
    %116 = math.log %115 : vector<1x1xf32>
    %cst_45 = arith.constant 0.000000e+00 : f32
    %117 = vector.broadcast %cst_45 : f32 to vector<1x1xf32>
    %118 = arith.subf %117, %92 : vector<1x1xf32>
    %119 = math.exp %118 : vector<1x1xf32>
    %120 = arith.addf %119, %109 : vector<1x1xf32>
    %121 = math.log %120 : vector<1x1xf32>
    %122 = arith.addf %92, %121 : vector<1x1xf32>
    %cst_46 = arith.constant 0.000000e+00 : f32
    %123 = vector.broadcast %cst_46 : f32 to vector<1x1xf32>
    %124 = arith.cmpf olt, %92, %123 : vector<1x1xf32>
    %125 = arith.select %124, %116, %122 : vector<1x1xi1>, vector<1x1xf32>
    %126 = arith.subf %125, %111 : vector<1x1xf32>
    %cst_47 = arith.constant 1.600000e+01 : f32
    %127 = vector.broadcast %cst_47 : f32 to vector<16x1xf32>
    %128 = arith.divf %32, %127 : vector<16x1xf32>
    %cst_48 = arith.constant 1.600000e+01 : f32
    %129 = vector.broadcast %cst_48 : f32 to vector<16x1xf32>
    %130 = arith.divf %36, %129 : vector<16x1xf32>
    %131 = arith.mulf %128, %128 : vector<16x1xf32>
    %132 = arith.subf %130, %131 : vector<16x1xf32>
    %cst_49 = arith.constant 0.000000e+00 : f32
    %133 = vector.broadcast %cst_49 : f32 to vector<16x1xf32>
    %134 = arith.maximumf %132, %133 : vector<16x1xf32>
    %135 = arith.mulf %126, %126 : vector<1x1xf32>
    %136 = vector.broadcast %135 : vector<1x1xf32> to vector<16x1xf32>
    %137 = arith.mulf %136, %134 : vector<16x1xf32>
    %cst_50 = arith.constant 9.99999974E-6 : f32
    %138 = vector.broadcast %cst_50 : f32 to vector<16x1xf32>
    %139 = arith.addf %137, %138 : vector<16x1xf32>
    %140 = math.rsqrt %139 : vector<16x1xf32>
    %141 = vector.broadcast %126 : vector<1x1xf32> to vector<16x1xf32>
    %142 = arith.mulf %141, %128 : vector<16x1xf32>
    %143 = vector.broadcast %126 : vector<1x1xf32> to vector<16x8xf32>
    %144 = arith.mulf %143, %9 : vector<16x8xf32>
    %145 = vector.broadcast %142 : vector<16x1xf32> to vector<16x8xf32>
    %146 = arith.subf %144, %145 : vector<16x8xf32>
    %147 = vector.broadcast %140 : vector<16x1xf32> to vector<16x8xf32>
    %148 = arith.mulf %146, %147 : vector<16x8xf32>
    %149 = vector.broadcast %18 : vector<1x8xf32> to vector<16x8xf32>
    %150 = arith.mulf %148, %149 : vector<16x8xf32>
    %151 = vector.broadcast %22 : vector<1x8xf32> to vector<16x8xf32>
    %152 = arith.addf %150, %151 : vector<16x8xf32>
    %153 = vector.broadcast %126 : vector<1x1xf32> to vector<16x8xf32>
    %154 = arith.mulf %153, %16 : vector<16x8xf32>
    %155 = vector.broadcast %142 : vector<16x1xf32> to vector<16x8xf32>
    %156 = arith.subf %154, %155 : vector<16x8xf32>
    %157 = vector.broadcast %140 : vector<16x1xf32> to vector<16x8xf32>
    %158 = arith.mulf %156, %157 : vector<16x8xf32>
    %159 = vector.broadcast %20 : vector<1x8xf32> to vector<16x8xf32>
    %160 = arith.mulf %158, %159 : vector<16x8xf32>
    %161 = vector.broadcast %24 : vector<1x8xf32> to vector<16x8xf32>
    %162 = arith.addf %160, %161 : vector<16x8xf32>
    %c0_i32 = arith.constant 0 : i32
    %163 = vector.broadcast %c0_i32 : i32 to vector<1x8xi32>
    %164 = arith.cmpi eq, %2, %163 : vector<1x8xi32>
    %cst_51 = arith.constant 0.000000e+00 : f32
    %165 = vector.shape_cast %48 : vector<1x1xf32> to vector<1x1xf32>
    %166 = vector.broadcast %165 : vector<1x1xf32> to vector<1x8xf32>
    %167 = vector.broadcast %cst_51 : f32 to vector<1x8xf32>
    %168 = arith.select %164, %166, %167 : vector<1x8xi1>, vector<1x8xf32>
    %c1_i32 = arith.constant 1 : i32
    %169 = vector.broadcast %c1_i32 : i32 to vector<1x8xi32>
    %170 = arith.cmpi eq, %2, %169 : vector<1x8xi32>
    %cst_52 = arith.constant 0.000000e+00 : f32
    %171 = vector.shape_cast %57 : vector<1x1xf32> to vector<1x1xf32>
    %172 = vector.broadcast %171 : vector<1x1xf32> to vector<1x8xf32>
    %173 = vector.broadcast %cst_52 : f32 to vector<1x8xf32>
    %174 = arith.select %170, %172, %173 : vector<1x8xi1>, vector<1x8xf32>
    %175 = arith.addf %168, %174 : vector<1x8xf32>
    %c2_i32 = arith.constant 2 : i32
    %176 = vector.broadcast %c2_i32 : i32 to vector<1x8xi32>
    %177 = arith.cmpi eq, %2, %176 : vector<1x8xi32>
    %cst_53 = arith.constant 2.560000e+02 : f32
    %cst_54 = arith.constant 0.000000e+00 : f32
    %178 = vector.broadcast %cst_53 : f32 to vector<1x8xf32>
    %179 = vector.broadcast %cst_54 : f32 to vector<1x8xf32>
    %180 = arith.select %177, %178, %179 : vector<1x8xi1>, vector<1x8xf32>
    %181 = arith.addf %175, %180 : vector<1x8xf32>
    %c3_i32 = arith.constant 3 : i32
    %182 = vector.broadcast %c3_i32 : i32 to vector<1x8xi32>
    %183 = arith.cmpi eq, %2, %182 : vector<1x8xi32>
    %cst_55 = arith.constant 0.000000e+00 : f32
    %184 = vector.shape_cast %125 : vector<1x1xf32> to vector<1x1xf32>
    %185 = vector.broadcast %184 : vector<1x1xf32> to vector<1x8xf32>
    %186 = vector.broadcast %cst_55 : f32 to vector<1x8xf32>
    %187 = arith.select %183, %185, %186 : vector<1x8xi1>, vector<1x8xf32>
    %188 = arith.addf %181, %187 : vector<1x8xf32>
    %c4_i32 = arith.constant 4 : i32
    %189 = vector.broadcast %c4_i32 : i32 to vector<1x8xi32>
    %190 = arith.cmpi eq, %2, %189 : vector<1x8xi32>
    %cst_56 = arith.constant 0.000000e+00 : f32
    %191 = vector.shape_cast %126 : vector<1x1xf32> to vector<1x1xf32>
    %192 = vector.broadcast %191 : vector<1x1xf32> to vector<1x8xf32>
    %193 = vector.broadcast %cst_56 : f32 to vector<1x8xf32>
    %194 = arith.select %190, %192, %193 : vector<1x8xi1>, vector<1x8xf32>
    %195 = arith.addf %188, %194 : vector<1x8xf32>
    %c2 = arith.constant 2 : index
    %c0_57 = arith.constant 0 : index
    %c0_58 = arith.constant 0 : index
    %196 = vector.load %arg4[%c2, %c0_57, %c0_58] : memref<4x8x8xf32, #tpu.memory_space<vmem>>, vector<1x8x8xf32>
    %197 = vector.shape_cast %196 : vector<1x8x8xf32> to vector<8x8xf32>
    %cst_59 = arith.constant dense<0.000000e+00> : vector<16x8xf32>
    %198 = tpu.matmul %1, %197, %cst_59 {dimension_numbers = #tpu.dot_dimension_numbers<[1], [0], [0], [1], [0, 0, 1, 1], [], []>} : vector<16x8xf32>, vector<8x8xf32>, vector<16x8xf32> -> vector<16x8xf32>
    %c2_60 = arith.constant 2 : index
    %c0_61 = arith.constant 0 : index
    %c0_62 = arith.constant 0 : index
    %199 = vector.load %arg5[%c2_60, %c0_61, %c0_62] : memref<4x1x8xf32, #tpu.memory_space<vmem>>, vector<1x1x8xf32>
    %200 = vector.shape_cast %199 : vector<1x1x8xf32> to vector<1x8xf32>
    %201 = vector.broadcast %200 : vector<1x8xf32> to vector<16x8xf32>
    %202 = arith.addf %198, %201 : vector<16x8xf32>
    %c3 = arith.constant 3 : index
    %c0_63 = arith.constant 0 : index
    %c0_64 = arith.constant 0 : index
    %203 = vector.load %arg4[%c3, %c0_63, %c0_64] : memref<4x8x8xf32, #tpu.memory_space<vmem>>, vector<1x8x8xf32>
    %204 = vector.shape_cast %203 : vector<1x8x8xf32> to vector<8x8xf32>
    %cst_65 = arith.constant dense<0.000000e+00> : vector<16x8xf32>
    %205 = tpu.matmul %1, %204, %cst_65 {dimension_numbers = #tpu.dot_dimension_numbers<[1], [0], [0], [1], [0, 0, 1, 1], [], []>} : vector<16x8xf32>, vector<8x8xf32>, vector<16x8xf32> -> vector<16x8xf32>
    %c3_66 = arith.constant 3 : index
    %c0_67 = arith.constant 0 : index
    %c0_68 = arith.constant 0 : index
    %206 = vector.load %arg5[%c3_66, %c0_67, %c0_68] : memref<4x1x8xf32, #tpu.memory_space<vmem>>, vector<1x1x8xf32>
    %207 = vector.shape_cast %206 : vector<1x1x8xf32> to vector<1x8xf32>
    %208 = vector.broadcast %207 : vector<1x8xf32> to vector<16x8xf32>
    %209 = arith.addf %205, %208 : vector<16x8xf32>
    %c2_69 = arith.constant 2 : index
    %c0_70 = arith.constant 0 : index
    %c0_71 = arith.constant 0 : index
    %210 = vector.load %arg6[%c2_69, %c0_70, %c0_71] : memref<4x1x8xf32, #tpu.memory_space<vmem>>, vector<1x1x8xf32>
    %211 = vector.shape_cast %210 : vector<1x1x8xf32> to vector<1x8xf32>
    %c3_72 = arith.constant 3 : index
    %c0_73 = arith.constant 0 : index
    %c0_74 = arith.constant 0 : index
    %212 = vector.load %arg6[%c3_72, %c0_73, %c0_74] : memref<4x1x8xf32, #tpu.memory_space<vmem>>, vector<1x1x8xf32>
    %213 = vector.shape_cast %212 : vector<1x1x8xf32> to vector<1x8xf32>
    %c2_75 = arith.constant 2 : index
    %c0_76 = arith.constant 0 : index
    %c0_77 = arith.constant 0 : index
    %214 = vector.load %arg7[%c2_75, %c0_76, %c0_77] : memref<4x1x8xf32, #tpu.memory_space<vmem>>, vector<1x1x8xf32>
    %215 = vector.shape_cast %214 : vector<1x1x8xf32> to vector<1x8xf32>
    %c3_78 = arith.constant 3 : index
    %c0_79 = arith.constant 0 : index
    %c0_80 = arith.constant 0 : index
    %216 = vector.load %arg7[%c3_78, %c0_79, %c0_80] : memref<4x1x8xf32, #tpu.memory_space<vmem>>, vector<1x1x8xf32>
    %217 = vector.shape_cast %216 : vector<1x1x8xf32> to vector<1x8xf32>
    %cst_81 = arith.constant dense<0.000000e+00> : vector<16xf32>
    %218 = vector.multi_reduction <add>, %202, %cst_81 [1] : vector<16x8xf32> to vector<16xf32>
    %219 = vector.shape_cast %218 : vector<16xf32> to vector<16x1xf32>
    %220 = arith.mulf %202, %202 : vector<16x8xf32>
    %cst_82 = arith.constant dense<0.000000e+00> : vector<16xf32>
    %221 = vector.multi_reduction <add>, %220, %cst_82 [1] : vector<16x8xf32> to vector<16xf32>
    %222 = vector.shape_cast %221 : vector<16xf32> to vector<16x1xf32>
    %cst_83 = arith.constant dense<0.000000e+00> : vector<16xf32>
    %223 = vector.multi_reduction <add>, %209, %cst_83 [1] : vector<16x8xf32> to vector<16xf32>
    %224 = vector.shape_cast %223 : vector<16xf32> to vector<16x1xf32>
    %225 = arith.addf %219, %224 : vector<16x1xf32>
    %226 = arith.mulf %209, %209 : vector<16x8xf32>
    %cst_84 = arith.constant dense<0.000000e+00> : vector<16xf32>
    %227 = vector.multi_reduction <add>, %226, %cst_84 [1] : vector<16x8xf32> to vector<16xf32>
    %228 = vector.shape_cast %227 : vector<16xf32> to vector<16x1xf32>
    %229 = arith.addf %222, %228 : vector<16x1xf32>
    %230 = vector.shape_cast %225 : vector<16x1xf32> to vector<1x16x1xf32>
    %cst_85 = arith.constant dense<0.000000e+00> : vector<1xf32>
    %231 = vector.multi_reduction <add>, %230, %cst_85 [1, 2] : vector<1x16x1xf32> to vector<1xf32>
    %232 = vector.shape_cast %231 : vector<1xf32> to vector<1x1x1xf32>
    %233 = vector.extract %232[0, 0, 0] : f32 from vector<1x1x1xf32>
    %234 = vector.broadcast %233 : f32 to vector<1x1xf32>
    %235 = vector.shape_cast %229 : vector<16x1xf32> to vector<1x16x1xf32>
    %cst_86 = arith.constant dense<0.000000e+00> : vector<1xf32>
    %236 = vector.multi_reduction <add>, %235, %cst_86 [1, 2] : vector<1x16x1xf32> to vector<1xf32>
    %237 = vector.shape_cast %236 : vector<1xf32> to vector<1x1x1xf32>
    %238 = vector.extract %237[0, 0, 0] : f32 from vector<1x1x1xf32>
    %239 = vector.broadcast %238 : f32 to vector<1x1xf32>
    %cst_87 = arith.constant 2.560000e+02 : f32
    %240 = vector.broadcast %cst_87 : f32 to vector<1x1xf32>
    %241 = arith.divf %234, %240 : vector<1x1xf32>
    %cst_88 = arith.constant 2.560000e+02 : f32
    %242 = vector.broadcast %cst_88 : f32 to vector<1x1xf32>
    %243 = arith.mulf %242, %241 : vector<1x1xf32>
    %244 = arith.mulf %243, %241 : vector<1x1xf32>
    %245 = arith.subf %239, %244 : vector<1x1xf32>
    %cst_89 = arith.constant 2.550000e+02 : f32
    %246 = vector.broadcast %cst_89 : f32 to vector<1x1xf32>
    %247 = arith.divf %245, %246 : vector<1x1xf32>
    %cst_90 = arith.constant 1.000000e-30 : f32
    %248 = vector.broadcast %cst_90 : f32 to vector<1x1xf32>
    %249 = arith.maximumf %247, %248 : vector<1x1xf32>
    %250 = math.sqrt %249 : vector<1x1xf32>
    %251 = math.rsqrt %249 : vector<1x1xf32>
    %252 = math.log %250 : vector<1x1xf32>
    %253 = vector.broadcast %241 : vector<1x1xf32> to vector<16x8xf32>
    %254 = arith.subf %202, %253 : vector<16x8xf32>
    %255 = vector.broadcast %251 : vector<1x1xf32> to vector<16x8xf32>
    %256 = arith.mulf %254, %255 : vector<16x8xf32>
    %257 = arith.mulf %256, %256 : vector<16x8xf32>
    %cst_91 = arith.constant -5.000000e-01 : f32
    %258 = vector.broadcast %cst_91 : f32 to vector<16x8xf32>
    %259 = arith.mulf %258, %257 : vector<16x8xf32>
    %260 = vector.broadcast %252 : vector<1x1xf32> to vector<16x8xf32>
    %261 = arith.subf %259, %260 : vector<16x8xf32>
    %cst_92 = arith.constant 0.918938517 : f32
    %262 = vector.broadcast %cst_92 : f32 to vector<16x8xf32>
    %263 = arith.subf %261, %262 : vector<16x8xf32>
    %264 = vector.broadcast %241 : vector<1x1xf32> to vector<16x8xf32>
    %265 = arith.subf %209, %264 : vector<16x8xf32>
    %266 = vector.broadcast %251 : vector<1x1xf32> to vector<16x8xf32>
    %267 = arith.mulf %265, %266 : vector<16x8xf32>
    %268 = arith.mulf %267, %267 : vector<16x8xf32>
    %cst_93 = arith.constant -5.000000e-01 : f32
    %269 = vector.broadcast %cst_93 : f32 to vector<16x8xf32>
    %270 = arith.mulf %269, %268 : vector<16x8xf32>
    %271 = vector.broadcast %252 : vector<1x1xf32> to vector<16x8xf32>
    %272 = arith.subf %270, %271 : vector<16x8xf32>
    %cst_94 = arith.constant 0.918938517 : f32
    %273 = vector.broadcast %cst_94 : f32 to vector<16x8xf32>
    %274 = arith.subf %272, %273 : vector<16x8xf32>
    %275 = vector.shape_cast %263 : vector<16x8xf32> to vector<1x16x8xf32>
    %cst_95 = arith.constant dense<0xFF800000> : vector<1xf32>
    %276 = vector.multi_reduction <maximumf>, %275, %cst_95 [1, 2] : vector<1x16x8xf32> to vector<1xf32>
    %277 = vector.shape_cast %276 : vector<1xf32> to vector<1x1x1xf32>
    %278 = vector.extract %277[0, 0, 0] : f32 from vector<1x1x1xf32>
    %279 = vector.broadcast %278 : f32 to vector<1x1xf32>
    %280 = vector.shape_cast %274 : vector<16x8xf32> to vector<1x16x8xf32>
    %cst_96 = arith.constant dense<0xFF800000> : vector<1xf32>
    %281 = vector.multi_reduction <maximumf>, %280, %cst_96 [1, 2] : vector<1x16x8xf32> to vector<1xf32>
    %282 = vector.shape_cast %281 : vector<1xf32> to vector<1x1x1xf32>
    %283 = vector.extract %282[0, 0, 0] : f32 from vector<1x1x1xf32>
    %284 = vector.broadcast %283 : f32 to vector<1x1xf32>
    %285 = arith.maximumf %279, %284 : vector<1x1xf32>
    %286 = vector.broadcast %285 : vector<1x1xf32> to vector<16x8xf32>
    %287 = arith.subf %263, %286 : vector<16x8xf32>
    %288 = math.exp %287 : vector<16x8xf32>
    %289 = vector.shape_cast %288 : vector<16x8xf32> to vector<1x16x8xf32>
    %cst_97 = arith.constant dense<0.000000e+00> : vector<1xf32>
    %290 = vector.multi_reduction <add>, %289, %cst_97 [1, 2] : vector<1x16x8xf32> to vector<1xf32>
    %291 = vector.shape_cast %290 : vector<1xf32> to vector<1x1x1xf32>
    %292 = vector.extract %291[0, 0, 0] : f32 from vector<1x1x1xf32>
    %293 = vector.broadcast %292 : f32 to vector<1x1xf32>
    %294 = vector.broadcast %285 : vector<1x1xf32> to vector<16x8xf32>
    %295 = arith.subf %274, %294 : vector<16x8xf32>
    %296 = math.exp %295 : vector<16x8xf32>
    %297 = vector.shape_cast %296 : vector<16x8xf32> to vector<1x16x8xf32>
    %cst_98 = arith.constant dense<0.000000e+00> : vector<1xf32>
    %298 = vector.multi_reduction <add>, %297, %cst_98 [1, 2] : vector<1x16x8xf32> to vector<1xf32>
    %299 = vector.shape_cast %298 : vector<1xf32> to vector<1x1x1xf32>
    %300 = vector.extract %299[0, 0, 0] : f32 from vector<1x1x1xf32>
    %301 = vector.broadcast %300 : f32 to vector<1x1xf32>
    %302 = arith.addf %293, %301 : vector<1x1xf32>
    %303 = math.log %302 : vector<1x1xf32>
    %304 = arith.addf %285, %303 : vector<1x1xf32>
    %305 = math.exp %285 : vector<1x1xf32>
    %306 = arith.mulf %305, %302 : vector<1x1xf32>
    %cst_99 = arith.constant 1.000000e+00 : f32
    %307 = vector.broadcast %cst_99 : f32 to vector<1x1xf32>
    %308 = arith.addf %307, %306 : vector<1x1xf32>
    %309 = math.log %308 : vector<1x1xf32>
    %cst_100 = arith.constant 0.000000e+00 : f32
    %310 = vector.broadcast %cst_100 : f32 to vector<1x1xf32>
    %311 = arith.subf %310, %285 : vector<1x1xf32>
    %312 = math.exp %311 : vector<1x1xf32>
    %313 = arith.addf %312, %302 : vector<1x1xf32>
    %314 = math.log %313 : vector<1x1xf32>
    %315 = arith.addf %285, %314 : vector<1x1xf32>
    %cst_101 = arith.constant 0.000000e+00 : f32
    %316 = vector.broadcast %cst_101 : f32 to vector<1x1xf32>
    %317 = arith.cmpf olt, %285, %316 : vector<1x1xf32>
    %318 = arith.select %317, %309, %315 : vector<1x1xi1>, vector<1x1xf32>
    %319 = arith.subf %318, %304 : vector<1x1xf32>
    %cst_102 = arith.constant 1.600000e+01 : f32
    %320 = vector.broadcast %cst_102 : f32 to vector<16x1xf32>
    %321 = arith.divf %225, %320 : vector<16x1xf32>
    %cst_103 = arith.constant 1.600000e+01 : f32
    %322 = vector.broadcast %cst_103 : f32 to vector<16x1xf32>
    %323 = arith.divf %229, %322 : vector<16x1xf32>
    %324 = arith.mulf %321, %321 : vector<16x1xf32>
    %325 = arith.subf %323, %324 : vector<16x1xf32>
    %cst_104 = arith.constant 0.000000e+00 : f32
    %326 = vector.broadcast %cst_104 : f32 to vector<16x1xf32>
    %327 = arith.maximumf %325, %326 : vector<16x1xf32>
    %328 = arith.mulf %319, %319 : vector<1x1xf32>
    %329 = vector.broadcast %328 : vector<1x1xf32> to vector<16x1xf32>
    %330 = arith.mulf %329, %327 : vector<16x1xf32>
    %cst_105 = arith.constant 9.99999974E-6 : f32
    %331 = vector.broadcast %cst_105 : f32 to vector<16x1xf32>
    %332 = arith.addf %330, %331 : vector<16x1xf32>
    %333 = math.rsqrt %332 : vector<16x1xf32>
    %334 = vector.broadcast %319 : vector<1x1xf32> to vector<16x1xf32>
    %335 = arith.mulf %334, %321 : vector<16x1xf32>
    %336 = vector.broadcast %319 : vector<1x1xf32> to vector<16x8xf32>
    %337 = arith.mulf %336, %202 : vector<16x8xf32>
    %338 = vector.broadcast %335 : vector<16x1xf32> to vector<16x8xf32>
    %339 = arith.subf %337, %338 : vector<16x8xf32>
    %340 = vector.broadcast %333 : vector<16x1xf32> to vector<16x8xf32>
    %341 = arith.mulf %339, %340 : vector<16x8xf32>
    %342 = vector.broadcast %211 : vector<1x8xf32> to vector<16x8xf32>
    %343 = arith.mulf %341, %342 : vector<16x8xf32>
    %344 = vector.broadcast %215 : vector<1x8xf32> to vector<16x8xf32>
    %345 = arith.addf %343, %344 : vector<16x8xf32>
    %346 = vector.broadcast %319 : vector<1x1xf32> to vector<16x8xf32>
    %347 = arith.mulf %346, %209 : vector<16x8xf32>
    %348 = vector.broadcast %335 : vector<16x1xf32> to vector<16x8xf32>
    %349 = arith.subf %347, %348 : vector<16x8xf32>
    %350 = vector.broadcast %333 : vector<16x1xf32> to vector<16x8xf32>
    %351 = arith.mulf %349, %350 : vector<16x8xf32>
    %352 = vector.broadcast %213 : vector<1x8xf32> to vector<16x8xf32>
    %353 = arith.mulf %351, %352 : vector<16x8xf32>
    %354 = vector.broadcast %217 : vector<1x8xf32> to vector<16x8xf32>
    %355 = arith.addf %353, %354 : vector<16x8xf32>
    %c0_i32_106 = arith.constant 0 : i32
    %356 = vector.broadcast %c0_i32_106 : i32 to vector<1x8xi32>
    %357 = arith.cmpi eq, %2, %356 : vector<1x8xi32>
    %cst_107 = arith.constant 0.000000e+00 : f32
    %358 = vector.shape_cast %241 : vector<1x1xf32> to vector<1x1xf32>
    %359 = vector.broadcast %358 : vector<1x1xf32> to vector<1x8xf32>
    %360 = vector.broadcast %cst_107 : f32 to vector<1x8xf32>
    %361 = arith.select %357, %359, %360 : vector<1x8xi1>, vector<1x8xf32>
    %c1_i32_108 = arith.constant 1 : i32
    %362 = vector.broadcast %c1_i32_108 : i32 to vector<1x8xi32>
    %363 = arith.cmpi eq, %2, %362 : vector<1x8xi32>
    %cst_109 = arith.constant 0.000000e+00 : f32
    %364 = vector.shape_cast %250 : vector<1x1xf32> to vector<1x1xf32>
    %365 = vector.broadcast %364 : vector<1x1xf32> to vector<1x8xf32>
    %366 = vector.broadcast %cst_109 : f32 to vector<1x8xf32>
    %367 = arith.select %363, %365, %366 : vector<1x8xi1>, vector<1x8xf32>
    %368 = arith.addf %361, %367 : vector<1x8xf32>
    %c2_i32_110 = arith.constant 2 : i32
    %369 = vector.broadcast %c2_i32_110 : i32 to vector<1x8xi32>
    %370 = arith.cmpi eq, %2, %369 : vector<1x8xi32>
    %cst_111 = arith.constant 2.560000e+02 : f32
    %cst_112 = arith.constant 0.000000e+00 : f32
    %371 = vector.broadcast %cst_111 : f32 to vector<1x8xf32>
    %372 = vector.broadcast %cst_112 : f32 to vector<1x8xf32>
    %373 = arith.select %370, %371, %372 : vector<1x8xi1>, vector<1x8xf32>
    %374 = arith.addf %368, %373 : vector<1x8xf32>
    %c3_i32_113 = arith.constant 3 : i32
    %375 = vector.broadcast %c3_i32_113 : i32 to vector<1x8xi32>
    %376 = arith.cmpi eq, %2, %375 : vector<1x8xi32>
    %cst_114 = arith.constant 0.000000e+00 : f32
    %377 = vector.shape_cast %318 : vector<1x1xf32> to vector<1x1xf32>
    %378 = vector.broadcast %377 : vector<1x1xf32> to vector<1x8xf32>
    %379 = vector.broadcast %cst_114 : f32 to vector<1x8xf32>
    %380 = arith.select %376, %378, %379 : vector<1x8xi1>, vector<1x8xf32>
    %381 = arith.addf %374, %380 : vector<1x8xf32>
    %c4_i32_115 = arith.constant 4 : i32
    %382 = vector.broadcast %c4_i32_115 : i32 to vector<1x8xi32>
    %383 = arith.cmpi eq, %2, %382 : vector<1x8xi32>
    %cst_116 = arith.constant 0.000000e+00 : f32
    %384 = vector.shape_cast %319 : vector<1x1xf32> to vector<1x1xf32>
    %385 = vector.broadcast %384 : vector<1x1xf32> to vector<1x8xf32>
    %386 = vector.broadcast %cst_116 : f32 to vector<1x8xf32>
    %387 = arith.select %383, %385, %386 : vector<1x8xi1>, vector<1x8xf32>
    %388 = arith.addf %381, %387 : vector<1x8xf32>
    %c0_117 = arith.constant 0 : index
    %c0_118 = arith.constant 0 : index
    %c0_119 = arith.constant 0 : index
    %c0_120 = arith.constant 0 : index
    %389 = vector.load %arg3[%c0_117, %c0_118, %c0_119, %c0_120] : memref<1x4x16x16xf32, #tpu.memory_space<vmem>>, vector<1x1x16x16xf32>
    %390 = vector.shape_cast %389 : vector<1x1x16x16xf32> to vector<16x16xf32>
    %cst_121 = arith.constant dense<0.000000e+00> : vector<16x8xf32>
    %391 = tpu.matmul %390, %152, %cst_121 {dimension_numbers = #tpu.dot_dimension_numbers<[1], [0], [0], [1], [0, 0, 1, 1], [], []>} : vector<16x16xf32>, vector<16x8xf32>, vector<16x8xf32> -> vector<16x8xf32>
    %c0_122 = arith.constant 0 : index
    %c1_123 = arith.constant 1 : index
    %c0_124 = arith.constant 0 : index
    %c0_125 = arith.constant 0 : index
    %392 = vector.load %arg3[%c0_122, %c1_123, %c0_124, %c0_125] : memref<1x4x16x16xf32, #tpu.memory_space<vmem>>, vector<1x1x16x16xf32>
    %393 = vector.shape_cast %392 : vector<1x1x16x16xf32> to vector<16x16xf32>
    %cst_126 = arith.constant dense<0.000000e+00> : vector<16x8xf32>
    %394 = tpu.matmul %393, %162, %cst_126 {dimension_numbers = #tpu.dot_dimension_numbers<[1], [0], [0], [1], [0, 0, 1, 1], [], []>} : vector<16x16xf32>, vector<16x8xf32>, vector<16x8xf32> -> vector<16x8xf32>
    %395 = arith.addf %391, %394 : vector<16x8xf32>
    %c0_127 = arith.constant 0 : index
    %c2_128 = arith.constant 2 : index
    %c0_129 = arith.constant 0 : index
    %c0_130 = arith.constant 0 : index
    %396 = vector.load %arg3[%c0_127, %c2_128, %c0_129, %c0_130] : memref<1x4x16x16xf32, #tpu.memory_space<vmem>>, vector<1x1x16x16xf32>
    %397 = vector.shape_cast %396 : vector<1x1x16x16xf32> to vector<16x16xf32>
    %cst_131 = arith.constant dense<0.000000e+00> : vector<16x8xf32>
    %398 = tpu.matmul %397, %345, %cst_131 {dimension_numbers = #tpu.dot_dimension_numbers<[1], [0], [0], [1], [0, 0, 1, 1], [], []>} : vector<16x16xf32>, vector<16x8xf32>, vector<16x8xf32> -> vector<16x8xf32>
    %c0_132 = arith.constant 0 : index
    %c3_133 = arith.constant 3 : index
    %c0_134 = arith.constant 0 : index
    %c0_135 = arith.constant 0 : index
    %399 = vector.load %arg3[%c0_132, %c3_133, %c0_134, %c0_135] : memref<1x4x16x16xf32, #tpu.memory_space<vmem>>, vector<1x1x16x16xf32>
    %400 = vector.shape_cast %399 : vector<1x1x16x16xf32> to vector<16x16xf32>
    %cst_136 = arith.constant dense<0.000000e+00> : vector<16x8xf32>
    %401 = tpu.matmul %400, %355, %cst_136 {dimension_numbers = #tpu.dot_dimension_numbers<[1], [0], [0], [1], [0, 0, 1, 1], [], []>} : vector<16x16xf32>, vector<16x8xf32>, vector<16x8xf32> -> vector<16x8xf32>
    %402 = arith.addf %398, %401 : vector<16x8xf32>
    %c0_137 = arith.constant 0 : index
    %c0_138 = arith.constant 0 : index
    %c0_139 = arith.constant 0 : index
    %403 = vector.load %arg8[%c0_137, %c0_138, %c0_139] : memref<3x8x16xf32, #tpu.memory_space<vmem>>, vector<1x8x16xf32>
    %404 = vector.shape_cast %403 : vector<1x8x16xf32> to vector<8x16xf32>
    %cst_140 = arith.constant dense<0.000000e+00> : vector<16x16xf32>
    %405 = tpu.matmul %395, %404, %cst_140 {dimension_numbers = #tpu.dot_dimension_numbers<[1], [0], [0], [1], [0, 0, 1, 1], [], []>} : vector<16x8xf32>, vector<8x16xf32>, vector<16x16xf32> -> vector<16x16xf32>
    %c1_141 = arith.constant 1 : index
    %c0_142 = arith.constant 0 : index
    %c0_143 = arith.constant 0 : index
    %406 = vector.load %arg8[%c1_141, %c0_142, %c0_143] : memref<3x8x16xf32, #tpu.memory_space<vmem>>, vector<1x8x16xf32>
    %407 = vector.shape_cast %406 : vector<1x8x16xf32> to vector<8x16xf32>
    %cst_144 = arith.constant dense<0.000000e+00> : vector<16x16xf32>
    %408 = tpu.matmul %402, %407, %cst_144 {dimension_numbers = #tpu.dot_dimension_numbers<[1], [0], [0], [1], [0, 0, 1, 1], [], []>} : vector<16x8xf32>, vector<8x16xf32>, vector<16x16xf32> -> vector<16x16xf32>
    %409 = arith.addf %405, %408 : vector<16x16xf32>
    %c2_145 = arith.constant 2 : index
    %c0_146 = arith.constant 0 : index
    %c0_147 = arith.constant 0 : index
    %410 = vector.load %arg8[%c2_145, %c0_146, %c0_147] : memref<3x8x16xf32, #tpu.memory_space<vmem>>, vector<1x8x16xf32>
    %411 = vector.shape_cast %410 : vector<1x8x16xf32> to vector<8x16xf32>
    %cst_148 = arith.constant dense<0.000000e+00> : vector<16x16xf32>
    %412 = tpu.matmul %1, %411, %cst_148 {dimension_numbers = #tpu.dot_dimension_numbers<[1], [0], [0], [1], [0, 0, 1, 1], [], []>} : vector<16x8xf32>, vector<8x16xf32>, vector<16x16xf32> -> vector<16x16xf32>
    %413 = arith.addf %409, %412 : vector<16x16xf32>
    %c0_149 = arith.constant 0 : index
    %c0_150 = arith.constant 0 : index
    %414 = vector.load %arg9[%c0_149, %c0_150] : memref<1x16xf32, #tpu.memory_space<vmem>>, vector<1x16xf32>
    %415 = vector.broadcast %414 : vector<1x16xf32> to vector<16x16xf32>
    %416 = arith.addf %413, %415 : vector<16x16xf32>
    %417 = arith.negf %416 : vector<16x16xf32>
    %418 = math.exp %417 : vector<16x16xf32>
    %cst_151 = arith.constant 1.000000e+00 : f32
    %419 = vector.broadcast %cst_151 : f32 to vector<16x16xf32>
    %420 = arith.addf %419, %418 : vector<16x16xf32>
    %421 = arith.divf %419, %420 : vector<16x16xf32>
    %422 = vector.extract_strided_slice %421 {offsets = [0, 0], sizes = [16, 8], strides = [1, 1]} : vector<16x16xf32> to vector<16x8xf32>
    %423 = vector.extract_strided_slice %421 {offsets = [0, 8], sizes = [16, 8], strides = [1, 1]} : vector<16x16xf32> to vector<16x8xf32>
    %c0_152 = arith.constant 0 : index
    %c0_153 = arith.constant 0 : index
    %c0_154 = arith.constant 0 : index
    %424 = vector.load %arg10[%c0_152, %c0_153, %c0_154] : memref<3x8x8xf32, #tpu.memory_space<vmem>>, vector<1x8x8xf32>
    %425 = vector.shape_cast %424 : vector<1x8x8xf32> to vector<8x8xf32>
    %cst_155 = arith.constant dense<0.000000e+00> : vector<16x8xf32>
    %426 = tpu.matmul %395, %425, %cst_155 {dimension_numbers = #tpu.dot_dimension_numbers<[1], [0], [0], [1], [0, 0, 1, 1], [], []>} : vector<16x8xf32>, vector<8x8xf32>, vector<16x8xf32> -> vector<16x8xf32>
    %c1_156 = arith.constant 1 : index
    %c0_157 = arith.constant 0 : index
    %c0_158 = arith.constant 0 : index
    %427 = vector.load %arg10[%c1_156, %c0_157, %c0_158] : memref<3x8x8xf32, #tpu.memory_space<vmem>>, vector<1x8x8xf32>
    %428 = vector.shape_cast %427 : vector<1x8x8xf32> to vector<8x8xf32>
    %cst_159 = arith.constant dense<0.000000e+00> : vector<16x8xf32>
    %429 = tpu.matmul %402, %428, %cst_159 {dimension_numbers = #tpu.dot_dimension_numbers<[1], [0], [0], [1], [0, 0, 1, 1], [], []>} : vector<16x8xf32>, vector<8x8xf32>, vector<16x8xf32> -> vector<16x8xf32>
    %430 = arith.addf %426, %429 : vector<16x8xf32>
    %431 = arith.mulf %423, %1 : vector<16x8xf32>
    %c2_160 = arith.constant 2 : index
    %c0_161 = arith.constant 0 : index
    %c0_162 = arith.constant 0 : index
    %432 = vector.load %arg10[%c2_160, %c0_161, %c0_162] : memref<3x8x8xf32, #tpu.memory_space<vmem>>, vector<1x8x8xf32>
    %433 = vector.shape_cast %432 : vector<1x8x8xf32> to vector<8x8xf32>
    %cst_163 = arith.constant dense<0.000000e+00> : vector<16x8xf32>
    %434 = tpu.matmul %431, %433, %cst_163 {dimension_numbers = #tpu.dot_dimension_numbers<[1], [0], [0], [1], [0, 0, 1, 1], [], []>} : vector<16x8xf32>, vector<8x8xf32>, vector<16x8xf32> -> vector<16x8xf32>
    %435 = arith.addf %430, %434 : vector<16x8xf32>
    %c0_164 = arith.constant 0 : index
    %c0_165 = arith.constant 0 : index
    %436 = vector.load %arg11[%c0_164, %c0_165] : memref<1x8xf32, #tpu.memory_space<vmem>>, vector<1x8xf32>
    %437 = vector.broadcast %436 : vector<1x8xf32> to vector<16x8xf32>
    %438 = arith.addf %435, %437 : vector<16x8xf32>
    %439 = math.tanh %438 : vector<16x8xf32>
    %cst_166 = arith.constant 1.000000e+00 : f32
    %440 = vector.broadcast %cst_166 : f32 to vector<16x8xf32>
    %441 = arith.subf %440, %422 : vector<16x8xf32>
    %442 = arith.mulf %441, %1 : vector<16x8xf32>
    %443 = arith.mulf %422, %439 : vector<16x8xf32>
    %444 = arith.addf %442, %443 : vector<16x8xf32>
    %c0_167 = arith.constant 0 : index
    %c0_168 = arith.constant 0 : index
    %c0_169 = arith.constant 0 : index
    %445 = vector.load %arg4[%c0_167, %c0_168, %c0_169] : memref<4x8x8xf32, #tpu.memory_space<vmem>>, vector<1x8x8xf32>
    %446 = vector.shape_cast %445 : vector<1x8x8xf32> to vector<8x8xf32>
    %cst_170 = arith.constant dense<0.000000e+00> : vector<16x8xf32>
    %447 = tpu.matmul %444, %446, %cst_170 {dimension_numbers = #tpu.dot_dimension_numbers<[1], [0], [0], [1], [0, 0, 1, 1], [], []>} : vector<16x8xf32>, vector<8x8xf32>, vector<16x8xf32> -> vector<16x8xf32>
    %c0_171 = arith.constant 0 : index
    %c0_172 = arith.constant 0 : index
    %c0_173 = arith.constant 0 : index
    %448 = vector.load %arg5[%c0_171, %c0_172, %c0_173] : memref<4x1x8xf32, #tpu.memory_space<vmem>>, vector<1x1x8xf32>
    %449 = vector.shape_cast %448 : vector<1x1x8xf32> to vector<1x8xf32>
    %450 = vector.broadcast %449 : vector<1x8xf32> to vector<16x8xf32>
    %451 = arith.addf %447, %450 : vector<16x8xf32>
    %c1_174 = arith.constant 1 : index
    %c0_175 = arith.constant 0 : index
    %c0_176 = arith.constant 0 : index
    %452 = vector.load %arg4[%c1_174, %c0_175, %c0_176] : memref<4x8x8xf32, #tpu.memory_space<vmem>>, vector<1x8x8xf32>
    %453 = vector.shape_cast %452 : vector<1x8x8xf32> to vector<8x8xf32>
    %cst_177 = arith.constant dense<0.000000e+00> : vector<16x8xf32>
    %454 = tpu.matmul %444, %453, %cst_177 {dimension_numbers = #tpu.dot_dimension_numbers<[1], [0], [0], [1], [0, 0, 1, 1], [], []>} : vector<16x8xf32>, vector<8x8xf32>, vector<16x8xf32> -> vector<16x8xf32>
    %c1_178 = arith.constant 1 : index
    %c0_179 = arith.constant 0 : index
    %c0_180 = arith.constant 0 : index
    %455 = vector.load %arg5[%c1_178, %c0_179, %c0_180] : memref<4x1x8xf32, #tpu.memory_space<vmem>>, vector<1x1x8xf32>
    %456 = vector.shape_cast %455 : vector<1x1x8xf32> to vector<1x8xf32>
    %457 = vector.broadcast %456 : vector<1x8xf32> to vector<16x8xf32>
    %458 = arith.addf %454, %457 : vector<16x8xf32>
    %c0_181 = arith.constant 0 : index
    %c0_182 = arith.constant 0 : index
    %c0_183 = arith.constant 0 : index
    %459 = vector.load %arg6[%c0_181, %c0_182, %c0_183] : memref<4x1x8xf32, #tpu.memory_space<vmem>>, vector<1x1x8xf32>
    %460 = vector.shape_cast %459 : vector<1x1x8xf32> to vector<1x8xf32>
    %c1_184 = arith.constant 1 : index
    %c0_185 = arith.constant 0 : index
    %c0_186 = arith.constant 0 : index
    %461 = vector.load %arg6[%c1_184, %c0_185, %c0_186] : memref<4x1x8xf32, #tpu.memory_space<vmem>>, vector<1x1x8xf32>
    %462 = vector.shape_cast %461 : vector<1x1x8xf32> to vector<1x8xf32>
    %c0_187 = arith.constant 0 : index
    %c0_188 = arith.constant 0 : index
    %c0_189 = arith.constant 0 : index
    %463 = vector.load %arg7[%c0_187, %c0_188, %c0_189] : memref<4x1x8xf32, #tpu.memory_space<vmem>>, vector<1x1x8xf32>
    %464 = vector.shape_cast %463 : vector<1x1x8xf32> to vector<1x8xf32>
    %c1_190 = arith.constant 1 : index
    %c0_191 = arith.constant 0 : index
    %c0_192 = arith.constant 0 : index
    %465 = vector.load %arg7[%c1_190, %c0_191, %c0_192] : memref<4x1x8xf32, #tpu.memory_space<vmem>>, vector<1x1x8xf32>
    %466 = vector.shape_cast %465 : vector<1x1x8xf32> to vector<1x8xf32>
    %cst_193 = arith.constant dense<0.000000e+00> : vector<16xf32>
    %467 = vector.multi_reduction <add>, %451, %cst_193 [1] : vector<16x8xf32> to vector<16xf32>
    %468 = vector.shape_cast %467 : vector<16xf32> to vector<16x1xf32>
    %469 = arith.mulf %451, %451 : vector<16x8xf32>
    %cst_194 = arith.constant dense<0.000000e+00> : vector<16xf32>
    %470 = vector.multi_reduction <add>, %469, %cst_194 [1] : vector<16x8xf32> to vector<16xf32>
    %471 = vector.shape_cast %470 : vector<16xf32> to vector<16x1xf32>
    %cst_195 = arith.constant dense<0.000000e+00> : vector<16xf32>
    %472 = vector.multi_reduction <add>, %458, %cst_195 [1] : vector<16x8xf32> to vector<16xf32>
    %473 = vector.shape_cast %472 : vector<16xf32> to vector<16x1xf32>
    %474 = arith.addf %468, %473 : vector<16x1xf32>
    %475 = arith.mulf %458, %458 : vector<16x8xf32>
    %cst_196 = arith.constant dense<0.000000e+00> : vector<16xf32>
    %476 = vector.multi_reduction <add>, %475, %cst_196 [1] : vector<16x8xf32> to vector<16xf32>
    %477 = vector.shape_cast %476 : vector<16xf32> to vector<16x1xf32>
    %478 = arith.addf %471, %477 : vector<16x1xf32>
    %479 = vector.shape_cast %474 : vector<16x1xf32> to vector<1x16x1xf32>
    %cst_197 = arith.constant dense<0.000000e+00> : vector<1xf32>
    %480 = vector.multi_reduction <add>, %479, %cst_197 [1, 2] : vector<1x16x1xf32> to vector<1xf32>
    %481 = vector.shape_cast %480 : vector<1xf32> to vector<1x1x1xf32>
    %482 = vector.extract %481[0, 0, 0] : f32 from vector<1x1x1xf32>
    %483 = vector.broadcast %482 : f32 to vector<1x1xf32>
    %484 = vector.shape_cast %478 : vector<16x1xf32> to vector<1x16x1xf32>
    %cst_198 = arith.constant dense<0.000000e+00> : vector<1xf32>
    %485 = vector.multi_reduction <add>, %484, %cst_198 [1, 2] : vector<1x16x1xf32> to vector<1xf32>
    %486 = vector.shape_cast %485 : vector<1xf32> to vector<1x1x1xf32>
    %487 = vector.extract %486[0, 0, 0] : f32 from vector<1x1x1xf32>
    %488 = vector.broadcast %487 : f32 to vector<1x1xf32>
    %cst_199 = arith.constant 2.560000e+02 : f32
    %489 = vector.broadcast %cst_199 : f32 to vector<1x1xf32>
    %490 = arith.divf %483, %489 : vector<1x1xf32>
    %cst_200 = arith.constant 2.560000e+02 : f32
    %491 = vector.broadcast %cst_200 : f32 to vector<1x1xf32>
    %492 = arith.mulf %491, %490 : vector<1x1xf32>
    %493 = arith.mulf %492, %490 : vector<1x1xf32>
    %494 = arith.subf %488, %493 : vector<1x1xf32>
    %cst_201 = arith.constant 2.550000e+02 : f32
    %495 = vector.broadcast %cst_201 : f32 to vector<1x1xf32>
    %496 = arith.divf %494, %495 : vector<1x1xf32>
    %cst_202 = arith.constant 1.000000e-30 : f32
    %497 = vector.broadcast %cst_202 : f32 to vector<1x1xf32>
    %498 = arith.maximumf %496, %497 : vector<1x1xf32>
    %499 = math.sqrt %498 : vector<1x1xf32>
    %500 = math.rsqrt %498 : vector<1x1xf32>
    %501 = math.log %499 : vector<1x1xf32>
    %502 = vector.broadcast %490 : vector<1x1xf32> to vector<16x8xf32>
    %503 = arith.subf %451, %502 : vector<16x8xf32>
    %504 = vector.broadcast %500 : vector<1x1xf32> to vector<16x8xf32>
    %505 = arith.mulf %503, %504 : vector<16x8xf32>
    %506 = arith.mulf %505, %505 : vector<16x8xf32>
    %cst_203 = arith.constant -5.000000e-01 : f32
    %507 = vector.broadcast %cst_203 : f32 to vector<16x8xf32>
    %508 = arith.mulf %507, %506 : vector<16x8xf32>
    %509 = vector.broadcast %501 : vector<1x1xf32> to vector<16x8xf32>
    %510 = arith.subf %508, %509 : vector<16x8xf32>
    %cst_204 = arith.constant 0.918938517 : f32
    %511 = vector.broadcast %cst_204 : f32 to vector<16x8xf32>
    %512 = arith.subf %510, %511 : vector<16x8xf32>
    %513 = vector.broadcast %490 : vector<1x1xf32> to vector<16x8xf32>
    %514 = arith.subf %458, %513 : vector<16x8xf32>
    %515 = vector.broadcast %500 : vector<1x1xf32> to vector<16x8xf32>
    %516 = arith.mulf %514, %515 : vector<16x8xf32>
    %517 = arith.mulf %516, %516 : vector<16x8xf32>
    %cst_205 = arith.constant -5.000000e-01 : f32
    %518 = vector.broadcast %cst_205 : f32 to vector<16x8xf32>
    %519 = arith.mulf %518, %517 : vector<16x8xf32>
    %520 = vector.broadcast %501 : vector<1x1xf32> to vector<16x8xf32>
    %521 = arith.subf %519, %520 : vector<16x8xf32>
    %cst_206 = arith.constant 0.918938517 : f32
    %522 = vector.broadcast %cst_206 : f32 to vector<16x8xf32>
    %523 = arith.subf %521, %522 : vector<16x8xf32>
    %524 = vector.shape_cast %512 : vector<16x8xf32> to vector<1x16x8xf32>
    %cst_207 = arith.constant dense<0xFF800000> : vector<1xf32>
    %525 = vector.multi_reduction <maximumf>, %524, %cst_207 [1, 2] : vector<1x16x8xf32> to vector<1xf32>
    %526 = vector.shape_cast %525 : vector<1xf32> to vector<1x1x1xf32>
    %527 = vector.extract %526[0, 0, 0] : f32 from vector<1x1x1xf32>
    %528 = vector.broadcast %527 : f32 to vector<1x1xf32>
    %529 = vector.shape_cast %523 : vector<16x8xf32> to vector<1x16x8xf32>
    %cst_208 = arith.constant dense<0xFF800000> : vector<1xf32>
    %530 = vector.multi_reduction <maximumf>, %529, %cst_208 [1, 2] : vector<1x16x8xf32> to vector<1xf32>
    %531 = vector.shape_cast %530 : vector<1xf32> to vector<1x1x1xf32>
    %532 = vector.extract %531[0, 0, 0] : f32 from vector<1x1x1xf32>
    %533 = vector.broadcast %532 : f32 to vector<1x1xf32>
    %534 = arith.maximumf %528, %533 : vector<1x1xf32>
    %535 = vector.broadcast %534 : vector<1x1xf32> to vector<16x8xf32>
    %536 = arith.subf %512, %535 : vector<16x8xf32>
    %537 = math.exp %536 : vector<16x8xf32>
    %538 = vector.shape_cast %537 : vector<16x8xf32> to vector<1x16x8xf32>
    %cst_209 = arith.constant dense<0.000000e+00> : vector<1xf32>
    %539 = vector.multi_reduction <add>, %538, %cst_209 [1, 2] : vector<1x16x8xf32> to vector<1xf32>
    %540 = vector.shape_cast %539 : vector<1xf32> to vector<1x1x1xf32>
    %541 = vector.extract %540[0, 0, 0] : f32 from vector<1x1x1xf32>
    %542 = vector.broadcast %541 : f32 to vector<1x1xf32>
    %543 = vector.broadcast %534 : vector<1x1xf32> to vector<16x8xf32>
    %544 = arith.subf %523, %543 : vector<16x8xf32>
    %545 = math.exp %544 : vector<16x8xf32>
    %546 = vector.shape_cast %545 : vector<16x8xf32> to vector<1x16x8xf32>
    %cst_210 = arith.constant dense<0.000000e+00> : vector<1xf32>
    %547 = vector.multi_reduction <add>, %546, %cst_210 [1, 2] : vector<1x16x8xf32> to vector<1xf32>
    %548 = vector.shape_cast %547 : vector<1xf32> to vector<1x1x1xf32>
    %549 = vector.extract %548[0, 0, 0] : f32 from vector<1x1x1xf32>
    %550 = vector.broadcast %549 : f32 to vector<1x1xf32>
    %551 = arith.addf %542, %550 : vector<1x1xf32>
    %552 = math.log %551 : vector<1x1xf32>
    %553 = arith.addf %534, %552 : vector<1x1xf32>
    %554 = math.exp %534 : vector<1x1xf32>
    %555 = arith.mulf %554, %551 : vector<1x1xf32>
    %cst_211 = arith.constant 1.000000e+00 : f32
    %556 = vector.broadcast %cst_211 : f32 to vector<1x1xf32>
    %557 = arith.addf %556, %555 : vector<1x1xf32>
    %558 = math.log %557 : vector<1x1xf32>
    %cst_212 = arith.constant 0.000000e+00 : f32
    %559 = vector.broadcast %cst_212 : f32 to vector<1x1xf32>
    %560 = arith.subf %559, %534 : vector<1x1xf32>
    %561 = math.exp %560 : vector<1x1xf32>
    %562 = arith.addf %561, %551 : vector<1x1xf32>
    %563 = math.log %562 : vector<1x1xf32>
    %564 = arith.addf %534, %563 : vector<1x1xf32>
    %cst_213 = arith.constant 0.000000e+00 : f32
    %565 = vector.broadcast %cst_213 : f32 to vector<1x1xf32>
    %566 = arith.cmpf olt, %534, %565 : vector<1x1xf32>
    %567 = arith.select %566, %558, %564 : vector<1x1xi1>, vector<1x1xf32>
    %568 = arith.subf %567, %553 : vector<1x1xf32>
    %cst_214 = arith.constant 1.600000e+01 : f32
    %569 = vector.broadcast %cst_214 : f32 to vector<16x1xf32>
    %570 = arith.divf %474, %569 : vector<16x1xf32>
    %cst_215 = arith.constant 1.600000e+01 : f32
    %571 = vector.broadcast %cst_215 : f32 to vector<16x1xf32>
    %572 = arith.divf %478, %571 : vector<16x1xf32>
    %573 = arith.mulf %570, %570 : vector<16x1xf32>
    %574 = arith.subf %572, %573 : vector<16x1xf32>
    %cst_216 = arith.constant 0.000000e+00 : f32
    %575 = vector.broadcast %cst_216 : f32 to vector<16x1xf32>
    %576 = arith.maximumf %574, %575 : vector<16x1xf32>
    %577 = arith.mulf %568, %568 : vector<1x1xf32>
    %578 = vector.broadcast %577 : vector<1x1xf32> to vector<16x1xf32>
    %579 = arith.mulf %578, %576 : vector<16x1xf32>
    %cst_217 = arith.constant 9.99999974E-6 : f32
    %580 = vector.broadcast %cst_217 : f32 to vector<16x1xf32>
    %581 = arith.addf %579, %580 : vector<16x1xf32>
    %582 = math.rsqrt %581 : vector<16x1xf32>
    %583 = vector.broadcast %568 : vector<1x1xf32> to vector<16x1xf32>
    %584 = arith.mulf %583, %570 : vector<16x1xf32>
    %585 = vector.broadcast %568 : vector<1x1xf32> to vector<16x8xf32>
    %586 = arith.mulf %585, %451 : vector<16x8xf32>
    %587 = vector.broadcast %584 : vector<16x1xf32> to vector<16x8xf32>
    %588 = arith.subf %586, %587 : vector<16x8xf32>
    %589 = vector.broadcast %582 : vector<16x1xf32> to vector<16x8xf32>
    %590 = arith.mulf %588, %589 : vector<16x8xf32>
    %591 = vector.broadcast %460 : vector<1x8xf32> to vector<16x8xf32>
    %592 = arith.mulf %590, %591 : vector<16x8xf32>
    %593 = vector.broadcast %464 : vector<1x8xf32> to vector<16x8xf32>
    %594 = arith.addf %592, %593 : vector<16x8xf32>
    %595 = vector.broadcast %568 : vector<1x1xf32> to vector<16x8xf32>
    %596 = arith.mulf %595, %458 : vector<16x8xf32>
    %597 = vector.broadcast %584 : vector<16x1xf32> to vector<16x8xf32>
    %598 = arith.subf %596, %597 : vector<16x8xf32>
    %599 = vector.broadcast %582 : vector<16x1xf32> to vector<16x8xf32>
    %600 = arith.mulf %598, %599 : vector<16x8xf32>
    %601 = vector.broadcast %462 : vector<1x8xf32> to vector<16x8xf32>
    %602 = arith.mulf %600, %601 : vector<16x8xf32>
    %603 = vector.broadcast %466 : vector<1x8xf32> to vector<16x8xf32>
    %604 = arith.addf %602, %603 : vector<16x8xf32>
    %c0_i32_218 = arith.constant 0 : i32
    %605 = vector.broadcast %c0_i32_218 : i32 to vector<1x8xi32>
    %606 = arith.cmpi eq, %2, %605 : vector<1x8xi32>
    %cst_219 = arith.constant 0.000000e+00 : f32
    %607 = vector.shape_cast %490 : vector<1x1xf32> to vector<1x1xf32>
    %608 = vector.broadcast %607 : vector<1x1xf32> to vector<1x8xf32>
    %609 = vector.broadcast %cst_219 : f32 to vector<1x8xf32>
    %610 = arith.select %606, %608, %609 : vector<1x8xi1>, vector<1x8xf32>
    %c1_i32_220 = arith.constant 1 : i32
    %611 = vector.broadcast %c1_i32_220 : i32 to vector<1x8xi32>
    %612 = arith.cmpi eq, %2, %611 : vector<1x8xi32>
    %cst_221 = arith.constant 0.000000e+00 : f32
    %613 = vector.shape_cast %499 : vector<1x1xf32> to vector<1x1xf32>
    %614 = vector.broadcast %613 : vector<1x1xf32> to vector<1x8xf32>
    %615 = vector.broadcast %cst_221 : f32 to vector<1x8xf32>
    %616 = arith.select %612, %614, %615 : vector<1x8xi1>, vector<1x8xf32>
    %617 = arith.addf %610, %616 : vector<1x8xf32>
    %c2_i32_222 = arith.constant 2 : i32
    %618 = vector.broadcast %c2_i32_222 : i32 to vector<1x8xi32>
    %619 = arith.cmpi eq, %2, %618 : vector<1x8xi32>
    %cst_223 = arith.constant 2.560000e+02 : f32
    %cst_224 = arith.constant 0.000000e+00 : f32
    %620 = vector.broadcast %cst_223 : f32 to vector<1x8xf32>
    %621 = vector.broadcast %cst_224 : f32 to vector<1x8xf32>
    %622 = arith.select %619, %620, %621 : vector<1x8xi1>, vector<1x8xf32>
    %623 = arith.addf %617, %622 : vector<1x8xf32>
    %c3_i32_225 = arith.constant 3 : i32
    %624 = vector.broadcast %c3_i32_225 : i32 to vector<1x8xi32>
    %625 = arith.cmpi eq, %2, %624 : vector<1x8xi32>
    %cst_226 = arith.constant 0.000000e+00 : f32
    %626 = vector.shape_cast %567 : vector<1x1xf32> to vector<1x1xf32>
    %627 = vector.broadcast %626 : vector<1x1xf32> to vector<1x8xf32>
    %628 = vector.broadcast %cst_226 : f32 to vector<1x8xf32>
    %629 = arith.select %625, %627, %628 : vector<1x8xi1>, vector<1x8xf32>
    %630 = arith.addf %623, %629 : vector<1x8xf32>
    %c4_i32_227 = arith.constant 4 : i32
    %631 = vector.broadcast %c4_i32_227 : i32 to vector<1x8xi32>
    %632 = arith.cmpi eq, %2, %631 : vector<1x8xi32>
    %cst_228 = arith.constant 0.000000e+00 : f32
    %633 = vector.shape_cast %568 : vector<1x1xf32> to vector<1x1xf32>
    %634 = vector.broadcast %633 : vector<1x1xf32> to vector<1x8xf32>
    %635 = vector.broadcast %cst_228 : f32 to vector<1x8xf32>
    %636 = arith.select %632, %634, %635 : vector<1x8xi1>, vector<1x8xf32>
    %637 = arith.addf %630, %636 : vector<1x8xf32>
    %c2_229 = arith.constant 2 : index
    %c0_230 = arith.constant 0 : index
    %c0_231 = arith.constant 0 : index
    %638 = vector.load %arg4[%c2_229, %c0_230, %c0_231] : memref<4x8x8xf32, #tpu.memory_space<vmem>>, vector<1x8x8xf32>
    %639 = vector.shape_cast %638 : vector<1x8x8xf32> to vector<8x8xf32>
    %cst_232 = arith.constant dense<0.000000e+00> : vector<16x8xf32>
    %640 = tpu.matmul %444, %639, %cst_232 {dimension_numbers = #tpu.dot_dimension_numbers<[1], [0], [0], [1], [0, 0, 1, 1], [], []>} : vector<16x8xf32>, vector<8x8xf32>, vector<16x8xf32> -> vector<16x8xf32>
    %c2_233 = arith.constant 2 : index
    %c0_234 = arith.constant 0 : index
    %c0_235 = arith.constant 0 : index
    %641 = vector.load %arg5[%c2_233, %c0_234, %c0_235] : memref<4x1x8xf32, #tpu.memory_space<vmem>>, vector<1x1x8xf32>
    %642 = vector.shape_cast %641 : vector<1x1x8xf32> to vector<1x8xf32>
    %643 = vector.broadcast %642 : vector<1x8xf32> to vector<16x8xf32>
    %644 = arith.addf %640, %643 : vector<16x8xf32>
    %c3_236 = arith.constant 3 : index
    %c0_237 = arith.constant 0 : index
    %c0_238 = arith.constant 0 : index
    %645 = vector.load %arg4[%c3_236, %c0_237, %c0_238] : memref<4x8x8xf32, #tpu.memory_space<vmem>>, vector<1x8x8xf32>
    %646 = vector.shape_cast %645 : vector<1x8x8xf32> to vector<8x8xf32>
    %cst_239 = arith.constant dense<0.000000e+00> : vector<16x8xf32>
    %647 = tpu.matmul %444, %646, %cst_239 {dimension_numbers = #tpu.dot_dimension_numbers<[1], [0], [0], [1], [0, 0, 1, 1], [], []>} : vector<16x8xf32>, vector<8x8xf32>, vector<16x8xf32> -> vector<16x8xf32>
    %c3_240 = arith.constant 3 : index
    %c0_241 = arith.constant 0 : index
    %c0_242 = arith.constant 0 : index
    %648 = vector.load %arg5[%c3_240, %c0_241, %c0_242] : memref<4x1x8xf32, #tpu.memory_space<vmem>>, vector<1x1x8xf32>
    %649 = vector.shape_cast %648 : vector<1x1x8xf32> to vector<1x8xf32>
    %650 = vector.broadcast %649 : vector<1x8xf32> to vector<16x8xf32>
    %651 = arith.addf %647, %650 : vector<16x8xf32>
    %c2_243 = arith.constant 2 : index
    %c0_244 = arith.constant 0 : index
    %c0_245 = arith.constant 0 : index
    %652 = vector.load %arg6[%c2_243, %c0_244, %c0_245] : memref<4x1x8xf32, #tpu.memory_space<vmem>>, vector<1x1x8xf32>
    %653 = vector.shape_cast %652 : vector<1x1x8xf32> to vector<1x8xf32>
    %c3_246 = arith.constant 3 : index
    %c0_247 = arith.constant 0 : index
    %c0_248 = arith.constant 0 : index
    %654 = vector.load %arg6[%c3_246, %c0_247, %c0_248] : memref<4x1x8xf32, #tpu.memory_space<vmem>>, vector<1x1x8xf32>
    %655 = vector.shape_cast %654 : vector<1x1x8xf32> to vector<1x8xf32>
    %c2_249 = arith.constant 2 : index
    %c0_250 = arith.constant 0 : index
    %c0_251 = arith.constant 0 : index
    %656 = vector.load %arg7[%c2_249, %c0_250, %c0_251] : memref<4x1x8xf32, #tpu.memory_space<vmem>>, vector<1x1x8xf32>
    %657 = vector.shape_cast %656 : vector<1x1x8xf32> to vector<1x8xf32>
    %c3_252 = arith.constant 3 : index
    %c0_253 = arith.constant 0 : index
    %c0_254 = arith.constant 0 : index
    %658 = vector.load %arg7[%c3_252, %c0_253, %c0_254] : memref<4x1x8xf32, #tpu.memory_space<vmem>>, vector<1x1x8xf32>
    %659 = vector.shape_cast %658 : vector<1x1x8xf32> to vector<1x8xf32>
    %cst_255 = arith.constant dense<0.000000e+00> : vector<16xf32>
    %660 = vector.multi_reduction <add>, %644, %cst_255 [1] : vector<16x8xf32> to vector<16xf32>
    %661 = vector.shape_cast %660 : vector<16xf32> to vector<16x1xf32>
    %662 = arith.mulf %644, %644 : vector<16x8xf32>
    %cst_256 = arith.constant dense<0.000000e+00> : vector<16xf32>
    %663 = vector.multi_reduction <add>, %662, %cst_256 [1] : vector<16x8xf32> to vector<16xf32>
    %664 = vector.shape_cast %663 : vector<16xf32> to vector<16x1xf32>
    %cst_257 = arith.constant dense<0.000000e+00> : vector<16xf32>
    %665 = vector.multi_reduction <add>, %651, %cst_257 [1] : vector<16x8xf32> to vector<16xf32>
    %666 = vector.shape_cast %665 : vector<16xf32> to vector<16x1xf32>
    %667 = arith.addf %661, %666 : vector<16x1xf32>
    %668 = arith.mulf %651, %651 : vector<16x8xf32>
    %cst_258 = arith.constant dense<0.000000e+00> : vector<16xf32>
    %669 = vector.multi_reduction <add>, %668, %cst_258 [1] : vector<16x8xf32> to vector<16xf32>
    %670 = vector.shape_cast %669 : vector<16xf32> to vector<16x1xf32>
    %671 = arith.addf %664, %670 : vector<16x1xf32>
    %672 = vector.shape_cast %667 : vector<16x1xf32> to vector<1x16x1xf32>
    %cst_259 = arith.constant dense<0.000000e+00> : vector<1xf32>
    %673 = vector.multi_reduction <add>, %672, %cst_259 [1, 2] : vector<1x16x1xf32> to vector<1xf32>
    %674 = vector.shape_cast %673 : vector<1xf32> to vector<1x1x1xf32>
    %675 = vector.extract %674[0, 0, 0] : f32 from vector<1x1x1xf32>
    %676 = vector.broadcast %675 : f32 to vector<1x1xf32>
    %677 = vector.shape_cast %671 : vector<16x1xf32> to vector<1x16x1xf32>
    %cst_260 = arith.constant dense<0.000000e+00> : vector<1xf32>
    %678 = vector.multi_reduction <add>, %677, %cst_260 [1, 2] : vector<1x16x1xf32> to vector<1xf32>
    %679 = vector.shape_cast %678 : vector<1xf32> to vector<1x1x1xf32>
    %680 = vector.extract %679[0, 0, 0] : f32 from vector<1x1x1xf32>
    %681 = vector.broadcast %680 : f32 to vector<1x1xf32>
    %cst_261 = arith.constant 2.560000e+02 : f32
    %682 = vector.broadcast %cst_261 : f32 to vector<1x1xf32>
    %683 = arith.divf %676, %682 : vector<1x1xf32>
    %cst_262 = arith.constant 2.560000e+02 : f32
    %684 = vector.broadcast %cst_262 : f32 to vector<1x1xf32>
    %685 = arith.mulf %684, %683 : vector<1x1xf32>
    %686 = arith.mulf %685, %683 : vector<1x1xf32>
    %687 = arith.subf %681, %686 : vector<1x1xf32>
    %cst_263 = arith.constant 2.550000e+02 : f32
    %688 = vector.broadcast %cst_263 : f32 to vector<1x1xf32>
    %689 = arith.divf %687, %688 : vector<1x1xf32>
    %cst_264 = arith.constant 1.000000e-30 : f32
    %690 = vector.broadcast %cst_264 : f32 to vector<1x1xf32>
    %691 = arith.maximumf %689, %690 : vector<1x1xf32>
    %692 = math.sqrt %691 : vector<1x1xf32>
    %693 = math.rsqrt %691 : vector<1x1xf32>
    %694 = math.log %692 : vector<1x1xf32>
    %695 = vector.broadcast %683 : vector<1x1xf32> to vector<16x8xf32>
    %696 = arith.subf %644, %695 : vector<16x8xf32>
    %697 = vector.broadcast %693 : vector<1x1xf32> to vector<16x8xf32>
    %698 = arith.mulf %696, %697 : vector<16x8xf32>
    %699 = arith.mulf %698, %698 : vector<16x8xf32>
    %cst_265 = arith.constant -5.000000e-01 : f32
    %700 = vector.broadcast %cst_265 : f32 to vector<16x8xf32>
    %701 = arith.mulf %700, %699 : vector<16x8xf32>
    %702 = vector.broadcast %694 : vector<1x1xf32> to vector<16x8xf32>
    %703 = arith.subf %701, %702 : vector<16x8xf32>
    %cst_266 = arith.constant 0.918938517 : f32
    %704 = vector.broadcast %cst_266 : f32 to vector<16x8xf32>
    %705 = arith.subf %703, %704 : vector<16x8xf32>
    %706 = vector.broadcast %683 : vector<1x1xf32> to vector<16x8xf32>
    %707 = arith.subf %651, %706 : vector<16x8xf32>
    %708 = vector.broadcast %693 : vector<1x1xf32> to vector<16x8xf32>
    %709 = arith.mulf %707, %708 : vector<16x8xf32>
    %710 = arith.mulf %709, %709 : vector<16x8xf32>
    %cst_267 = arith.constant -5.000000e-01 : f32
    %711 = vector.broadcast %cst_267 : f32 to vector<16x8xf32>
    %712 = arith.mulf %711, %710 : vector<16x8xf32>
    %713 = vector.broadcast %694 : vector<1x1xf32> to vector<16x8xf32>
    %714 = arith.subf %712, %713 : vector<16x8xf32>
    %cst_268 = arith.constant 0.918938517 : f32
    %715 = vector.broadcast %cst_268 : f32 to vector<16x8xf32>
    %716 = arith.subf %714, %715 : vector<16x8xf32>
    %717 = vector.shape_cast %705 : vector<16x8xf32> to vector<1x16x8xf32>
    %cst_269 = arith.constant dense<0xFF800000> : vector<1xf32>
    %718 = vector.multi_reduction <maximumf>, %717, %cst_269 [1, 2] : vector<1x16x8xf32> to vector<1xf32>
    %719 = vector.shape_cast %718 : vector<1xf32> to vector<1x1x1xf32>
    %720 = vector.extract %719[0, 0, 0] : f32 from vector<1x1x1xf32>
    %721 = vector.broadcast %720 : f32 to vector<1x1xf32>
    %722 = vector.shape_cast %716 : vector<16x8xf32> to vector<1x16x8xf32>
    %cst_270 = arith.constant dense<0xFF800000> : vector<1xf32>
    %723 = vector.multi_reduction <maximumf>, %722, %cst_270 [1, 2] : vector<1x16x8xf32> to vector<1xf32>
    %724 = vector.shape_cast %723 : vector<1xf32> to vector<1x1x1xf32>
    %725 = vector.extract %724[0, 0, 0] : f32 from vector<1x1x1xf32>
    %726 = vector.broadcast %725 : f32 to vector<1x1xf32>
    %727 = arith.maximumf %721, %726 : vector<1x1xf32>
    %728 = vector.broadcast %727 : vector<1x1xf32> to vector<16x8xf32>
    %729 = arith.subf %705, %728 : vector<16x8xf32>
    %730 = math.exp %729 : vector<16x8xf32>
    %731 = vector.shape_cast %730 : vector<16x8xf32> to vector<1x16x8xf32>
    %cst_271 = arith.constant dense<0.000000e+00> : vector<1xf32>
    %732 = vector.multi_reduction <add>, %731, %cst_271 [1, 2] : vector<1x16x8xf32> to vector<1xf32>
    %733 = vector.shape_cast %732 : vector<1xf32> to vector<1x1x1xf32>
    %734 = vector.extract %733[0, 0, 0] : f32 from vector<1x1x1xf32>
    %735 = vector.broadcast %734 : f32 to vector<1x1xf32>
    %736 = vector.broadcast %727 : vector<1x1xf32> to vector<16x8xf32>
    %737 = arith.subf %716, %736 : vector<16x8xf32>
    %738 = math.exp %737 : vector<16x8xf32>
    %739 = vector.shape_cast %738 : vector<16x8xf32> to vector<1x16x8xf32>
    %cst_272 = arith.constant dense<0.000000e+00> : vector<1xf32>
    %740 = vector.multi_reduction <add>, %739, %cst_272 [1, 2] : vector<1x16x8xf32> to vector<1xf32>
    %741 = vector.shape_cast %740 : vector<1xf32> to vector<1x1x1xf32>
    %742 = vector.extract %741[0, 0, 0] : f32 from vector<1x1x1xf32>
    %743 = vector.broadcast %742 : f32 to vector<1x1xf32>
    %744 = arith.addf %735, %743 : vector<1x1xf32>
    %745 = math.log %744 : vector<1x1xf32>
    %746 = arith.addf %727, %745 : vector<1x1xf32>
    %747 = math.exp %727 : vector<1x1xf32>
    %748 = arith.mulf %747, %744 : vector<1x1xf32>
    %cst_273 = arith.constant 1.000000e+00 : f32
    %749 = vector.broadcast %cst_273 : f32 to vector<1x1xf32>
    %750 = arith.addf %749, %748 : vector<1x1xf32>
    %751 = math.log %750 : vector<1x1xf32>
    %cst_274 = arith.constant 0.000000e+00 : f32
    %752 = vector.broadcast %cst_274 : f32 to vector<1x1xf32>
    %753 = arith.subf %752, %727 : vector<1x1xf32>
    %754 = math.exp %753 : vector<1x1xf32>
    %755 = arith.addf %754, %744 : vector<1x1xf32>
    %756 = math.log %755 : vector<1x1xf32>
    %757 = arith.addf %727, %756 : vector<1x1xf32>
    %cst_275 = arith.constant 0.000000e+00 : f32
    %758 = vector.broadcast %cst_275 : f32 to vector<1x1xf32>
    %759 = arith.cmpf olt, %727, %758 : vector<1x1xf32>
    %760 = arith.select %759, %751, %757 : vector<1x1xi1>, vector<1x1xf32>
    %761 = arith.subf %760, %746 : vector<1x1xf32>
    %cst_276 = arith.constant 1.600000e+01 : f32
    %762 = vector.broadcast %cst_276 : f32 to vector<16x1xf32>
    %763 = arith.divf %667, %762 : vector<16x1xf32>
    %cst_277 = arith.constant 1.600000e+01 : f32
    %764 = vector.broadcast %cst_277 : f32 to vector<16x1xf32>
    %765 = arith.divf %671, %764 : vector<16x1xf32>
    %766 = arith.mulf %763, %763 : vector<16x1xf32>
    %767 = arith.subf %765, %766 : vector<16x1xf32>
    %cst_278 = arith.constant 0.000000e+00 : f32
    %768 = vector.broadcast %cst_278 : f32 to vector<16x1xf32>
    %769 = arith.maximumf %767, %768 : vector<16x1xf32>
    %770 = arith.mulf %761, %761 : vector<1x1xf32>
    %771 = vector.broadcast %770 : vector<1x1xf32> to vector<16x1xf32>
    %772 = arith.mulf %771, %769 : vector<16x1xf32>
    %cst_279 = arith.constant 9.99999974E-6 : f32
    %773 = vector.broadcast %cst_279 : f32 to vector<16x1xf32>
    %774 = arith.addf %772, %773 : vector<16x1xf32>
    %775 = math.rsqrt %774 : vector<16x1xf32>
    %776 = vector.broadcast %761 : vector<1x1xf32> to vector<16x1xf32>
    %777 = arith.mulf %776, %763 : vector<16x1xf32>
    %778 = vector.broadcast %761 : vector<1x1xf32> to vector<16x8xf32>
    %779 = arith.mulf %778, %644 : vector<16x8xf32>
    %780 = vector.broadcast %777 : vector<16x1xf32> to vector<16x8xf32>
    %781 = arith.subf %779, %780 : vector<16x8xf32>
    %782 = vector.broadcast %775 : vector<16x1xf32> to vector<16x8xf32>
    %783 = arith.mulf %781, %782 : vector<16x8xf32>
    %784 = vector.broadcast %653 : vector<1x8xf32> to vector<16x8xf32>
    %785 = arith.mulf %783, %784 : vector<16x8xf32>
    %786 = vector.broadcast %657 : vector<1x8xf32> to vector<16x8xf32>
    %787 = arith.addf %785, %786 : vector<16x8xf32>
    %788 = vector.broadcast %761 : vector<1x1xf32> to vector<16x8xf32>
    %789 = arith.mulf %788, %651 : vector<16x8xf32>
    %790 = vector.broadcast %777 : vector<16x1xf32> to vector<16x8xf32>
    %791 = arith.subf %789, %790 : vector<16x8xf32>
    %792 = vector.broadcast %775 : vector<16x1xf32> to vector<16x8xf32>
    %793 = arith.mulf %791, %792 : vector<16x8xf32>
    %794 = vector.broadcast %655 : vector<1x8xf32> to vector<16x8xf32>
    %795 = arith.mulf %793, %794 : vector<16x8xf32>
    %796 = vector.broadcast %659 : vector<1x8xf32> to vector<16x8xf32>
    %797 = arith.addf %795, %796 : vector<16x8xf32>
    %c0_i32_280 = arith.constant 0 : i32
    %798 = vector.broadcast %c0_i32_280 : i32 to vector<1x8xi32>
    %799 = arith.cmpi eq, %2, %798 : vector<1x8xi32>
    %cst_281 = arith.constant 0.000000e+00 : f32
    %800 = vector.shape_cast %683 : vector<1x1xf32> to vector<1x1xf32>
    %801 = vector.broadcast %800 : vector<1x1xf32> to vector<1x8xf32>
    %802 = vector.broadcast %cst_281 : f32 to vector<1x8xf32>
    %803 = arith.select %799, %801, %802 : vector<1x8xi1>, vector<1x8xf32>
    %c1_i32_282 = arith.constant 1 : i32
    %804 = vector.broadcast %c1_i32_282 : i32 to vector<1x8xi32>
    %805 = arith.cmpi eq, %2, %804 : vector<1x8xi32>
    %cst_283 = arith.constant 0.000000e+00 : f32
    %806 = vector.shape_cast %692 : vector<1x1xf32> to vector<1x1xf32>
    %807 = vector.broadcast %806 : vector<1x1xf32> to vector<1x8xf32>
    %808 = vector.broadcast %cst_283 : f32 to vector<1x8xf32>
    %809 = arith.select %805, %807, %808 : vector<1x8xi1>, vector<1x8xf32>
    %810 = arith.addf %803, %809 : vector<1x8xf32>
    %c2_i32_284 = arith.constant 2 : i32
    %811 = vector.broadcast %c2_i32_284 : i32 to vector<1x8xi32>
    %812 = arith.cmpi eq, %2, %811 : vector<1x8xi32>
    %cst_285 = arith.constant 2.560000e+02 : f32
    %cst_286 = arith.constant 0.000000e+00 : f32
    %813 = vector.broadcast %cst_285 : f32 to vector<1x8xf32>
    %814 = vector.broadcast %cst_286 : f32 to vector<1x8xf32>
    %815 = arith.select %812, %813, %814 : vector<1x8xi1>, vector<1x8xf32>
    %816 = arith.addf %810, %815 : vector<1x8xf32>
    %c3_i32_287 = arith.constant 3 : i32
    %817 = vector.broadcast %c3_i32_287 : i32 to vector<1x8xi32>
    %818 = arith.cmpi eq, %2, %817 : vector<1x8xi32>
    %cst_288 = arith.constant 0.000000e+00 : f32
    %819 = vector.shape_cast %760 : vector<1x1xf32> to vector<1x1xf32>
    %820 = vector.broadcast %819 : vector<1x1xf32> to vector<1x8xf32>
    %821 = vector.broadcast %cst_288 : f32 to vector<1x8xf32>
    %822 = arith.select %818, %820, %821 : vector<1x8xi1>, vector<1x8xf32>
    %823 = arith.addf %816, %822 : vector<1x8xf32>
    %c4_i32_289 = arith.constant 4 : i32
    %824 = vector.broadcast %c4_i32_289 : i32 to vector<1x8xi32>
    %825 = arith.cmpi eq, %2, %824 : vector<1x8xi32>
    %cst_290 = arith.constant 0.000000e+00 : f32
    %826 = vector.shape_cast %761 : vector<1x1xf32> to vector<1x1xf32>
    %827 = vector.broadcast %826 : vector<1x1xf32> to vector<1x8xf32>
    %828 = vector.broadcast %cst_290 : f32 to vector<1x8xf32>
    %829 = arith.select %825, %827, %828 : vector<1x8xi1>, vector<1x8xf32>
    %830 = arith.addf %823, %829 : vector<1x8xf32>
    %c0_291 = arith.constant 0 : index
    %c0_292 = arith.constant 0 : index
    %c0_293 = arith.constant 0 : index
    %c0_294 = arith.constant 0 : index
    %831 = vector.load %arg3[%c0_291, %c0_292, %c0_293, %c0_294] : memref<1x4x16x16xf32, #tpu.memory_space<vmem>>, vector<1x1x16x16xf32>
    %832 = vector.shape_cast %831 : vector<1x1x16x16xf32> to vector<16x16xf32>
    %cst_295 = arith.constant dense<0.000000e+00> : vector<16x8xf32>
    %833 = tpu.matmul %832, %594, %cst_295 {dimension_numbers = #tpu.dot_dimension_numbers<[1], [0], [0], [1], [0, 0, 1, 1], [], []>} : vector<16x16xf32>, vector<16x8xf32>, vector<16x8xf32> -> vector<16x8xf32>
    %c0_296 = arith.constant 0 : index
    %c1_297 = arith.constant 1 : index
    %c0_298 = arith.constant 0 : index
    %c0_299 = arith.constant 0 : index
    %834 = vector.load %arg3[%c0_296, %c1_297, %c0_298, %c0_299] : memref<1x4x16x16xf32, #tpu.memory_space<vmem>>, vector<1x1x16x16xf32>
    %835 = vector.shape_cast %834 : vector<1x1x16x16xf32> to vector<16x16xf32>
    %cst_300 = arith.constant dense<0.000000e+00> : vector<16x8xf32>
    %836 = tpu.matmul %835, %604, %cst_300 {dimension_numbers = #tpu.dot_dimension_numbers<[1], [0], [0], [1], [0, 0, 1, 1], [], []>} : vector<16x16xf32>, vector<16x8xf32>, vector<16x8xf32> -> vector<16x8xf32>
    %837 = arith.addf %833, %836 : vector<16x8xf32>
    %c0_301 = arith.constant 0 : index
    %c2_302 = arith.constant 2 : index
    %c0_303 = arith.constant 0 : index
    %c0_304 = arith.constant 0 : index
    %838 = vector.load %arg3[%c0_301, %c2_302, %c0_303, %c0_304] : memref<1x4x16x16xf32, #tpu.memory_space<vmem>>, vector<1x1x16x16xf32>
    %839 = vector.shape_cast %838 : vector<1x1x16x16xf32> to vector<16x16xf32>
    %cst_305 = arith.constant dense<0.000000e+00> : vector<16x8xf32>
    %840 = tpu.matmul %839, %787, %cst_305 {dimension_numbers = #tpu.dot_dimension_numbers<[1], [0], [0], [1], [0, 0, 1, 1], [], []>} : vector<16x16xf32>, vector<16x8xf32>, vector<16x8xf32> -> vector<16x8xf32>
    %c0_306 = arith.constant 0 : index
    %c3_307 = arith.constant 3 : index
    %c0_308 = arith.constant 0 : index
    %c0_309 = arith.constant 0 : index
    %841 = vector.load %arg3[%c0_306, %c3_307, %c0_308, %c0_309] : memref<1x4x16x16xf32, #tpu.memory_space<vmem>>, vector<1x1x16x16xf32>
    %842 = vector.shape_cast %841 : vector<1x1x16x16xf32> to vector<16x16xf32>
    %cst_310 = arith.constant dense<0.000000e+00> : vector<16x8xf32>
    %843 = tpu.matmul %842, %797, %cst_310 {dimension_numbers = #tpu.dot_dimension_numbers<[1], [0], [0], [1], [0, 0, 1, 1], [], []>} : vector<16x16xf32>, vector<16x8xf32>, vector<16x8xf32> -> vector<16x8xf32>
    %844 = arith.addf %840, %843 : vector<16x8xf32>
    %c0_311 = arith.constant 0 : index
    %c0_312 = arith.constant 0 : index
    %c0_313 = arith.constant 0 : index
    %845 = vector.load %arg8[%c0_311, %c0_312, %c0_313] : memref<3x8x16xf32, #tpu.memory_space<vmem>>, vector<1x8x16xf32>
    %846 = vector.shape_cast %845 : vector<1x8x16xf32> to vector<8x16xf32>
    %cst_314 = arith.constant dense<0.000000e+00> : vector<16x16xf32>
    %847 = tpu.matmul %837, %846, %cst_314 {dimension_numbers = #tpu.dot_dimension_numbers<[1], [0], [0], [1], [0, 0, 1, 1], [], []>} : vector<16x8xf32>, vector<8x16xf32>, vector<16x16xf32> -> vector<16x16xf32>
    %c1_315 = arith.constant 1 : index
    %c0_316 = arith.constant 0 : index
    %c0_317 = arith.constant 0 : index
    %848 = vector.load %arg8[%c1_315, %c0_316, %c0_317] : memref<3x8x16xf32, #tpu.memory_space<vmem>>, vector<1x8x16xf32>
    %849 = vector.shape_cast %848 : vector<1x8x16xf32> to vector<8x16xf32>
    %cst_318 = arith.constant dense<0.000000e+00> : vector<16x16xf32>
    %850 = tpu.matmul %844, %849, %cst_318 {dimension_numbers = #tpu.dot_dimension_numbers<[1], [0], [0], [1], [0, 0, 1, 1], [], []>} : vector<16x8xf32>, vector<8x16xf32>, vector<16x16xf32> -> vector<16x16xf32>
    %851 = arith.addf %847, %850 : vector<16x16xf32>
    %c2_319 = arith.constant 2 : index
    %c0_320 = arith.constant 0 : index
    %c0_321 = arith.constant 0 : index
    %852 = vector.load %arg8[%c2_319, %c0_320, %c0_321] : memref<3x8x16xf32, #tpu.memory_space<vmem>>, vector<1x8x16xf32>
    %853 = vector.shape_cast %852 : vector<1x8x16xf32> to vector<8x16xf32>
    %cst_322 = arith.constant dense<0.000000e+00> : vector<16x16xf32>
    %854 = tpu.matmul %444, %853, %cst_322 {dimension_numbers = #tpu.dot_dimension_numbers<[1], [0], [0], [1], [0, 0, 1, 1], [], []>} : vector<16x8xf32>, vector<8x16xf32>, vector<16x16xf32> -> vector<16x16xf32>
    %855 = arith.addf %851, %854 : vector<16x16xf32>
    %c0_323 = arith.constant 0 : index
    %c0_324 = arith.constant 0 : index
    %856 = vector.load %arg9[%c0_323, %c0_324] : memref<1x16xf32, #tpu.memory_space<vmem>>, vector<1x16xf32>
    %857 = vector.broadcast %856 : vector<1x16xf32> to vector<16x16xf32>
    %858 = arith.addf %855, %857 : vector<16x16xf32>
    %859 = arith.negf %858 : vector<16x16xf32>
    %860 = math.exp %859 : vector<16x16xf32>
    %cst_325 = arith.constant 1.000000e+00 : f32
    %861 = vector.broadcast %cst_325 : f32 to vector<16x16xf32>
    %862 = arith.addf %861, %860 : vector<16x16xf32>
    %863 = arith.divf %861, %862 : vector<16x16xf32>
    %864 = vector.extract_strided_slice %863 {offsets = [0, 0], sizes = [16, 8], strides = [1, 1]} : vector<16x16xf32> to vector<16x8xf32>
    %865 = vector.extract_strided_slice %863 {offsets = [0, 8], sizes = [16, 8], strides = [1, 1]} : vector<16x16xf32> to vector<16x8xf32>
    %c0_326 = arith.constant 0 : index
    %c0_327 = arith.constant 0 : index
    %c0_328 = arith.constant 0 : index
    %866 = vector.load %arg10[%c0_326, %c0_327, %c0_328] : memref<3x8x8xf32, #tpu.memory_space<vmem>>, vector<1x8x8xf32>
    %867 = vector.shape_cast %866 : vector<1x8x8xf32> to vector<8x8xf32>
    %cst_329 = arith.constant dense<0.000000e+00> : vector<16x8xf32>
    %868 = tpu.matmul %837, %867, %cst_329 {dimension_numbers = #tpu.dot_dimension_numbers<[1], [0], [0], [1], [0, 0, 1, 1], [], []>} : vector<16x8xf32>, vector<8x8xf32>, vector<16x8xf32> -> vector<16x8xf32>
    %c1_330 = arith.constant 1 : index
    %c0_331 = arith.constant 0 : index
    %c0_332 = arith.constant 0 : index
    %869 = vector.load %arg10[%c1_330, %c0_331, %c0_332] : memref<3x8x8xf32, #tpu.memory_space<vmem>>, vector<1x8x8xf32>
    %870 = vector.shape_cast %869 : vector<1x8x8xf32> to vector<8x8xf32>
    %cst_333 = arith.constant dense<0.000000e+00> : vector<16x8xf32>
    %871 = tpu.matmul %844, %870, %cst_333 {dimension_numbers = #tpu.dot_dimension_numbers<[1], [0], [0], [1], [0, 0, 1, 1], [], []>} : vector<16x8xf32>, vector<8x8xf32>, vector<16x8xf32> -> vector<16x8xf32>
    %872 = arith.addf %868, %871 : vector<16x8xf32>
    %873 = arith.mulf %865, %444 : vector<16x8xf32>
    %c2_334 = arith.constant 2 : index
    %c0_335 = arith.constant 0 : index
    %c0_336 = arith.constant 0 : index
    %874 = vector.load %arg10[%c2_334, %c0_335, %c0_336] : memref<3x8x8xf32, #tpu.memory_space<vmem>>, vector<1x8x8xf32>
    %875 = vector.shape_cast %874 : vector<1x8x8xf32> to vector<8x8xf32>
    %cst_337 = arith.constant dense<0.000000e+00> : vector<16x8xf32>
    %876 = tpu.matmul %873, %875, %cst_337 {dimension_numbers = #tpu.dot_dimension_numbers<[1], [0], [0], [1], [0, 0, 1, 1], [], []>} : vector<16x8xf32>, vector<8x8xf32>, vector<16x8xf32> -> vector<16x8xf32>
    %877 = arith.addf %872, %876 : vector<16x8xf32>
    %c0_338 = arith.constant 0 : index
    %c0_339 = arith.constant 0 : index
    %878 = vector.load %arg11[%c0_338, %c0_339] : memref<1x8xf32, #tpu.memory_space<vmem>>, vector<1x8xf32>
    %879 = vector.broadcast %878 : vector<1x8xf32> to vector<16x8xf32>
    %880 = arith.addf %877, %879 : vector<16x8xf32>
    %881 = math.tanh %880 : vector<16x8xf32>
    %cst_340 = arith.constant 1.000000e+00 : f32
    %882 = vector.broadcast %cst_340 : f32 to vector<16x8xf32>
    %883 = arith.subf %882, %864 : vector<16x8xf32>
    %884 = arith.mulf %883, %444 : vector<16x8xf32>
    %885 = arith.mulf %864, %881 : vector<16x8xf32>
    %886 = arith.addf %884, %885 : vector<16x8xf32>
    %c0_341 = arith.constant 0 : index
    %c0_342 = arith.constant 0 : index
    %c0_343 = arith.constant 0 : index
    %887 = vector.load %arg2[%c0_341, %c0_342, %c0_343] : memref<1x16x1xf32, #tpu.memory_space<vmem>>, vector<1x16x1xf32>
    %888 = vector.shape_cast %887 : vector<1x16x1xf32> to vector<16x1xf32>
    %c0_344 = arith.constant 0 : index
    %c0_345 = arith.constant 0 : index
    %889 = vector.load %arg12[%c0_344, %c0_345] : memref<8x8xf32, #tpu.memory_space<vmem>>, vector<8x8xf32>
    %cst_346 = arith.constant dense<0.000000e+00> : vector<16x8xf32>
    %890 = tpu.matmul %886, %889, %cst_346 {dimension_numbers = #tpu.dot_dimension_numbers<[1], [0], [0], [1], [0, 0, 1, 1], [], []>} : vector<16x8xf32>, vector<8x8xf32>, vector<16x8xf32> -> vector<16x8xf32>
    %c0_347 = arith.constant 0 : index
    %c0_348 = arith.constant 0 : index
    %891 = vector.load %arg13[%c0_347, %c0_348] : memref<1x8xf32, #tpu.memory_space<vmem>>, vector<1x8xf32>
    %892 = vector.broadcast %888 : vector<16x1xf32> to vector<16x8xf32>
    %893 = vector.broadcast %891 : vector<1x8xf32> to vector<16x8xf32>
    %894 = arith.mulf %892, %893 : vector<16x8xf32>
    %895 = arith.addf %890, %894 : vector<16x8xf32>
    %c0_349 = arith.constant 0 : index
    %c0_350 = arith.constant 0 : index
    %896 = vector.load %arg14[%c0_349, %c0_350] : memref<1x8xf32, #tpu.memory_space<vmem>>, vector<1x8xf32>
    %897 = vector.broadcast %896 : vector<1x8xf32> to vector<16x8xf32>
    %898 = arith.addf %895, %897 : vector<16x8xf32>
    %899 = math.tanh %898 : vector<16x8xf32>
    %c0_351 = arith.constant 0 : index
    %c0_352 = arith.constant 0 : index
    %900 = vector.load %arg15[%c0_351, %c0_352] : memref<8x1xf32, #tpu.memory_space<vmem>>, vector<8x1xf32>
    %cst_353 = arith.constant dense<0.000000e+00> : vector<16x1xf32>
    %901 = tpu.matmul %899, %900, %cst_353 {dimension_numbers = #tpu.dot_dimension_numbers<[1], [0], [0], [1], [0, 0, 1, 1], [], []>} : vector<16x8xf32>, vector<8x1xf32>, vector<16x1xf32> -> vector<16x1xf32>
    %c0_354 = arith.constant 0 : index
    %c0_355 = arith.constant 0 : index
    %902 = vector.load %arg16[%c0_354, %c0_355] : memref<1x1xf32, #tpu.memory_space<vmem>>, vector<1x1xf32>
    %903 = vector.broadcast %902 : vector<1x1xf32> to vector<16x1xf32>
    %904 = arith.addf %901, %903 : vector<16x1xf32>
    %c0_356 = arith.constant 0 : index
    %c0_357 = arith.constant 0 : index
    %c0_358 = arith.constant 0 : index
    %905 = vector.load %arg17[%c0_356, %c0_357, %c0_358] : memref<1x16x1xf32, #tpu.memory_space<vmem>>, vector<1x16x1xf32>
    %906 = vector.shape_cast %905 : vector<1x16x1xf32> to vector<16x1xf32>
    %907 = vector.shape_cast %904 : vector<16x1xf32> to vector<1x16x1xf32>
    tpu.vector_store %arg17[%c0_356, %c0_357, %c0_358], %907 {strides = array<i32>} : memref<1x16x1xf32, #tpu.memory_space<vmem>>, vector<1x16x1xf32>,
    %908 = tpu.concatenate %195, %388, %637, %830 in 0 : vector<1x8xf32>, vector<1x8xf32>, vector<1x8xf32>, vector<1x8xf32> -> vector<4x8xf32>
    %c0_359 = arith.constant 0 : index
    %c0_360 = arith.constant 0 : index
    %c0_361 = arith.constant 0 : index
    %909 = vector.load %arg18[%c0_359, %c0_360, %c0_361] : memref<1x4x8xf32, #tpu.memory_space<vmem>>, vector<1x4x8xf32>
    %910 = vector.shape_cast %909 : vector<1x4x8xf32> to vector<4x8xf32>
    %911 = vector.shape_cast %908 : vector<4x8xf32> to vector<1x4x8xf32>
    tpu.vector_store %arg18[%c0_359, %c0_360, %c0_361], %911 {strides = array<i32>} : memref<1x4x8xf32, #tpu.memory_space<vmem>>, vector<1x4x8xf32>,
    return
  }
  func.func @transform_0(%arg0: i32) -> (i32, i32, i32) {
    %c0_i32 = arith.constant 0 : i32
    %c0_i32_0 = arith.constant 0 : i32
    %c0_i32_1 = arith.constant 0 : i32
    return %arg0, %c0_i32, %c0_i32_0 : i32, i32, i32
  }
  func.func @transform_1(%arg0: i32) -> (i32, i32, i32) {
    %c0_i32 = arith.constant 0 : i32
    %c0_i32_0 = arith.constant 0 : i32
    %c0_i32_1 = arith.constant 0 : i32
    return %arg0, %c0_i32, %c0_i32_0 : i32, i32, i32
  }
  func.func @transform_2(%arg0: i32) -> (i32, i32, i32, i32) {
    %c0_i32 = arith.constant 0 : i32
    %c0_i32_0 = arith.constant 0 : i32
    %c0_i32_1 = arith.constant 0 : i32
    %c0_i32_2 = arith.constant 0 : i32
    return %arg0, %c0_i32, %c0_i32_0, %c0_i32_1 : i32, i32, i32, i32
  }
  func.func @transform_3(%arg0: i32) -> (i32, i32, i32) {
    %c0_i32 = arith.constant 0 : i32
    %c0_i32_0 = arith.constant 0 : i32
    %c0_i32_1 = arith.constant 0 : i32
    %c0_i32_2 = arith.constant 0 : i32
    return %c0_i32, %c0_i32_0, %c0_i32_1 : i32, i32, i32
  }
  func.func @transform_4(%arg0: i32) -> (i32, i32, i32) {
    %c0_i32 = arith.constant 0 : i32
    %c0_i32_0 = arith.constant 0 : i32
    %c0_i32_1 = arith.constant 0 : i32
    %c0_i32_2 = arith.constant 0 : i32
    return %c0_i32, %c0_i32_0, %c0_i32_1 : i32, i32, i32
  }
  func.func @transform_5(%arg0: i32) -> (i32, i32, i32) {
    %c0_i32 = arith.constant 0 : i32
    %c0_i32_0 = arith.constant 0 : i32
    %c0_i32_1 = arith.constant 0 : i32
    %c0_i32_2 = arith.constant 0 : i32
    return %c0_i32, %c0_i32_0, %c0_i32_1 : i32, i32, i32
  }
  func.func @transform_6(%arg0: i32) -> (i32, i32, i32) {
    %c0_i32 = arith.constant 0 : i32
    %c0_i32_0 = arith.constant 0 : i32
    %c0_i32_1 = arith.constant 0 : i32
    %c0_i32_2 = arith.constant 0 : i32
    return %c0_i32, %c0_i32_0, %c0_i32_1 : i32, i32, i32
  }
  func.func @transform_7(%arg0: i32) -> (i32, i32, i32) {
    %c0_i32 = arith.constant 0 : i32
    %c0_i32_0 = arith.constant 0 : i32
    %c0_i32_1 = arith.constant 0 : i32
    %c0_i32_2 = arith.constant 0 : i32
    return %c0_i32, %c0_i32_0, %c0_i32_1 : i32, i32, i32
  }
  func.func @transform_8(%arg0: i32) -> (i32, i32) {
    %c0_i32 = arith.constant 0 : i32
    %c0_i32_0 = arith.constant 0 : i32
    %c0_i32_1 = arith.constant 0 : i32
    return %c0_i32, %c0_i32_0 : i32, i32
  }
  func.func @transform_9(%arg0: i32) -> (i32, i32, i32) {
    %c0_i32 = arith.constant 0 : i32
    %c0_i32_0 = arith.constant 0 : i32
    %c0_i32_1 = arith.constant 0 : i32
    %c0_i32_2 = arith.constant 0 : i32
    return %c0_i32, %c0_i32_0, %c0_i32_1 : i32, i32, i32
  }
  func.func @transform_10(%arg0: i32) -> (i32, i32) {
    %c0_i32 = arith.constant 0 : i32
    %c0_i32_0 = arith.constant 0 : i32
    %c0_i32_1 = arith.constant 0 : i32
    return %c0_i32, %c0_i32_0 : i32, i32
  }
  func.func @transform_11(%arg0: i32) -> (i32, i32) {
    %c0_i32 = arith.constant 0 : i32
    %c0_i32_0 = arith.constant 0 : i32
    %c0_i32_1 = arith.constant 0 : i32
    return %c0_i32, %c0_i32_0 : i32, i32
  }
  func.func @transform_12(%arg0: i32) -> (i32, i32) {
    %c0_i32 = arith.constant 0 : i32
    %c0_i32_0 = arith.constant 0 : i32
    %c0_i32_1 = arith.constant 0 : i32
    return %c0_i32, %c0_i32_0 : i32, i32
  }
  func.func @transform_13(%arg0: i32) -> (i32, i32) {
    %c0_i32 = arith.constant 0 : i32
    %c0_i32_0 = arith.constant 0 : i32
    %c0_i32_1 = arith.constant 0 : i32
    return %c0_i32, %c0_i32_0 : i32, i32
  }
  func.func @transform_14(%arg0: i32) -> (i32, i32) {
    %c0_i32 = arith.constant 0 : i32
    %c0_i32_0 = arith.constant 0 : i32
    %c0_i32_1 = arith.constant 0 : i32
    return %c0_i32, %c0_i32_0 : i32, i32
  }
  func.func @transform_15(%arg0: i32) -> (i32, i32) {
    %c0_i32 = arith.constant 0 : i32
    %c0_i32_0 = arith.constant 0 : i32
    %c0_i32_1 = arith.constant 0 : i32
    return %c0_i32, %c0_i32_0 : i32, i32
  }
  func.func @transform_16(%arg0: i32) -> (i32, i32, i32) {
    %c0_i32 = arith.constant 0 : i32
    %c0_i32_0 = arith.constant 0 : i32
    %c0_i32_1 = arith.constant 0 : i32
    return %arg0, %c0_i32, %c0_i32_0 : i32, i32, i32
  }
  func.func @transform_17(%arg0: i32) -> (i32, i32, i32) {
    %c0_i32 = arith.constant 0 : i32
    %c0_i32_0 = arith.constant 0 : i32
    %c0_i32_1 = arith.constant 0 : i32
    return %arg0, %c0_i32, %c0_i32_0 : i32, i32, i32
  }
}

</mosaic_0001>

<llo_original>
// kernel: ggnn_fused_batched.1
$region0: #{ggnn_fused_batched.1}
  #allocation0 [shape = 'u32[]', space=smem, size = 0x4, offset = 0x4, fixed_abs, tag = 'smem constant byte address 0x4 - core index']
  #allocation1 [shape = 'u32[72,128]{1,0:T(1,128)}', space=vmem, size = 0x9000, scoped, tag = 'internal scratch']
  #allocation2 [shape = 'f32[1,1]{1,0:T(1,128)S(1)}', space=vmem, size = 0x200, scoped, tag = 'scoped memory for ggnn_fused_batched.1']
  %s0 = inlined_call_operand.vmem [shape: f32[8,16,8], index: 0, kind: input, shape index: {}]
  %s1 = inlined_call_operand.vmem [shape: f32[8,16,1], index: 1, kind: input, shape index: {}]
  %s2 = inlined_call_operand.hbm [shape: f32[8,4,16,16], index: 2, kind: input, shape index: {}]
  %s3 = inlined_call_operand.vmem [shape: f32[4,8,8], index: 3, kind: input, shape index: {}]
  %s4 = inlined_call_operand.vmem [shape: f32[4,1,8], index: 4, kind: input, shape index: {}]
  %s5 = inlined_call_operand.hbm [shape: f32[4,1,8], index: 5, kind: input, shape index: {}]
  %s6 = inlined_call_operand.hbm [shape: f32[4,1,8], index: 6, kind: input, shape index: {}]
  %s7 = inlined_call_operand.vmem [shape: f32[3,8,16], index: 7, kind: input, shape index: {}]
  %s8 = inlined_call_operand.vmem [shape: f32[1,16], index: 8, kind: input, shape index: {}]
  %s9 = inlined_call_operand.hbm [shape: f32[3,8,8], index: 9, kind: input, shape index: {}]
  %s10 = inlined_call_operand.vmem [shape: f32[1,8], index: 10, kind: input, shape index: {}]
  %s11 = inlined_call_operand.vmem [shape: f32[8,8], index: 11, kind: input, shape index: {}]
  %s12 = inlined_call_operand.hbm [shape: f32[1,8], index: 12, kind: input, shape index: {}]
  %s13 = inlined_call_operand.hbm [shape: f32[1,8], index: 13, kind: input, shape index: {}]
  %s14 = inlined_call_operand.vmem [shape: f32[8,1], index: 14, kind: input, shape index: {}]
  %s15 = inlined_call_operand.<no memory space> [shape: f32[1,1], index: 15, kind: input, shape index: {}]
  %s16 = inlined_call_operand.vmem [shape: f32[8,16,1], index: 16, kind: output, shape index: {0}]
  %s17 = inlined_call_operand.hbm [shape: f32[8,4,8], index: 17, kind: output, shape index: {1}]
  %18 = xla_tuple %s16, %s17
  %s19 = sld [smem:[#allocation0]]
  $region129: #{ggnn_fused_batched.1} parent=0
    _
  %s21 = ssub.s32 1, %s19
  %s22 = scalar_select 0, %s21, %s19
  %v23 = vstv %s15
  %24 = vst [vmem:[#allocation2] sm:$0x1] %v23
  $region1: #{ggnn_fused_batched.1} parent=0
    #allocation3 [shape = 'u8[65536]{0}', space=vmem, size = 0x10000, scoped, tag = 'input window, operand 2']
    #allocation4 [shape = 's32[2]{0}', space=sflag, size = 0x8, scoped, tag = 'scoped memory for ggnn_fused_batched.1']
    #allocation5 [shape = 's32[2]{0}', space=sflag, size = 0x8, scoped, tag = 'scoped memory for ggnn_fused_batched.1']
    #allocation6 [shape = 'u8[2048]{0}', space=vmem, size = 0x800, scoped, tag = 'input window, operand 5, single buffered']
    #allocation7 [shape = 's32[1]{0}', space=sflag, size = 0x4, scoped, tag = 'scoped memory for ggnn_fused_batched.1']
    #allocation8 [shape = 'u8[2048]{0}', space=vmem, size = 0x800, scoped, tag = 'input window, operand 6, single buffered']
    #allocation9 [shape = 'u8[12288]{0}', space=vmem, size = 0x3000, scoped, tag = 'input window, operand 9, single buffered']
    #allocation10 [shape = 's32[1]{0}', space=sflag, size = 0x4, scoped, tag = 'scoped memory for ggnn_fused_batched.1']
    #allocation11 [shape = 'u8[512]{0}', space=vmem, size = 0x400, scoped, tag = 'input window, operand 12, single buffered']
    #allocation12 [shape = 'u8[512]{0}', space=vmem, size = 0x400, scoped, tag = 'input window, operand 13, single buffered']
    #allocation13 [shape = 's32[1]{0}', space=sflag, size = 0x4, scoped, tag = 'scoped memory for ggnn_fused_batched.1']
    #allocation14 [shape = 'u8[4096]{0}', space=vmem, size = 0x1000, scoped, tag = 'output window, operand 1']
    %25 = vsyncpa [#allocation4], 0
    %s26 = scalar_lea.sflag [#allocation4], 1
    %27 = vsyncpa %s26, 0
    %28 = vsyncpa [#allocation7], 0
    %29 = vsyncpa [#allocation10], 0
    %30 = vsyncpa [#allocation13], 0
    %31 = vsyncpa [#allocation5], 0
    %s32 = scalar_lea.sflag [#allocation5], 1
    %33 = vsyncpa %s32, 0
    loop: start=0, step=1, limit=10
    $region2: #{ggnn_fused_batched.1} parent=1 // loop_pre_header
      _
    $region3: #{ggnn_fused_batched.1} parent=1 // loop_header
      %s35 = sphi 0, %s39
      %p36 = scmp.ge.s32.totalorder %s35, 10
      %s45 = sphi 0, %s47
      %s48 = sphi 0, %s45
      %s49 = sphi 0, %s48
      %s65 = sphi 0, %s49
      %s71 = sphi 0, %s73
      %s74 = sphi 0, %s71
      %s75 = sphi 0, %s74
      %s91 = sphi 0, %s75
      %s97 = sphi 0, %s99
      %s100 = sphi 0, %s97
      %s101 = sphi 0, %s100
      %s117 = sphi 0, %s101
      %s121 = sphi 0, %s121
      %s123 = sphi 0, %s121
      %s124 = sphi 0, %s123
      %s138 = sphi 0, %s124
      %s142 = sphi 0, %s142
      %s144 = sphi 0, %s142
      %s145 = sphi 0, %s144
      %s159 = sphi 0, %s145
      %s163 = sphi 0, %s163
      %s165 = sphi 0, %s163
      %s166 = sphi 0, %s165
      %s180 = sphi 0, %s166
      %s184 = sphi 0, %s184
      %s186 = sphi 0, %s184
      %s187 = sphi 0, %s186
      %s201 = sphi 0, %s187
      %s205 = sphi 0, %s205
      %s207 = sphi 0, %s205
      %s208 = sphi 0, %s207
      %s222 = sphi 0, %s208
      %s226 = sphi 0, %s226
      %s228 = sphi 0, %s226
      %s229 = sphi 0, %s228
      %s243 = sphi 0, %s229
      %s247 = sphi 0, %s247
      %s249 = sphi 0, %s247
      %s250 = sphi 0, %s249
      %s264 = sphi 0, %s250
      %s268 = sphi 0, %s268
      %s270 = sphi 0, %s268
      %s271 = sphi 0, %s270
      %s285 = sphi 0, %s271
      %s289 = sphi 0, %s289
      %s291 = sphi 0, %s289
      %s292 = sphi 0, %s291
      %s306 = sphi 0, %s292
      %s310 = sphi 0, %s310
      %s312 = sphi 0, %s310
      %s313 = sphi 0, %s312
      %s327 = sphi 0, %s313
      %s331 = sphi 0, %s331
      %s333 = sphi 0, %s331
      %s334 = sphi 0, %s333
      %s348 = sphi 0, %s334
      %s352 = sphi 0, %s352
      %s354 = sphi 0, %s352
      %s355 = sphi 0, %s354
      %s369 = sphi 0, %s355
      %s373 = sphi 0, %s373
      %s375 = sphi 0, %s373
      %s376 = sphi 0, %s375
      %s390 = sphi 0, %s376
      %s396 = sphi 0, %s398
      %s399 = sphi 0, %s396
      %s400 = sphi 0, %s399
      %s416 = sphi 0, %s400
      %s422 = sphi 0, %s424
      %s425 = sphi 0, %s422
      %s426 = sphi 0, %s425
      %s442 = sphi 0, %s426
    $region4: #{ggnn_fused_batched.1} parent=1 // loop_header_branch
      %38 = sbr.rel (%p36) target = $region8
    $region5: #{ggnn_fused_batched.1} parent=1 // loop_body
      %s40 = ssub.s32 %s35, 1
      %s41 = ssub.s32 %s35, 2
      %s42 = sadd.s32 %s35, 1
      %s43 = ssub.s32 %s35, %s42
      %p44 = scmp.eq.s32.totalorder %s43, 0
      %s46 = sadd.s32 %s45, 1
      %s47 = scalar_select %p44, %s45, %s46
      %p50 = pneg %p44
      %p51 = scmp.eq.s32.totalorder %s35, 7
      %p52 = por %p50, %p51
      %p53 = scmp.ne.s32.totalorder %s45, %s48
      %p54 = scmp.eq.s32.totalorder %s35, 0
      %p55 = por %p53, %p54
      %p56 = scmp.ne.s32.totalorder %s45, %s48
      %p57 = scmp.eq.s32.totalorder %s40, 7
      %p58 = por %p56, %p57
      %p59 = scmp.ne.s32.totalorder %s48, %s49
      %p60 = scmp.eq.s32.totalorder %s40, 0
      %p61 = por %p59, %p60
      %p62 = scmp.ne.s32.totalorder %s48, %s49
      %p63 = scmp.eq.s32.totalorder %s41, 7
      %p64 = por %p62, %p63
      %p66 = scmp.ne.s32.totalorder %s49, %s65
      %p67 = scmp.eq.s32.totalorder %s41, 0
      %p68 = por %p66, %p67
      %s69 = ssub.s32 %s35, %s42
      %p70 = scmp.eq.s32.totalorder %s69, 0
      %s72 = sadd.s32 %s71, 1
      %s73 = scalar_select %p70, %s71, %s72
      %p76 = pneg %p70
      %p77 = scmp.eq.s32.totalorder %s35, 7
      %p78 = por %p76, %p77
      %p79 = scmp.ne.s32.totalorder %s71, %s74
      %p80 = scmp.eq.s32.totalorder %s35, 0
      %p81 = por %p79, %p80
      %p82 = scmp.ne.s32.totalorder %s71, %s74
      %p83 = scmp.eq.s32.totalorder %s40, 7
      %p84 = por %p82, %p83
      %p85 = scmp.ne.s32.totalorder %s74, %s75
      %p86 = scmp.eq.s32.totalorder %s40, 0
      %p87 = por %p85, %p86
      %p88 = scmp.ne.s32.totalorder %s74, %s75
      %p89 = scmp.eq.s32.totalorder %s41, 7
      %p90 = por %p88, %p89
      %p92 = scmp.ne.s32.totalorder %s75, %s91
      %p93 = scmp.eq.s32.totalorder %s41, 0
      %p94 = por %p92, %p93
      %s95 = ssub.s32 %s35, %s42
      %p96 = scmp.eq.s32.totalorder %s95, 0
      %s98 = sadd.s32 %s97, 1
      %s99 = scalar_select %p96, %s97, %s98
      %p102 = pneg %p96
      %p103 = scmp.eq.s32.totalorder %s35, 7
      %p104 = por %p102, %p103
      %p105 = scmp.ne.s32.totalorder %s97, %s100
      %p106 = scmp.eq.s32.totalorder %s35, 0
      %p107 = por %p105, %p106
      %p108 = scmp.ne.s32.totalorder %s97, %s100
      %p109 = scmp.eq.s32.totalorder %s40, 7
      %p110 = por %p108, %p109
      %p111 = scmp.ne.s32.totalorder %s100, %s101
      %p112 = scmp.eq.s32.totalorder %s40, 0
      %p113 = por %p111, %p112
      %p114 = scmp.ne.s32.totalorder %s100, %s101
      %p115 = scmp.eq.s32.totalorder %s41, 7
      %p116 = por %p114, %p115
      %p118 = scmp.ne.s32.totalorder %s101, %s117
      %p119 = scmp.eq.s32.totalorder %s41, 0
      %p120 = por %p118, %p119
      %s122 = sadd.s32 %s121, 1
      %p125 = scmp.eq.s32.totalorder %s35, 7
      %p126 = scmp.ne.s32.totalorder %s121, %s123
      %p127 = scmp.eq.s32.totalorder %s35, 0
      %p128 = por %p126, %p127
      %p129 = scmp.ne.s32.totalorder %s121, %s123
      %p130 = scmp.eq.s32.totalorder %s40, 7
      %p131 = por %p129, %p130
      %p132 = scmp.ne.s32.totalorder %s123, %s124
      %p133 = scmp.eq.s32.totalorder %s40, 0
      %p134 = por %p132, %p133
      %p135 = scmp.ne.s32.totalorder %s123, %s124
      %p136 = scmp.eq.s32.totalorder %s41, 7
      %p137 = por %p135, %p136
      %p139 = scmp.ne.s32.totalorder %s124, %s138
      %p140 = scmp.eq.s32.totalorder %s41, 0
      %p141 = por %p139, %p140
      %s143 = sadd.s32 %s142, 1
      %p146 = scmp.eq.s32.totalorder %s35, 7
      %p147 = scmp.ne.s32.totalorder %s142, %s144
      %p148 = scmp.eq.s32.totalorder %s35, 0
      %p149 = por %p147, %p148
      %p150 = scmp.ne.s32.totalorder %s142, %s144
      %p151 = scmp.eq.s32.totalorder %s40, 7
      %p152 = por %p150, %p151
      %p153 = scmp.ne.s32.totalorder %s144, %s145
      %p154 = scmp.eq.s32.totalorder %s40, 0
      %p155 = por %p153, %p154
      %p156 = scmp.ne.s32.totalorder %s144, %s145
      %p157 = scmp.eq.s32.totalorder %s41, 7
      %p158 = por %p156, %p157
      %p160 = scmp.ne.s32.totalorder %s145, %s159
      %p161 = scmp.eq.s32.totalorder %s41, 0
      %p162 = por %p160, %p161
      %s164 = sadd.s32 %s163, 1
      %p167 = scmp.eq.s32.totalorder %s35, 7
      %p168 = scmp.ne.s32.totalorder %s163, %s165
      %p169 = scmp.eq.s32.totalorder %s35, 0
      %p170 = por %p168, %p169
      %p171 = scmp.ne.s32.totalorder %s163, %s165
      %p172 = scmp.eq.s32.totalorder %s40, 7
      %p173 = por %p171, %p172
      %p174 = scmp.ne.s32.totalorder %s165, %s166
      %p175 = scmp.eq.s32.totalorder %s40, 0
      %p176 = por %p174, %p175
      %p177 = scmp.ne.s32.totalorder %s165, %s166
      %p178 = scmp.eq.s32.totalorder %s41, 7
      %p179 = por %p177, %p178
      %p181 = scmp.ne.s32.totalorder %s166, %s180
      %p182 = scmp.eq.s32.totalorder %s41, 0
      %p183 = por %p181, %p182
      %s185 = sadd.s32 %s184, 1
      %p188 = scmp.eq.s32.totalorder %s35, 7
      %p189 = scmp.ne.s32.totalorder %s184, %s186
      %p190 = scmp.eq.s32.totalorder %s35, 0
      %p191 = por %p189, %p190
      %p192 = scmp.ne.s32.totalorder %s184, %s186
      %p193 = scmp.eq.s32.totalorder %s40, 7
      %p194 = por %p192, %p193
      %p195 = scmp.ne.s32.totalorder %s186, %s187
      %p196 = scmp.eq.s32.totalorder %s40, 0
      %p197 = por %p195, %p196
      %p198 = scmp.ne.s32.totalorder %s186, %s187
      %p199 = scmp.eq.s32.totalorder %s41, 7
      %p200 = por %p198, %p199
      %p202 = scmp.ne.s32.totalorder %s187, %s201
      %p203 = scmp.eq.s32.totalorder %s41, 0
      %p204 = por %p202, %p203
      %s206 = sadd.s32 %s205, 1
      %p209 = scmp.eq.s32.totalorder %s35, 7
      %p210 = scmp.ne.s32.totalorder %s205, %s207
      %p211 = scmp.eq.s32.totalorder %s35, 0
      %p212 = por %p210, %p211
      %p213 = scmp.ne.s32.totalorder %s205, %s207
      %p214 = scmp.eq.s32.totalorder %s40, 7
      %p215 = por %p213, %p214
      %p216 = scmp.ne.s32.totalorder %s207, %s208
      %p217 = scmp.eq.s32.totalorder %s40, 0
      %p218 = por %p216, %p217
      %p219 = scmp.ne.s32.totalorder %s207, %s208
      %p220 = scmp.eq.s32.totalorder %s41, 7
      %p221 = por %p219, %p220
      %p223 = scmp.ne.s32.totalorder %s208, %s222
      %p224 = scmp.eq.s32.totalorder %s41, 0
      %p225 = por %p223, %p224
      %s227 = sadd.s32 %s226, 1
      %p230 = scmp.eq.s32.totalorder %s35, 7
      %p231 = scmp.ne.s32.totalorder %s226, %s228
      %p232 = scmp.eq.s32.totalorder %s35, 0
      %p233 = por %p231, %p232
      %p234 = scmp.ne.s32.totalorder %s226, %s228
      %p235 = scmp.eq.s32.totalorder %s40, 7
      %p236 = por %p234, %p235
      %p237 = scmp.ne.s32.totalorder %s228, %s229
      %p238 = scmp.eq.s32.totalorder %s40, 0
      %p239 = por %p237, %p238
      %p240 = scmp.ne.s32.totalorder %s228, %s229
      %p241 = scmp.eq.s32.totalorder %s41, 7
      %p242 = por %p240, %p241
      %p244 = scmp.ne.s32.totalorder %s229, %s243
      %p245 = scmp.eq.s32.totalorder %s41, 0
      %p246 = por %p244, %p245
      %s248 = sadd.s32 %s247, 1
      %p251 = scmp.eq.s32.totalorder %s35, 7
      %p252 = scmp.ne.s32.totalorder %s247, %s249
      %p253 = scmp.eq.s32.totalorder %s35, 0
      %p254 = por %p252, %p253
      %p255 = scmp.ne.s32.totalorder %s247, %s249
      %p256 = scmp.eq.s32.totalorder %s40, 7
      %p257 = por %p255, %p256
      %p258 = scmp.ne.s32.totalorder %s249, %s250
      %p259 = scmp.eq.s32.totalorder %s40, 0
      %p260 = por %p258, %p259
      %p261 = scmp.ne.s32.totalorder %s249, %s250
      %p262 = scmp.eq.s32.totalorder %s41, 7
      %p263 = por %p261, %p262
      %p265 = scmp.ne.s32.totalorder %s250, %s264
      %p266 = scmp.eq.s32.totalorder %s41, 0
      %p267 = por %p265, %p266
      %s269 = sadd.s32 %s268, 1
      %p272 = scmp.eq.s32.totalorder %s35, 7
      %p273 = scmp.ne.s32.totalorder %s268, %s270
      %p274 = scmp.eq.s32.totalorder %s35, 0
      %p275 = por %p273, %p274
      %p276 = scmp.ne.s32.totalorder %s268, %s270
      %p277 = scmp.eq.s32.totalorder %s40, 7
      %p278 = por %p276, %p277
      %p279 = scmp.ne.s32.totalorder %s270, %s271
      %p280 = scmp.eq.s32.totalorder %s40, 0
      %p281 = por %p279, %p280
      %p282 = scmp.ne.s32.totalorder %s270, %s271
      %p283 = scmp.eq.s32.totalorder %s41, 7
      %p284 = por %p282, %p283
      %p286 = scmp.ne.s32.totalorder %s271, %s285
      %p287 = scmp.eq.s32.totalorder %s41, 0
      %p288 = por %p286, %p287
      %s290 = sadd.s32 %s289, 1
      %p293 = scmp.eq.s32.totalorder %s35, 7
      %p294 = scmp.ne.s32.totalorder %s289, %s291
      %p295 = scmp.eq.s32.totalorder %s35, 0
      %p296 = por %p294, %p295
      %p297 = scmp.ne.s32.totalorder %s289, %s291
      %p298 = scmp.eq.s32.totalorder %s40, 7
      %p299 = por %p297, %p298
      %p300 = scmp.ne.s32.totalorder %s291, %s292
      %p301 = scmp.eq.s32.totalorder %s40, 0
      %p302 = por %p300, %p301
      %p303 = scmp.ne.s32.totalorder %s291, %s292
      %p304 = scmp.eq.s32.totalorder %s41, 7
      %p305 = por %p303, %p304
      %p307 = scmp.ne.s32.totalorder %s292, %s306
      %p308 = scmp.eq.s32.totalorder %s41, 0
      %p309 = por %p307, %p308
      %s311 = sadd.s32 %s310, 1
      %p314 = scmp.eq.s32.totalorder %s35, 7
      %p315 = scmp.ne.s32.totalorder %s310, %s312
      %p316 = scmp.eq.s32.totalorder %s35, 0
      %p317 = por %p315, %p316
      %p318 = scmp.ne.s32.totalorder %s310, %s312
      %p319 = scmp.eq.s32.totalorder %s40, 7
      %p320 = por %p318, %p319
      %p321 = scmp.ne.s32.totalorder %s312, %s313
      %p322 = scmp.eq.s32.totalorder %s40, 0
      %p323 = por %p321, %p322
      %p324 = scmp.ne.s32.totalorder %s312, %s313
      %p325 = scmp.eq.s32.totalorder %s41, 7
      %p326 = por %p324, %p325
      %p328 = scmp.ne.s32.totalorder %s313, %s327
      %p329 = scmp.eq.s32.totalorder %s41, 0
      %p330 = por %p328, %p329
      %s332 = sadd.s32 %s331, 1
      %p335 = scmp.eq.s32.totalorder %s35, 7
      %p336 = scmp.ne.s32.totalorder %s331, %s333
      %p337 = scmp.eq.s32.totalorder %s35, 0
      %p338 = por %p336, %p337
      %p339 = scmp.ne.s32.totalorder %s331, %s333
      %p340 = scmp.eq.s32.totalorder %s40, 7
      %p341 = por %p339, %p340
      %p342 = scmp.ne.s32.totalorder %s333, %s334
      %p343 = scmp.eq.s32.totalorder %s40, 0
      %p344 = por %p342, %p343
      %p345 = scmp.ne.s32.totalorder %s333, %s334
      %p346 = scmp.eq.s32.totalorder %s41, 7
      %p347 = por %p345, %p346
      %p349 = scmp.ne.s32.totalorder %s334, %s348
      %p350 = scmp.eq.s32.totalorder %s41, 0
      %p351 = por %p349, %p350
      %s353 = sadd.s32 %s352, 1
      %p356 = scmp.eq.s32.totalorder %s35, 7
      %p357 = scmp.ne.s32.totalorder %s352, %s354
      %p358 = scmp.eq.s32.totalorder %s35, 0
      %p359 = por %p357, %p358
      %p360 = scmp.ne.s32.totalorder %s352, %s354
      %p361 = scmp.eq.s32.totalorder %s40, 7
      %p362 = por %p360, %p361
      %p363 = scmp.ne.s32.totalorder %s354, %s355
      %p364 = scmp.eq.s32.totalorder %s40, 0
      %p365 = por %p363, %p364
      %p366 = scmp.ne.s32.totalorder %s354, %s355
      %p367 = scmp.eq.s32.totalorder %s41, 7
      %p368 = por %p366, %p367
      %p370 = scmp.ne.s32.totalorder %s355, %s369
      %p371 = scmp.eq.s32.totalorder %s41, 0
      %p372 = por %p370, %p371
      %s374 = sadd.s32 %s373, 1
      %p377 = scmp.eq.s32.totalorder %s35, 7
      %p378 = scmp.ne.s32.totalorder %s373, %s375
      %p379 = scmp.eq.s32.totalorder %s35, 0
      %p380 = por %p378, %p379
      %p381 = scmp.ne.s32.totalorder %s373, %s375
      %p382 = scmp.eq.s32.totalorder %s40, 7
      %p383 = por %p381, %p382
      %p384 = scmp.ne.s32.totalorder %s375, %s376
      %p385 = scmp.eq.s32.totalorder %s40, 0
      %p386 = por %p384, %p385
      %p387 = scmp.ne.s32.totalorder %s375, %s376
      %p388 = scmp.eq.s32.totalorder %s41, 7
      %p389 = por %p387, %p388
      %p391 = scmp.ne.s32.totalorder %s376, %s390
      %p392 = scmp.eq.s32.totalorder %s41, 0
      %p393 = por %p391, %p392
      %s394 = ssub.s32 %s35, %s42
      %p395 = scmp.eq.s32.totalorder %s394, 0
      %s397 = sadd.s32 %s396, 1
      %s398 = scalar_select %p395, %s396, %s397
      %p401 = pneg %p395
      %p402 = scmp.eq.s32.totalorder %s35, 7
      %p403 = por %p401, %p402
      %p404 = scmp.ne.s32.totalorder %s396, %s399
      %p405 = scmp.eq.s32.totalorder %s35, 0
      %p406 = por %p404, %p405
      %p407 = scmp.ne.s32.totalorder %s396, %s399
      %p408 = scmp.eq.s32.totalorder %s40, 7
      %p409 = por %p407, %p408
      %p410 = scmp.ne.s32.totalorder %s399, %s400
      %p411 = scmp.eq.s32.totalorder %s40, 0
      %p412 = por %p410, %p411
      %p413 = scmp.ne.s32.totalorder %s399, %s400
      %p414 = scmp.eq.s32.totalorder %s41, 7
      %p415 = por %p413, %p414
      %p417 = scmp.ne.s32.totalorder %s400, %s416
      %p418 = scmp.eq.s32.totalorder %s41, 0
      %p419 = por %p417, %p418
      %s420 = ssub.s32 %s35, %s42
      %p421 = scmp.eq.s32.totalorder %s420, 0
      %s423 = sadd.s32 %s422, 1
      %s424 = scalar_select %p421, %s422, %s423
      %p427 = pneg %p421
      %p428 = scmp.eq.s32.totalorder %s35, 7
      %p429 = por %p427, %p428
      %p430 = scmp.ne.s32.totalorder %s422, %s425
      %p431 = scmp.eq.s32.totalorder %s35, 0
      %p432 = por %p430, %p431
      %p433 = scmp.ne.s32.totalorder %s422, %s425
      %p434 = scmp.eq.s32.totalorder %s40, 7
      %p435 = por %p433, %p434
      %p436 = scmp.ne.s32.totalorder %s425, %s426
      %p437 = scmp.eq.s32.totalorder %s40, 0
      %p438 = por %p436, %p437
      %p439 = scmp.ne.s32.totalorder %s425, %s426
      %p440 = scmp.eq.s32.totalorder %s41, 7
      %p441 = por %p439, %p440
      %p443 = scmp.ne.s32.totalorder %s426, %s442
      %p444 = scmp.eq.s32.totalorder %s41, 0
      %p445 = por %p443, %p444
      %p446 = scmp.le.s32.totalorder 1, %s35
      %p447 = scmp.lt.s32.totalorder %s35, 9
      %p448 = pnand %p446, %p447
      %p449 = pneg %p448
      // Predicated region
      $region9: #{ggnn_fused_batched.1} parent=5 // pred_check
        _
      $region10: #{ggnn_fused_batched.1} parent=5 // pred_check_branch
        %451 = sbr.rel (%p448) target = $region12
      $region11: #{ggnn_fused_batched.1} parent=5 // pred_region
        %s452 = ssub.s32 %s35, 1
        // Predicated region
        $region13: #{ggnn_fused_batched.1} parent=11 // pred_check
          %p453 = pneg %p134
        $region14: #{ggnn_fused_batched.1} parent=11 // pred_check_branch
          %455 = sbr.rel (%p453) target = $region16
        $region15: #{ggnn_fused_batched.1} parent=11 // pred_region
          _
        $region16: #{ggnn_fused_batched.1} parent=11 // pred_fallthru
          _
        // Predicated region
        $region17: #{ggnn_fused_batched.1} parent=11 // pred_check
          %p456 = pneg %p155
        $region18: #{ggnn_fused_batched.1} parent=11 // pred_check_branch
          %458 = sbr.rel (%p456) target = $region20
        $region19: #{ggnn_fused_batched.1} parent=11 // pred_region
          _
        $region20: #{ggnn_fused_batched.1} parent=11 // pred_fallthru
          _
        // Predicated region
        $region21: #{ggnn_fused_batched.1} parent=11 // pred_check
          %p459 = pneg %p176
        $region22: #{ggnn_fused_batched.1} parent=11 // pred_check_branch
          %461 = sbr.rel (%p459) target = $region24
        $region23: #{ggnn_fused_batched.1} parent=11 // pred_region
          %463 = vsyncadd [#allocation7], 0
          %s464 = sshll.u32 %s5, 4
          %s465 = int_to_ptr.hbm [resolvable:$true] %s464
          %s466 = sshll.u32 [#allocation6], 4
          %s467 = int_to_ptr.vmem [resolvable:$true] %s466
          %472 = dma.hbm_to_vmem [thread:$0]  %s465, 64, %s467, [#allocation7], 16, 16, 1
        $region24: #{ggnn_fused_batched.1} parent=11 // pred_fallthru
          _
        // Predicated region
        $region25: #{ggnn_fused_batched.1} parent=11 // pred_check
          %p473 = pneg %p197
        $region26: #{ggnn_fused_batched.1} parent=11 // pred_check_branch
          %475 = sbr.rel (%p473) target = $region28
        $region27: #{ggnn_fused_batched.1} parent=11 // pred_region
          %477 = vsyncadd [#allocation7], 0
          %s478 = sshll.u32 %s6, 4
          %s479 = int_to_ptr.hbm [resolvable:$true] %s478
          %s480 = sshll.u32 [#allocation8], 4
          %s481 = int_to_ptr.vmem [resolvable:$true] %s480
          %486 = dma.hbm_to_vmem [thread:$0]  %s479, 64, %s481, [#allocation7], 16, 16, 1
        $region28: #{ggnn_fused_batched.1} parent=11 // pred_fallthru
          _
        // Predicated region
        $region29: #{ggnn_fused_batched.1} parent=11 // pred_check
          %p487 = pneg %p218
        $region30: #{ggnn_fused_batched.1} parent=11 // pred_check_branch
          %489 = sbr.rel (%p487) target = $region32
        $region31: #{ggnn_fused_batched.1} parent=11 // pred_region
          _
        $region32: #{ggnn_fused_batched.1} parent=11 // pred_fallthru
          _
        // Predicated region
        $region33: #{ggnn_fused_batched.1} parent=11 // pred_check
          %p490 = pneg %p239
        $region34: #{ggnn_fused_batched.1} parent=11 // pred_check_branch
          %492 = sbr.rel (%p490) target = $region36
        $region35: #{ggnn_fused_batched.1} parent=11 // pred_region
          _
        $region36: #{ggnn_fused_batched.1} parent=11 // pred_fallthru
          _
        // Predicated region
        $region37: #{ggnn_fused_batched.1} parent=11 // pred_check
          %p493 = pneg %p260
        $region38: #{ggnn_fused_batched.1} parent=11 // pred_check_branch
          %495 = sbr.rel (%p493) target = $region40
        $region39: #{ggnn_fused_batched.1} parent=11 // pred_region
          %497 = vsyncadd [#allocation10], 0
          %s498 = sshll.u32 %s9, 4
          %s499 = int_to_ptr.hbm [resolvable:$true] %s498
          %s500 = sshll.u32 [#allocation9], 4
          %s501 = int_to_ptr.vmem [resolvable:$true] %s500
          %506 = dma.hbm_to_vmem [thread:$0]  %s499, 384, %s501, [#allocation10], 128, 128, 8
        $region40: #{ggnn_fused_batched.1} parent=11 // pred_fallthru
          _
        // Predicated region
        $region41: #{ggnn_fused_batched.1} parent=11 // pred_check
          %p507 = pneg %p281
        $region42: #{ggnn_fused_batched.1} parent=11 // pred_check_branch
          %509 = sbr.rel (%p507) target = $region44
        $region43: #{ggnn_fused_batched.1} parent=11 // pred_region
          _
        $region44: #{ggnn_fused_batched.1} parent=11 // pred_fallthru
          _
        // Predicated region
        $region45: #{ggnn_fused_batched.1} parent=11 // pred_check
          %p510 = pneg %p302
        $region46: #{ggnn_fused_batched.1} parent=11 // pred_check_branch
          %512 = sbr.rel (%p510) target = $region48
        $region47: #{ggnn_fused_batched.1} parent=11 // pred_region
          _
        $region48: #{ggnn_fused_batched.1} parent=11 // pred_fallthru
          _
        // Predicated region
        $region49: #{ggnn_fused_batched.1} parent=11 // pred_check
          %p513 = pneg %p323
        $region50: #{ggnn_fused_batched.1} parent=11 // pred_check_branch
          %515 = sbr.rel (%p513) target = $region52
        $region51: #{ggnn_fused_batched.1} parent=11 // pred_region
          %517 = vsyncadd [#allocation10], 0
          %s519 = sshll.u32 %s12, 4
          %s520 = int_to_ptr.hbm [resolvable:$true] %s519
          %s521 = sshll.u32 [#allocation11], 4
          %s522 = int_to_ptr.vmem [resolvable:$true] %s521
          %524 = dma.hbm_to_vmem [thread:$0]  %s520, 16, %s522, [#allocation10]
        $region52: #{ggnn_fused_batched.1} parent=11 // pred_fallthru
          _
        // Predicated region
        $region53: #{ggnn_fused_batched.1} parent=11 // pred_check
          %p525 = pneg %p344
        $region54: #{ggnn_fused_batched.1} parent=11 // pred_check_branch
          %527 = sbr.rel (%p525) target = $region56
        $region55: #{ggnn_fused_batched.1} parent=11 // pred_region
          %529 = vsyncadd [#allocation13], 0
          %s531 = sshll.u32 %s13, 4
          %s532 = int_to_ptr.hbm [resolvable:$true] %s531
          %s533 = sshll.u32 [#allocation12], 4
          %s534 = int_to_ptr.vmem [resolvable:$true] %s533
          %536 = dma.hbm_to_vmem [thread:$0]  %s532, 16, %s534, [#allocation13]
        $region56: #{ggnn_fused_batched.1} parent=11 // pred_fallthru
          _
        // Predicated region
        $region57: #{ggnn_fused_batched.1} parent=11 // pred_check
          %p537 = pneg %p365
        $region58: #{ggnn_fused_batched.1} parent=11 // pred_check_branch
          %539 = sbr.rel (%p537) target = $region60
        $region59: #{ggnn_fused_batched.1} parent=11 // pred_region
          _
        $region60: #{ggnn_fused_batched.1} parent=11 // pred_fallthru
          _
        // Predicated region
        $region61: #{ggnn_fused_batched.1} parent=11 // pred_check
          %p540 = pneg %p386
        $region62: #{ggnn_fused_batched.1} parent=11 // pred_check_branch
          %542 = sbr.rel (%p540) target = $region64
        $region63: #{ggnn_fused_batched.1} parent=11 // pred_region
          _
        $region64: #{ggnn_fused_batched.1} parent=11 // pred_fallthru
          _
      $region12: #{ggnn_fused_batched.1} parent=5 // pred_fallthru
        _
      %p543 = scmp.lt.s32.totalorder %s35, 8
      // Predicated region
      $region65: #{ggnn_fused_batched.1} parent=5 // pred_check
        %p544 = pneg %p543
      $region66: #{ggnn_fused_batched.1} parent=5 // pred_check_branch
        %546 = sbr.rel (%p544) target = $region68
      $region67: #{ggnn_fused_batched.1} parent=5 // pred_region
        // Predicated region
        $region69: #{ggnn_fused_batched.1} parent=67 // pred_check
          %p547 = pneg %p55
        $region70: #{ggnn_fused_batched.1} parent=67 // pred_check_branch
          %549 = sbr.rel (%p547) target = $region72
        $region71: #{ggnn_fused_batched.1} parent=67 // pred_region
          %p550 = scmp.lt.s32.totalorder %s35, 7
          %s551 = scalar_select %p550, %s35, 7
          %s552 = smul.addr %s551, 2
          %s553 = smul.addr %s552, 8
          %s554 = scalar_lea.vmem %s0, %s553
        $region72: #{ggnn_fused_batched.1} parent=67 // pred_fallthru
          _
        // Predicated region
        $region73: #{ggnn_fused_batched.1} parent=67 // pred_check
          %p555 = pneg %p81
        $region74: #{ggnn_fused_batched.1} parent=67 // pred_check_branch
          %557 = sbr.rel (%p555) target = $region76
        $region75: #{ggnn_fused_batched.1} parent=67 // pred_region
          %p558 = scmp.lt.s32.totalorder %s35, 7
          %s559 = scalar_select %p558, %s35, 7
          %s560 = smul.addr %s559, 2
          %s561 = smul.addr %s560, 8
          %s562 = scalar_lea.vmem %s1, %s561
        $region76: #{ggnn_fused_batched.1} parent=67 // pred_fallthru
          _
        // Predicated region
        $region77: #{ggnn_fused_batched.1} parent=67 // pred_check
          %p563 = pneg %p107
        $region78: #{ggnn_fused_batched.1} parent=67 // pred_check_branch
          %565 = sbr.rel (%p563) target = $region80
        $region79: #{ggnn_fused_batched.1} parent=67 // pred_region
          %s566 = sand.u32 %s97, 1
          %s567 = scalar_lea.sflag [#allocation4], %s566
          %s568 = sand.u32 %s97, 1
          %s569 = smul.addr %s568, 64
          %s570 = scalar_lea.vmem [#allocation3], %s569
          %572 = vsyncadd %s567, 0
          %s573 = smul.addr %s35, 8
          %s574 = smul.addr %s573, 8
          %s575 = scalar_lea.hbm %s2, %s574
          %s576 = sshll.u32 %s575, 4
          %s577 = int_to_ptr.hbm [resolvable:$true] %s576
          %s578 = sshll.u32 %s570, 4
          %s579 = int_to_ptr.vmem [resolvable:$true] %s578
          %584 = dma.hbm_to_vmem [thread:$0]  %s577, 1024, %s579, %s567, 128, 128, 8
        $region80: #{ggnn_fused_batched.1} parent=67 // pred_fallthru
          _
      $region68: #{ggnn_fused_batched.1} parent=5 // pred_fallthru
        _
      %p585 = scmp.le.s32.totalorder 1, %s35
      %p586 = scmp.lt.s32.totalorder %s35, 9
      %p587 = pnand %p585, %p586
      %p588 = pneg %p587
      // Predicated region
      $region81: #{ggnn_fused_batched.1} parent=5 // pred_check
        _
      $region82: #{ggnn_fused_batched.1} parent=5 // pred_check_branch
        %590 = sbr.rel (%p587) target = $region84
      $region83: #{ggnn_fused_batched.1} parent=5 // pred_region
        %s591 = ssub.s32 %s35, 1
        %s592 = sand.u32 %s100, 1
        %s593 = scalar_lea.sflag [#allocation4], %s592
        %s594 = sand.u32 %s100, 1
        %s595 = smul.addr %s594, 64
        %s596 = scalar_lea.vmem [#allocation3], %s595
        // Predicated region
        $region85: #{ggnn_fused_batched.1} parent=83 // pred_check
          %p597 = pneg %p113
        $region86: #{ggnn_fused_batched.1} parent=83 // pred_check_branch
          %599 = sbr.rel (%p597) target = $region88
        $region87: #{ggnn_fused_batched.1} parent=83 // pred_region
          %601 = dma.done %s593, 1024
        $region88: #{ggnn_fused_batched.1} parent=83 // pred_fallthru
          _
        // Predicated region
        $region89: #{ggnn_fused_batched.1} parent=83 // pred_check
          %p602 = pneg %p176
        $region90: #{ggnn_fused_batched.1} parent=83 // pred_check_branch
          %604 = sbr.rel (%p602) target = $region92
        $region91: #{ggnn_fused_batched.1} parent=83 // pred_region
          %606 = dma.done [#allocation7], 64
        $region92: #{ggnn_fused_batched.1} parent=83 // pred_fallthru
          _
        // Predicated region
        $region93: #{ggnn_fused_batched.1} parent=83 // pred_check
          %p607 = pneg %p197
        $region94: #{ggnn_fused_batched.1} parent=83 // pred_check_branch
          %609 = sbr.rel (%p607) target = $region96
        $region95: #{ggnn_fused_batched.1} parent=83 // pred_region
          %611 = dma.done [#allocation7], 64
        $region96: #{ggnn_fused_batched.1} parent=83 // pred_fallthru
          _
        // Predicated region
        $region97: #{ggnn_fused_batched.1} parent=83 // pred_check
          %p612 = pneg %p260
        $region98: #{ggnn_fused_batched.1} parent=83 // pred_check_branch
          %614 = sbr.rel (%p612) target = $region100
        $region99: #{ggnn_fused_batched.1} parent=83 // pred_region
          %616 = dma.done [#allocation10], 384
        $region100: #{ggnn_fused_batched.1} parent=83 // pred_fallthru
          _
        // Predicated region
        $region101: #{ggnn_fused_batched.1} parent=83 // pred_check
          %p617 = pneg %p323
        $region102: #{ggnn_fused_batched.1} parent=83 // pred_check_branch
          %619 = sbr.rel (%p617) target = $region104
        $region103: #{ggnn_fused_batched.1} parent=83 // pred_region
          %621 = dma.done [#allocation10], 16
        $region104: #{ggnn_fused_batched.1} parent=83 // pred_fallthru
          _
        // Predicated region
        $region105: #{ggnn_fused_batched.1} parent=83 // pred_check
          %p622 = pneg %p344
        $region106: #{ggnn_fused_batched.1} parent=83 // pred_check_branch
          %624 = sbr.rel (%p622) target = $region108
        $region107: #{ggnn_fused_batched.1} parent=83 // pred_region
          %626 = dma.done [#allocation13], 16
        $region108: #{ggnn_fused_batched.1} parent=83 // pred_fallthru
          _
        %p627 = scmp.lt.s32.totalorder %s40, 7
        %s628 = scalar_select %p627, %s40, 7
        %s629 = smul.addr %s628, 2
        %s630 = smul.addr %s629, 8
        %s631 = scalar_lea.vmem %s0, %s630
        %p632 = pneg %p61
        %p633 = pneg %p58
        %p634 = scmp.lt.s32.totalorder %s40, 7
        %s635 = scalar_select %p634, %s40, 7
        %s636 = smul.addr %s635, 2
        %s637 = smul.addr %s636, 8
        %s638 = scalar_lea.vmem %s1, %s637
        %p639 = pneg %p87
        %p640 = pneg %p84
        %s641 = sand.u32 %s100, 1
        %s642 = scalar_lea.sflag [#allocation4], %s641
        %s643 = sand.u32 %s100, 1
        %s644 = smul.addr %s643, 64
        %s645 = scalar_lea.vmem [#allocation3], %s644
        %p646 = pneg %p113
        %p647 = pneg %p110
        %p648 = pneg %p134
        %p649 = pneg %p131
        %p650 = pneg %p155
        %p651 = pneg %p152
        %p652 = pneg %p176
        %p653 = pneg %p173
        %p654 = pneg %p197
        %p655 = pneg %p194
        %p656 = pneg %p218
        %p657 = pneg %p215
        %p658 = pneg %p239
        %p659 = pneg %p236
        %p660 = pneg %p260
        %p661 = pneg %p257
        %p662 = pneg %p281
        %p663 = pneg %p278
        %p664 = pneg %p302
        %p665 = pneg %p299
        %p666 = pneg %p323
        %p667 = pneg %p320
        %p668 = pneg %p344
        %p669 = pneg %p341
        %p670 = pneg %p365
        %p671 = pneg %p362
        %p672 = pneg %p386
        %p673 = pneg %p383
        %p674 = pneg %p412
        %p675 = pneg %p409
        %p676 = scmp.lt.s32.totalorder %s40, 7
        %s677 = scalar_select %p676, %s40, 7
        %s678 = smul.addr %s677, 2
        %s679 = smul.addr %s678, 8
        %s680 = scalar_lea.vmem %s16, %s679
        %p681 = pneg %p438
        %p682 = pneg %p435
        %s683 = sand.u32 %s425, 1
        %s684 = scalar_lea.sflag [#allocation5], %s683
        %s685 = sand.u32 %s425, 1
        %s686 = smul.addr %s685, 4
        %s687 = scalar_lea.vmem [#allocation14], %s686
        %p688 = scmp.lt.s32.totalorder %s40, 7
        %s689 = scalar_select %p688, %s40, 7
        %s690 = smul.addr %s689, 2
        %s691 = smul.addr %s690, 8
        %s692 = scalar_lea.vmem %s0, %s691
        %p693 = scmp.lt.s32.totalorder %s40, 7
        %s694 = scalar_select %p693, %s40, 7
        %s695 = smul.addr %s694, 2
        %s696 = smul.addr %s695, 8
        %s697 = scalar_lea.vmem %s1, %s696
        %p698 = scmp.lt.s32.totalorder %s40, 7
        %s699 = scalar_select %p698, %s40, 7
        %s700 = smul.addr %s699, 2
        %s701 = smul.addr %s700, 8
        %s702 = scalar_lea.vmem %s16, %s701
        %v703 = vld [vmem:[%s692] sm:$0xff]
        %v704 = vld [vmem:[%s692 + $0x8] sm:$0xff]
        %v705 = vlaneseq
        %v706 = vand.u32 %v705, 127
        %v707 = vld [vmem:[%s3] sm:$0xff]
        %v708 = vld [vmem:[%s4] sm:$0x1]
        %v710 = vperm.slane %v708, 0
        %vm712 = vcmask 64512
        %v714 = vsel %vm712, %v703, 0
        %v717 = vsel %vm712, %v704, 0
        %719 = vmatpush.msra.mxu0 0.0
        %720 = vmatpush.msra.mxu0 0.0
        %721 = vmatpush.msra.mxu0 0.0
        %722 = vmatpush.msra.mxu0 0.0
        %723 = vmatpush.msra.mxu0 0.0
        %724 = vmatpush.msra.mxu0 0.0
        %725 = vmatpush.msra.mxu0 0.0
        %726 = vmatpush.msra.mxu0 0.0
        %727 = vmatpush.msra.mxu0 0.0
        %728 = vmatpush.msra.mxu0 0.0
        %729 = vmatpush.msra.mxu0 0.0
        %730 = vmatpush.msra.mxu0 0.0
        %731 = vmatpush.msra.mxu0 0.0
        %732 = vmatpush.msra.mxu0 0.0
        %733 = vmatpush.msra.mxu0 0.0
        %734 = vmatpush.msra.mxu0 %v707
        %735 = vmatmul.f32.gmra.mxu0 %v714
        %v736 = vpop.f32.mrf.mxu0
        %v737 = vadd.f32 %v710, %v736
        %738 = vmatmul.f32.gmra.mxu0 %v717
        %v739 = vpop.f32.mrf.mxu0
        %v740 = vadd.f32 %v710, %v739
        %741 = vdwg.mxu0
        %s742 = scalar_lea.vmem %s3, 8
        %v743 = vld [vmem:[%s742] sm:$0xff]
        %s744 = scalar_lea.vmem %s4, 1
        %v745 = vld [vmem:[%s744] sm:$0x1]
        %v747 = vperm.slane %v745, 0
        %749 = vmatpush.msra.mxu0 0.0
        %750 = vmatpush.msra.mxu0 0.0
        %751 = vmatpush.msra.mxu0 0.0
        %752 = vmatpush.msra.mxu0 0.0
        %753 = vmatpush.msra.mxu0 0.0
        %754 = vmatpush.msra.mxu0 0.0
        %755 = vmatpush.msra.mxu0 0.0
        %756 = vmatpush.msra.mxu0 0.0
        %757 = vmatpush.msra.mxu0 0.0
        %758 = vmatpush.msra.mxu0 0.0
        %759 = vmatpush.msra.mxu0 0.0
        %760 = vmatpush.msra.mxu0 0.0
        %761 = vmatpush.msra.mxu0 0.0
        %762 = vmatpush.msra.mxu0 0.0
        %763 = vmatpush.msra.mxu0 0.0
        %764 = vmatpush.msra.mxu0 %v743
        %765 = vmatmul.f32.gmra.mxu0 %v714
        %v766 = vpop.f32.mrf.mxu0
        %v767 = vadd.f32 %v747, %v766
        %768 = vmatmul.f32.gmra.mxu0 %v717
        %v769 = vpop.f32.mrf.mxu0
        %v770 = vadd.f32 %v747, %v769
        %771 = vdwg.mxu0
        %v772 = vld [vmem:[#allocation6] sm:$0x1]
        %s773 = scalar_lea.vmem [#allocation6], 1
        %v774 = vld [vmem:[%s773] sm:$0x1]
        %v775 = vld [vmem:[#allocation8] sm:$0x1]
        %s776 = scalar_lea.vmem [#allocation8], 1
        %v777 = vld [vmem:[%s776] sm:$0x1]
        %v778 = vsel %vm712, %v737, 0.0
        %779 = vadd.xlane.f32.xlu0 %v778
        %v780 = vpop.xlane.xlu0 %779
        %v781 = vsel %vm712, %v740, 0.0
        %782 = vadd.xlane.f32.xlu0 %v781
        %v783 = vpop.xlane.xlu0 %782
        %v784 = vmul.f32 %v737, %v737
        %v785 = vmul.f32 %v740, %v740
        %v786 = vsel %vm712, %v784, 0.0
        %787 = vadd.xlane.f32.xlu0 %v786
        %v788 = vpop.xlane.xlu0 %787
        %v789 = vsel %vm712, %v785, 0.0
        %790 = vadd.xlane.f32.xlu0 %v789
        %v791 = vpop.xlane.xlu0 %790
        %v792 = vsel %vm712, %v767, 0.0
        %793 = vadd.xlane.f32.xlu0 %v792
        %v794 = vpop.xlane.xlu0 %793
        %v795 = vsel %vm712, %v770, 0.0
        %796 = vadd.xlane.f32.xlu0 %v795
        %v797 = vpop.xlane.xlu0 %796
        %v798 = vadd.f32 %v780, %v794
        %v799 = vadd.f32 %v783, %v797
        %v800 = vmul.f32 %v767, %v767
        %v801 = vmul.f32 %v770, %v770
        %v802 = vsel %vm712, %v800, 0.0
        %803 = vadd.xlane.f32.xlu0 %v802
        %v804 = vpop.xlane.xlu0 %803
        %v805 = vsel %vm712, %v801, 0.0
        %806 = vadd.xlane.f32.xlu0 %v805
        %v807 = vpop.xlane.xlu0 %806
        %v808 = vadd.f32 %v788, %v804
        %v809 = vadd.f32 %v791, %v807
        %vm810 = vcmask 7168
        %v811 = vsel %vm810, %v798, 0.0
        %v812 = vsel %vm810, %v799, 0.0
        %v813 = vadd.f32 %v811, %v812
        %814 = vadd.xlane.f32.xlu0 %v813
        %v815 = vpop.xlane.xlu0 %814
        %v816 = vrot.slane %v815, 4
        %v817 = vadd.f32 %v815, %v816
        %v818 = vrot.slane %v817, 2
        %v819 = vadd.f32 %v817, %v818
        %v820 = vrot.slane %v819, 1
        %v821 = vadd.f32 %v819, %v820
        %s822 = vtos %v821
        %v823 = vstv %s822
        %v824 = vsel %vm810, %v808, 0.0
        %v825 = vsel %vm810, %v809, 0.0
        %v826 = vadd.f32 %v824, %v825
        %827 = vadd.xlane.f32.xlu0 %v826
        %v828 = vpop.xlane.xlu0 %827
        %v829 = vrot.slane %v828, 4
        %v830 = vadd.f32 %v828, %v829
        %v831 = vrot.slane %v830, 2
        %v832 = vadd.f32 %v830, %v831
        %v833 = vrot.slane %v832, 1
        %v834 = vadd.f32 %v832, %v833
        %s835 = vtos %v834
        %v836 = vstv %s835
        %v837 = vrcp.pop 256.0
        %v838 = vmul.f32 256.0, %v837
        %v839 = vsub.f32 1.0, %v838
        %v840 = vmul.f32 %v837, %v839
        %v841 = vadd.f32 %v837, %v840
        %vm842 = vweird.f32 %v837
        %v843 = vsel %vm842, %v837, %v841
        %v844 = vmul.f32 %v823, %v843
        %v845 = vmul.f32 %v844, 256.0
        %v846 = vmul.f32 %v845, %v844
        %v847 = vsub.f32 %v836, %v846
        %v848 = vrcp.pop 255.0
        %v849 = vmul.f32 255.0, %v848
        %v850 = vsub.f32 1.0, %v849
        %v851 = vmul.f32 %v848, %v850
        %v852 = vadd.f32 %v848, %v851
        %vm853 = vweird.f32 %v848
        %v854 = vsel %vm853, %v848, %v852
        %v855 = vmul.f32 %v847, %v854
        %v856 = vmax.f32 %v855, 1e-30
        %v857 = vrsqrt.pop %v856
        %v858 = vmul.f32 %v857, %v856
        %v859 = vmul.f32 %v858, %v857
        %v860 = vmul.f32 0.5, %v859
        %v861 = vsub.f32 1.5, %v860
        %v862 = vmul.f32 %v857, %v861
        %v863 = vmul.f32 %v856, %v862
        %vm864 = vcmp.eq.f32.partialorder %v856, inf
        %v865 = vsel %vm864, %v856, %v863
        %vm866 = vcmp.eq.f32.partialorder %v856, 0.0
        %v867 = vand.u32 %v856, 2147483648
        %v868 = vsel %vm866, %v867, %v865
        %v869 = vrsqrt.pop %v856
        %v870 = vmul.f32 %v869, %v856
        %v871 = vmul.f32 %v870, %v869
        %v872 = vmul.f32 0.5, %v871
        %v873 = vsub.f32 1.5, %v872
        %v874 = vmul.f32 %v869, %v873
        %vm875 = vweird.f32 %v856
        %vm876 = vweird.f32 %v869
        %vm877 = vmor %vm875, %vm876
        %v878 = vsel %vm877, %v869, %v874
        %v879 = vlog2.pop %v868
        %v880 = vmul.f32 %v879, 0.6931472
        %v881 = vsub.f32 %v737, %v844
        %v882 = vsub.f32 %v740, %v844
        %v883 = vmul.f32 %v881, %v878
        %v884 = vmul.f32 %v882, %v878
        %v885 = vmul.f32 %v883, %v883
        %v886 = vmul.f32 %v884, %v884
        %v887 = vmul.f32 %v885, -0.5
        %v888 = vmul.f32 %v886, -0.5
        %v889 = vsub.f32 %v887, %v880
        %v890 = vsub.f32 %v888, %v880
        %v891 = vsub.f32 %v889, 0.9189385
        %v892 = vsub.f32 %v890, 0.9189385
        %v893 = vsub.f32 %v767, %v844
        %v894 = vsub.f32 %v770, %v844
        %v895 = vmul.f32 %v893, %v878
        %v896 = vmul.f32 %v894, %v878
        %v897 = vmul.f32 %v895, %v895
        %v898 = vmul.f32 %v896, %v896
        %v899 = vmul.f32 %v897, -0.5
        %v900 = vmul.f32 %v898, -0.5
        %v901 = vsub.f32 %v899, %v880
        %v902 = vsub.f32 %v900, %v880
        %v903 = vsub.f32 %v901, 0.9189385
        %v904 = vsub.f32 %v902, 0.9189385
        %v905 = vsel %vm712, %v891, -inf
        %v906 = vsel %vm712, %v892, -inf
        %v907 = vmax.f32 %v905, %v906
        %908 = vmax.xlane.f32.xlu0 %v907
        %v909 = vpop.xlane.xlu0 %908
        %v910 = vrot.slane %v909, 4
        %v911 = vmax.f32 %v909, %v910
        %v912 = vrot.slane %v911, 2
        %v913 = vmax.f32 %v911, %v912
        %v914 = vrot.slane %v913, 1
        %v915 = vmax.f32 %v913, %v914
        %s916 = vtos %v915
        %v917 = vstv %s916
        %v918 = vsel %vm712, %v903, -inf
        %v919 = vsel %vm712, %v904, -inf
        %v920 = vmax.f32 %v918, %v919
        %921 = vmax.xlane.f32.xlu0 %v920
        %v922 = vpop.xlane.xlu0 %921
        %v923 = vrot.slane %v922, 4
        %v924 = vmax.f32 %v922, %v923
        %v925 = vrot.slane %v924, 2
        %v926 = vmax.f32 %v924, %v925
        %v927 = vrot.slane %v926, 1
        %v928 = vmax.f32 %v926, %v927
        %s929 = vtos %v928
        %v930 = vstv %s929
        %v931 = vmax.f32 %v917, %v930
        %v932 = vsub.f32 %v891, %v931
        %v933 = vsub.f32 %v892, %v931
        %v934 = vmul.f32 %v932, 1.442695
        %v935 = vpow.pop %v934
        %v936 = vmul.f32 %v933, 1.442695
        %v937 = vpow.pop %v936
        %v938 = vsel %vm712, %v935, 0.0
        %v939 = vsel %vm712, %v937, 0.0
        %v940 = vadd.f32 %v938, %v939
        %941 = vadd.xlane.f32.xlu0 %v940
        %v942 = vpop.xlane.xlu0 %941
        %v943 = vrot.slane %v942, 4
        %v944 = vadd.f32 %v942, %v943
        %v945 = vrot.slane %v944, 2
        %v946 = vadd.f32 %v944, %v945
        %v947 = vrot.slane %v946, 1
        %v948 = vadd.f32 %v946, %v947
        %s949 = vtos %v948
        %v950 = vstv %s949
        %v951 = vsub.f32 %v903, %v931
        %v952 = vsub.f32 %v904, %v931
        %v953 = vmul.f32 %v951, 1.442695
        %v954 = vpow.pop %v953
        %v955 = vmul.f32 %v952, 1.442695
        %v956 = vpow.pop %v955
        %v957 = vsel %vm712, %v954, 0.0
        %v958 = vsel %vm712, %v956, 0.0
        %v959 = vadd.f32 %v957, %v958
        %960 = vadd.xlane.f32.xlu0 %v959
        %v961 = vpop.xlane.xlu0 %960
        %v962 = vrot.slane %v961, 4
        %v963 = vadd.f32 %v961, %v962
        %v964 = vrot.slane %v963, 2
        %v965 = vadd.f32 %v963, %v964
        %v966 = vrot.slane %v965, 1
        %v967 = vadd.f32 %v965, %v966
        %s968 = vtos %v967
        %v969 = vstv %s968
        %v970 = vadd.f32 %v950, %v969
        %v971 = vlog2.pop %v970
        %v972 = vmul.f32 %v971, 0.6931472
        %v973 = vadd.f32 %v931, %v972
        %v974 = vmul.f32 %v931, 1.442695
        %v975 = vpow.pop %v974
        %v976 = vmul.f32 %v975, %v970
        %v977 = vadd.f32 %v976, 1.0
        %v978 = vlog2.pop %v977
        %v979 = vmul.f32 %v978, 0.6931472
        %v980 = vsub.f32 0.0, %v931
        %v981 = vmul.f32 %v980, 1.442695
        %v982 = vpow.pop %v981
        %v983 = vadd.f32 %v982, %v970
        %v984 = vlog2.pop %v983
        %v985 = vmul.f32 %v984, 0.6931472
        %v986 = vadd.f32 %v931, %v985
        %vm987 = vcmp.lt.f32.partialorder %v931, 0.0
        %v988 = vsel %vm987, %v979, %v986
        %v989 = vsub.f32 %v988, %v973
        %v990 = vrcp.pop 16.0
        %v991 = vmul.f32 16.0, %v990
        %v992 = vsub.f32 1.0, %v991
        %v993 = vmul.f32 %v990, %v992
        %v994 = vadd.f32 %v990, %v993
        %vm995 = vweird.f32 %v990
        %v996 = vsel %vm995, %v990, %v994
        %v997 = vmul.f32 %v798, %v996
        %v998 = vmul.f32 %v799, %v996
        %v999 = vmul.f32 %v808, %v996
        %v1000 = vmul.f32 %v809, %v996
        %v1001 = vmul.f32 %v997, %v997
        %v1002 = vmul.f32 %v998, %v998
        %v1003 = vsub.f32 %v999, %v1001
        %v1004 = vsub.f32 %v1000, %v1002
        %v1005 = vmax.f32 %v1003, 0.0
        %v1006 = vmax.f32 %v1004, 0.0
        %v1007 = vmul.f32 %v989, %v989
        %v1008 = vmul.f32 %v1007, %v1005
        %v1009 = vmul.f32 %v1007, %v1006
        %v1010 = vadd.f32 %v1008, 1e-05
        %v1011 = vadd.f32 %v1009, 1e-05
        %v1012 = vrsqrt.pop %v1010
        %v1013 = vmul.f32 %v1012, %v1010
        %v1014 = vmul.f32 %v1013, %v1012
        %v1015 = vmul.f32 0.5, %v1014
        %v1016 = vsub.f32 1.5, %v1015
        %v1017 = vmul.f32 %v1012, %v1016
        %vm1018 = vweird.f32 %v1010
        %vm1019 = vweird.f32 %v1012
        %vm1020 = vmor %vm1018, %vm1019
        %v1021 = vsel %vm1020, %v1012, %v1017
        %v1022 = vrsqrt.pop %v1011
        %v1023 = vmul.f32 %v1022, %v1011
        %v1024 = vmul.f32 %v1023, %v1022
        %v1025 = vmul.f32 0.5, %v1024
        %v1026 = vsub.f32 1.5, %v1025
        %v1027 = vmul.f32 %v1022, %v1026
        %vm1028 = vweird.f32 %v1011
        %vm1029 = vweird.f32 %v1022
        %vm1030 = vmor %vm1028, %vm1029
        %v1031 = vsel %vm1030, %v1022, %v1027
        %v1032 = vmul.f32 %v989, %v997
        %v1033 = vmul.f32 %v989, %v998
        %v1034 = vmul.f32 %v989, %v737
        %v1035 = vmul.f32 %v989, %v740
        %v1036 = vsub.f32 %v1034, %v1032
        %v1037 = vsub.f32 %v1035, %v1033
        %v1038 = vmul.f32 %v1036, %v1021
        %v1039 = vmul.f32 %v1037, %v1031
        %v1041 = vperm.slane %v772, 0
        %v1043 = vmul.f32 %v1038, %v1041
        %v1044 = vmul.f32 %v1039, %v1041
        %v1046 = vperm.slane %v775, 0
        %v1048 = vadd.f32 %v1043, %v1046
        %v1049 = vadd.f32 %v1044, %v1046
        %v1050 = vmul.f32 %v989, %v767
        %v1051 = vmul.f32 %v989, %v770
        %v1052 = vsub.f32 %v1050, %v1032
        %v1053 = vsub.f32 %v1051, %v1033
        %v1054 = vmul.f32 %v1052, %v1021
        %v1055 = vmul.f32 %v1053, %v1031
        %v1057 = vperm.slane %v774, 0
        %v1059 = vmul.f32 %v1054, %v1057
        %v1060 = vmul.f32 %v1055, %v1057
        %v1062 = vperm.slane %v777, 0
        %v1064 = vadd.f32 %v1059, %v1062
        %v1065 = vadd.f32 %v1060, %v1062
        %vm1066 = vcmp.eq.s32.totalorder %v706, 0
        %v1067 = vsel %vm1066, %v844, 0.0
        %vm1068 = vcmp.eq.s32.totalorder %v706, 1
        %v1069 = vsel %vm1068, %v868, 0.0
        %v1070 = vadd.f32 %v1067, %v1069
        %vm1071 = vcmp.eq.s32.totalorder %v706, 2
        %v1072 = vsel %vm1071, 256.0, 0.0
        %v1073 = vadd.f32 %v1070, %v1072
        %vm1074 = vcmp.eq.s32.totalorder %v706, 3
        %v1075 = vsel %vm1074, %v988, 0.0
        %v1076 = vadd.f32 %v1073, %v1075
        %vm1077 = vcmp.eq.s32.totalorder %v706, 4
        %v1078 = vsel %vm1077, %v989, 0.0
        %v1079 = vadd.f32 %v1076, %v1078
        %s1080 = scalar_lea.vmem %s3, 16
        %v1081 = vld [vmem:[%s1080] sm:$0xff]
        %s1082 = scalar_lea.vmem %s4, 2
        %v1083 = vld [vmem:[%s1082] sm:$0x1]
        %v1085 = vperm.slane %v1083, 0
        %1087 = vmatpush.msra.mxu0 0.0
        %1088 = vmatpush.msra.mxu0 0.0
        %1089 = vmatpush.msra.mxu0 0.0
        %1090 = vmatpush.msra.mxu0 0.0
        %1091 = vmatpush.msra.mxu0 0.0
        %1092 = vmatpush.msra.mxu0 0.0
        %1093 = vmatpush.msra.mxu0 0.0
        %1094 = vmatpush.msra.mxu0 0.0
        %1095 = vmatpush.msra.mxu0 0.0
        %1096 = vmatpush.msra.mxu0 0.0
        %1097 = vmatpush.msra.mxu0 0.0
        %1098 = vmatpush.msra.mxu0 0.0
        %1099 = vmatpush.msra.mxu0 0.0
        %1100 = vmatpush.msra.mxu0 0.0
        %1101 = vmatpush.msra.mxu0 0.0
        %1102 = vmatpush.msra.mxu0 %v1081
        %1103 = vmatmul.f32.gmra.mxu0 %v714
        %v1104 = vpop.f32.mrf.mxu0
        %v1105 = vadd.f32 %v1085, %v1104
        %1106 = vmatmul.f32.gmra.mxu0 %v717
        %v1107 = vpop.f32.mrf.mxu0
        %v1108 = vadd.f32 %v1085, %v1107
        %1109 = vdwg.mxu0
        %s1110 = scalar_lea.vmem %s3, 24
        %v1111 = vld [vmem:[%s1110] sm:$0xff]
        %s1112 = scalar_lea.vmem %s4, 3
        %v1113 = vld [vmem:[%s1112] sm:$0x1]
        %v1115 = vperm.slane %v1113, 0
        %1117 = vmatpush.msra.mxu0 0.0
        %1118 = vmatpush.msra.mxu0 0.0
        %1119 = vmatpush.msra.mxu0 0.0
        %1120 = vmatpush.msra.mxu0 0.0
        %1121 = vmatpush.msra.mxu0 0.0
        %1122 = vmatpush.msra.mxu0 0.0
        %1123 = vmatpush.msra.mxu0 0.0
        %1124 = vmatpush.msra.mxu0 0.0
        %1125 = vmatpush.msra.mxu0 0.0
        %1126 = vmatpush.msra.mxu0 0.0
        %1127 = vmatpush.msra.mxu0 0.0
        %1128 = vmatpush.msra.mxu0 0.0
        %1129 = vmatpush.msra.mxu0 0.0
        %1130 = vmatpush.msra.mxu0 0.0
        %1131 = vmatpush.msra.mxu0 0.0
        %1132 = vmatpush.msra.mxu0 %v1111
        %1133 = vmatmul.f32.gmra.mxu0 %v714
        %v1134 = vpop.f32.mrf.mxu0
        %v1135 = vadd.f32 %v1115, %v1134
        %1136 = vmatmul.f32.gmra.mxu0 %v717
        %v1137 = vpop.f32.mrf.mxu0
        %v1138 = vadd.f32 %v1115, %v1137
        %1139 = vdwg.mxu0
        %s1140 = scalar_lea.vmem [#allocation6], 2
        %v1141 = vld [vmem:[%s1140] sm:$0x1]
        %s1142 = scalar_lea.vmem [#allocation6], 3
        %v1143 = vld [vmem:[%s1142] sm:$0x1]
        %s1144 = scalar_lea.vmem [#allocation8], 2
        %v1145 = vld [vmem:[%s1144] sm:$0x1]
        %s1146 = scalar_lea.vmem [#allocation8], 3
        %v1147 = vld [vmem:[%s1146] sm:$0x1]
        %v1148 = vsel %vm712, %v1105, 0.0
        %1149 = vadd.xlane.f32.xlu0 %v1148
        %v1150 = vpop.xlane.xlu0 %1149
        %v1151 = vsel %vm712, %v1108, 0.0
        %1152 = vadd.xlane.f32.xlu0 %v1151
        %v1153 = vpop.xlane.xlu0 %1152
        %v1154 = vmul.f32 %v1105, %v1105
        %v1155 = vmul.f32 %v1108, %v1108
        %v1156 = vsel %vm712, %v1154, 0.0
        %1157 = vadd.xlane.f32.xlu0 %v1156
        %v1158 = vpop.xlane.xlu0 %1157
        %v1159 = vsel %vm712, %v1155, 0.0
        %1160 = vadd.xlane.f32.xlu0 %v1159
        %v1161 = vpop.xlane.xlu0 %1160
        %v1162 = vsel %vm712, %v1135, 0.0
        %1163 = vadd.xlane.f32.xlu0 %v1162
        %v1164 = vpop.xlane.xlu0 %1163
        %v1165 = vsel %vm712, %v1138, 0.0
        %1166 = vadd.xlane.f32.xlu0 %v1165
        %v1167 = vpop.xlane.xlu0 %1166
        %v1168 = vadd.f32 %v1150, %v1164
        %v1169 = vadd.f32 %v1153, %v1167
        %v1170 = vmul.f32 %v1135, %v1135
        %v1171 = vmul.f32 %v1138, %v1138
        %v1172 = vsel %vm712, %v1170, 0.0
        %1173 = vadd.xlane.f32.xlu0 %v1172
        %v1174 = vpop.xlane.xlu0 %1173
        %v1175 = vsel %vm712, %v1171, 0.0
        %1176 = vadd.xlane.f32.xlu0 %v1175
        %v1177 = vpop.xlane.xlu0 %1176
        %v1178 = vadd.f32 %v1158, %v1174
        %v1179 = vadd.f32 %v1161, %v1177
        %v1180 = vsel %vm810, %v1168, 0.0
        %v1181 = vsel %vm810, %v1169, 0.0
        %v1182 = vadd.f32 %v1180, %v1181
        %1183 = vadd.xlane.f32.xlu0 %v1182
        %v1184 = vpop.xlane.xlu0 %1183
        %v1185 = vrot.slane %v1184, 4
        %v1186 = vadd.f32 %v1184, %v1185
        %v1187 = vrot.slane %v1186, 2
        %v1188 = vadd.f32 %v1186, %v1187
        %v1189 = vrot.slane %v1188, 1
        %v1190 = vadd.f32 %v1188, %v1189
        %s1191 = vtos %v1190
        %v1192 = vstv %s1191
        %v1193 = vsel %vm810, %v1178, 0.0
        %v1194 = vsel %vm810, %v1179, 0.0
        %v1195 = vadd.f32 %v1193, %v1194
        %1196 = vadd.xlane.f32.xlu0 %v1195
        %v1197 = vpop.xlane.xlu0 %1196
        %v1198 = vrot.slane %v1197, 4
        %v1199 = vadd.f32 %v1197, %v1198
        %v1200 = vrot.slane %v1199, 2
        %v1201 = vadd.f32 %v1199, %v1200
        %v1202 = vrot.slane %v1201, 1
        %v1203 = vadd.f32 %v1201, %v1202
        %s1204 = vtos %v1203
        %v1205 = vstv %s1204
        %v1206 = vmul.f32 %v1192, %v843
        %v1207 = vmul.f32 %v1206, 256.0
        %v1208 = vmul.f32 %v1207, %v1206
        %v1209 = vsub.f32 %v1205, %v1208
        %v1210 = vmul.f32 %v1209, %v854
        %v1211 = vmax.f32 %v1210, 1e-30
        %v1212 = vrsqrt.pop %v1211
        %v1213 = vmul.f32 %v1212, %v1211
        %v1214 = vmul.f32 %v1213, %v1212
        %v1215 = vmul.f32 0.5, %v1214
        %v1216 = vsub.f32 1.5, %v1215
        %v1217 = vmul.f32 %v1212, %v1216
        %v1218 = vmul.f32 %v1211, %v1217
        %vm1219 = vcmp.eq.f32.partialorder %v1211, inf
        %v1220 = vsel %vm1219, %v1211, %v1218
        %vm1221 = vcmp.eq.f32.partialorder %v1211, 0.0
        %v1222 = vand.u32 %v1211, 2147483648
        %v1223 = vsel %vm1221, %v1222, %v1220
        %v1224 = vrsqrt.pop %v1211
        %v1225 = vmul.f32 %v1224, %v1211
        %v1226 = vmul.f32 %v1225, %v1224
        %v1227 = vmul.f32 0.5, %v1226
        %v1228 = vsub.f32 1.5, %v1227
        %v1229 = vmul.f32 %v1224, %v1228
        %vm1230 = vweird.f32 %v1211
        %vm1231 = vweird.f32 %v1224
        %vm1232 = vmor %vm1230, %vm1231
        %v1233 = vsel %vm1232, %v1224, %v1229
        %v1234 = vlog2.pop %v1223
        %v1235 = vmul.f32 %v1234, 0.6931472
        %v1236 = vsub.f32 %v1105, %v1206
        %v1237 = vsub.f32 %v1108, %v1206
        %v1238 = vmul.f32 %v1236, %v1233
        %v1239 = vmul.f32 %v1237, %v1233
        %v1240 = vmul.f32 %v1238, %v1238
        %v1241 = vmul.f32 %v1239, %v1239
        %v1242 = vmul.f32 %v1240, -0.5
        %v1243 = vmul.f32 %v1241, -0.5
        %v1244 = vsub.f32 %v1242, %v1235
        %v1245 = vsub.f32 %v1243, %v1235
        %v1246 = vsub.f32 %v1244, 0.9189385
        %v1247 = vsub.f32 %v1245, 0.9189385
        %v1248 = vsub.f32 %v1135, %v1206
        %v1249 = vsub.f32 %v1138, %v1206
        %v1250 = vmul.f32 %v1248, %v1233
        %v1251 = vmul.f32 %v1249, %v1233
        %v1252 = vmul.f32 %v1250, %v1250
        %v1253 = vmul.f32 %v1251, %v1251
        %v1254 = vmul.f32 %v1252, -0.5
        %v1255 = vmul.f32 %v1253, -0.5
        %v1256 = vsub.f32 %v1254, %v1235
        %v1257 = vsub.f32 %v1255, %v1235
        %v1258 = vsub.f32 %v1256, 0.9189385
        %v1259 = vsub.f32 %v1257, 0.9189385
        %v1260 = vsel %vm712, %v1246, -inf
        %v1261 = vsel %vm712, %v1247, -inf
        %v1262 = vmax.f32 %v1260, %v1261
        %1263 = vmax.xlane.f32.xlu0 %v1262
        %v1264 = vpop.xlane.xlu0 %1263
        %v1265 = vrot.slane %v1264, 4
        %v1266 = vmax.f32 %v1264, %v1265
        %v1267 = vrot.slane %v1266, 2
        %v1268 = vmax.f32 %v1266, %v1267
        %v1269 = vrot.slane %v1268, 1
        %v1270 = vmax.f32 %v1268, %v1269
        %s1271 = vtos %v1270
        %v1272 = vstv %s1271
        %v1273 = vsel %vm712, %v1258, -inf
        %v1274 = vsel %vm712, %v1259, -inf
        %v1275 = vmax.f32 %v1273, %v1274
        %1276 = vmax.xlane.f32.xlu0 %v1275
        %v1277 = vpop.xlane.xlu0 %1276
        %v1278 = vrot.slane %v1277, 4
        %v1279 = vmax.f32 %v1277, %v1278
        %v1280 = vrot.slane %v1279, 2
        %v1281 = vmax.f32 %v1279, %v1280
        %v1282 = vrot.slane %v1281, 1
        %v1283 = vmax.f32 %v1281, %v1282
        %s1284 = vtos %v1283
        %v1285 = vstv %s1284
        %v1286 = vmax.f32 %v1272, %v1285
        %v1287 = vsub.f32 %v1246, %v1286
        %v1288 = vsub.f32 %v1247, %v1286
        %v1289 = vmul.f32 %v1287, 1.442695
        %v1290 = vpow.pop %v1289
        %v1291 = vmul.f32 %v1288, 1.442695
        %v1292 = vpow.pop %v1291
        %v1293 = vsel %vm712, %v1290, 0.0
        %v1294 = vsel %vm712, %v1292, 0.0
        %v1295 = vadd.f32 %v1293, %v1294
        %1296 = vadd.xlane.f32.xlu0 %v1295
        %v1297 = vpop.xlane.xlu0 %1296
        %v1298 = vrot.slane %v1297, 4
        %v1299 = vadd.f32 %v1297, %v1298
        %v1300 = vrot.slane %v1299, 2
        %v1301 = vadd.f32 %v1299, %v1300
        %v1302 = vrot.slane %v1301, 1
        %v1303 = vadd.f32 %v1301, %v1302
        %s1304 = vtos %v1303
        %v1305 = vstv %s1304
        %v1306 = vsub.f32 %v1258, %v1286
        %v1307 = vsub.f32 %v1259, %v1286
        %v1308 = vmul.f32 %v1306, 1.442695
        %v1309 = vpow.pop %v1308
        %v1310 = vmul.f32 %v1307, 1.442695
        %v1311 = vpow.pop %v1310
        %v1312 = vsel %vm712, %v1309, 0.0
        %v1313 = vsel %vm712, %v1311, 0.0
        %v1314 = vadd.f32 %v1312, %v1313
        %1315 = vadd.xlane.f32.xlu0 %v1314
        %v1316 = vpop.xlane.xlu0 %1315
        %v1317 = vrot.slane %v1316, 4
        %v1318 = vadd.f32 %v1316, %v1317
        %v1319 = vrot.slane %v1318, 2
        %v1320 = vadd.f32 %v1318, %v1319
        %v1321 = vrot.slane %v1320, 1
        %v1322 = vadd.f32 %v1320, %v1321
        %s1323 = vtos %v1322
        %v1324 = vstv %s1323
        %v1325 = vadd.f32 %v1305, %v1324
        %v1326 = vlog2.pop %v1325
        %v1327 = vmul.f32 %v1326, 0.6931472
        %v1328 = vadd.f32 %v1286, %v1327
        %v1329 = vmul.f32 %v1286, 1.442695
        %v1330 = vpow.pop %v1329
        %v1331 = vmul.f32 %v1330, %v1325
        %v1332 = vadd.f32 %v1331, 1.0
        %v1333 = vlog2.pop %v1332
        %v1334 = vmul.f32 %v1333, 0.6931472
        %v1335 = vsub.f32 0.0, %v1286
        %v1336 = vmul.f32 %v1335, 1.442695
        %v1337 = vpow.pop %v1336
        %v1338 = vadd.f32 %v1337, %v1325
        %v1339 = vlog2.pop %v1338
        %v1340 = vmul.f32 %v1339, 0.6931472
        %v1341 = vadd.f32 %v1286, %v1340
        %vm1342 = vcmp.lt.f32.partialorder %v1286, 0.0
        %v1343 = vsel %vm1342, %v1334, %v1341
        %v1344 = vsub.f32 %v1343, %v1328
        %v1345 = vmul.f32 %v1168, %v996
        %v1346 = vmul.f32 %v1169, %v996
        %v1347 = vmul.f32 %v1178, %v996
        %v1348 = vmul.f32 %v1179, %v996
        %v1349 = vmul.f32 %v1345, %v1345
        %v1350 = vmul.f32 %v1346, %v1346
        %v1351 = vsub.f32 %v1347, %v1349
        %v1352 = vsub.f32 %v1348, %v1350
        %v1353 = vmax.f32 %v1351, 0.0
        %v1354 = vmax.f32 %v1352, 0.0
        %v1355 = vmul.f32 %v1344, %v1344
        %v1356 = vmul.f32 %v1355, %v1353
        %v1357 = vmul.f32 %v1355, %v1354
        %v1358 = vadd.f32 %v1356, 1e-05
        %v1359 = vadd.f32 %v1357, 1e-05
        %v1360 = vrsqrt.pop %v1358
        %v1361 = vmul.f32 %v1360, %v1358
        %v1362 = vmul.f32 %v1361, %v1360
        %v1363 = vmul.f32 0.5, %v1362
        %v1364 = vsub.f32 1.5, %v1363
        %v1365 = vmul.f32 %v1360, %v1364
        %vm1366 = vweird.f32 %v1358
        %vm1367 = vweird.f32 %v1360
        %vm1368 = vmor %vm1366, %vm1367
        %v1369 = vsel %vm1368, %v1360, %v1365
        %v1370 = vrsqrt.pop %v1359
        %v1371 = vmul.f32 %v1370, %v1359
        %v1372 = vmul.f32 %v1371, %v1370
        %v1373 = vmul.f32 0.5, %v1372
        %v1374 = vsub.f32 1.5, %v1373
        %v1375 = vmul.f32 %v1370, %v1374
        %vm1376 = vweird.f32 %v1359
        %vm1377 = vweird.f32 %v1370
        %vm1378 = vmor %vm1376, %vm1377
        %v1379 = vsel %vm1378, %v1370, %v1375
        %v1380 = vmul.f32 %v1344, %v1345
        %v1381 = vmul.f32 %v1344, %v1346
        %v1382 = vmul.f32 %v1344, %v1105
        %v1383 = vmul.f32 %v1344, %v1108
        %v1384 = vsub.f32 %v1382, %v1380
        %v1385 = vsub.f32 %v1383, %v1381
        %v1386 = vmul.f32 %v1384, %v1369
        %v1387 = vmul.f32 %v1385, %v1379
        %v1389 = vperm.slane %v1141, 0
        %v1391 = vmul.f32 %v1386, %v1389
        %v1392 = vmul.f32 %v1387, %v1389
        %v1394 = vperm.slane %v1145, 0
        %v1396 = vadd.f32 %v1391, %v1394
        %v1397 = vadd.f32 %v1392, %v1394
        %v1398 = vmul.f32 %v1344, %v1135
        %v1399 = vmul.f32 %v1344, %v1138
        %v1400 = vsub.f32 %v1398, %v1380
        %v1401 = vsub.f32 %v1399, %v1381
        %v1402 = vmul.f32 %v1400, %v1369
        %v1403 = vmul.f32 %v1401, %v1379
        %v1405 = vperm.slane %v1143, 0
        %v1407 = vmul.f32 %v1402, %v1405
        %v1408 = vmul.f32 %v1403, %v1405
        %v1410 = vperm.slane %v1147, 0
        %v1412 = vadd.f32 %v1407, %v1410
        %v1413 = vadd.f32 %v1408, %v1410
        %v1414 = vsel %vm1066, %v1206, 0.0
        %v1415 = vsel %vm1068, %v1223, 0.0
        %v1416 = vadd.f32 %v1414, %v1415
        %v1417 = vadd.f32 %v1416, %v1072
        %v1418 = vsel %vm1074, %v1343, 0.0
        %v1419 = vadd.f32 %v1417, %v1418
        %v1420 = vsel %vm1077, %v1344, 0.0
        %v1421 = vadd.f32 %v1419, %v1420
        %v1422 = vld [vmem:[%s596] sm:$0xff]
        %v1423 = vld [vmem:[%s596 + $0x8] sm:$0xff]
        %s1424 = scalar_lea.vmem %s596, 16 [#allocation3]
        %v1425 = vld [vmem:[%s1424] sm:$0xff]
        %v1426 = vld [vmem:[%s1424 + $0x8] sm:$0xff]
        %vm1427 = vcmask 130048
        %v1429 = vsel %vm1427, %v1425, 0
        %v1432 = vsel %vm1427, %v1426, 0
        %1434 = vmatpush.msra.mxu0 0.0
        %1435 = vmatpush.msra.mxu0 0.0
        %1436 = vmatpush.msra.mxu0 0.0
        %1437 = vmatpush.msra.mxu0 0.0
        %1438 = vmatpush.msra.mxu0 0.0
        %1439 = vmatpush.msra.mxu0 0.0
        %1440 = vmatpush.msra.mxu0 0.0
        %1441 = vmatpush.msra.mxu0 0.0
        %1442 = vmatpush.msra.mxu0 0.0
        %1443 = vmatpush.msra.mxu0 0.0
        %1444 = vmatpush.msra.mxu0 0.0
        %1445 = vmatpush.msra.mxu0 0.0
        %1446 = vmatpush.msra.mxu0 0.0
        %1447 = vmatpush.msra.mxu0 0.0
        %1448 = vmatpush.msra.mxu0 %v1065
        %1449 = vmatpush.msra.mxu0 %v1064
        %1450 = vmatmul.f32.gmra.mxu0 %v1429
        %v1451 = vpop.f32.mrf.mxu0
        %v1452 = vadd.f32 0.0, %v1451
        %1453 = vmatmul.f32.gmra.mxu0 %v1432
        %v1454 = vpop.f32.mrf.mxu0
        %v1455 = vadd.f32 0.0, %v1454
        %1456 = vdwg.mxu0
        %v1458 = vsel %vm1427, %v1422, 0
        %v1461 = vsel %vm1427, %v1423, 0
        %1463 = vmatpush.msra.mxu0 0.0
        %1464 = vmatpush.msra.mxu0 0.0
        %1465 = vmatpush.msra.mxu0 0.0
        %1466 = vmatpush.msra.mxu0 0.0
        %1467 = vmatpush.msra.mxu0 0.0
        %1468 = vmatpush.msra.mxu0 0.0
        %1469 = vmatpush.msra.mxu0 0.0
        %1470 = vmatpush.msra.mxu0 0.0
        %1471 = vmatpush.msra.mxu0 0.0
        %1472 = vmatpush.msra.mxu0 0.0
        %1473 = vmatpush.msra.mxu0 0.0
        %1474 = vmatpush.msra.mxu0 0.0
        %1475 = vmatpush.msra.mxu0 0.0
        %1476 = vmatpush.msra.mxu0 0.0
        %1477 = vmatpush.msra.mxu0 %v1049
        %1478 = vmatpush.msra.mxu0 %v1048
        %1479 = vmatmul.f32.gmra.mxu0 %v1458
        %v1480 = vpop.f32.mrf.mxu0
        %v1481 = vadd.f32 %v1452, %v1480
        %1482 = vmatmul.f32.gmra.mxu0 %v1461
        %v1483 = vpop.f32.mrf.mxu0
        %v1484 = vadd.f32 %v1455, %v1483
        %1485 = vdwg.mxu0
        %s1486 = scalar_lea.vmem %s596, 32 [#allocation3]
        %v1487 = vld [vmem:[%s1486] sm:$0xff]
        %v1488 = vld [vmem:[%s1486 + $0x8] sm:$0xff]
        %s1489 = scalar_lea.vmem %s596, 48 [#allocation3]
        %v1490 = vld [vmem:[%s1489] sm:$0xff]
        %v1491 = vld [vmem:[%s1489 + $0x8] sm:$0xff]
        %v1493 = vsel %vm1427, %v1490, 0
        %v1496 = vsel %vm1427, %v1491, 0
        %1498 = vmatpush.msra.mxu0 0.0
        %1499 = vmatpush.msra.mxu0 0.0
        %1500 = vmatpush.msra.mxu0 0.0
        %1501 = vmatpush.msra.mxu0 0.0
        %1502 = vmatpush.msra.mxu0 0.0
        %1503 = vmatpush.msra.mxu0 0.0
        %1504 = vmatpush.msra.mxu0 0.0
        %1505 = vmatpush.msra.mxu0 0.0
        %1506 = vmatpush.msra.mxu0 0.0
        %1507 = vmatpush.msra.mxu0 0.0
        %1508 = vmatpush.msra.mxu0 0.0
        %1509 = vmatpush.msra.mxu0 0.0
        %1510 = vmatpush.msra.mxu0 0.0
        %1511 = vmatpush.msra.mxu0 0.0
        %1512 = vmatpush.msra.mxu0 %v1413
        %1513 = vmatpush.msra.mxu0 %v1412
        %1514 = vmatmul.f32.gmra.mxu0 %v1493
        %v1515 = vpop.f32.mrf.mxu0
        %v1516 = vadd.f32 0.0, %v1515
        %1517 = vmatmul.f32.gmra.mxu0 %v1496
        %v1518 = vpop.f32.mrf.mxu0
        %v1519 = vadd.f32 0.0, %v1518
        %1520 = vdwg.mxu0
        %v1522 = vsel %vm1427, %v1487, 0
        %v1525 = vsel %vm1427, %v1488, 0
        %1527 = vmatpush.msra.mxu0 0.0
        %1528 = vmatpush.msra.mxu0 0.0
        %1529 = vmatpush.msra.mxu0 0.0
        %1530 = vmatpush.msra.mxu0 0.0
        %1531 = vmatpush.msra.mxu0 0.0
        %1532 = vmatpush.msra.mxu0 0.0
        %1533 = vmatpush.msra.mxu0 0.0
        %1534 = vmatpush.msra.mxu0 0.0
        %1535 = vmatpush.msra.mxu0 0.0
        %1536 = vmatpush.msra.mxu0 0.0
        %1537 = vmatpush.msra.mxu0 0.0
        %1538 = vmatpush.msra.mxu0 0.0
        %1539 = vmatpush.msra.mxu0 0.0
        %1540 = vmatpush.msra.mxu0 0.0
        %1541 = vmatpush.msra.mxu0 %v1397
        %1542 = vmatpush.msra.mxu0 %v1396
        %1543 = vmatmul.f32.gmra.mxu0 %v1522
        %v1544 = vpop.f32.mrf.mxu0
        %v1545 = vadd.f32 %v1516, %v1544
        %1546 = vmatmul.f32.gmra.mxu0 %v1525
        %v1547 = vpop.f32.mrf.mxu0
        %v1548 = vadd.f32 %v1519, %v1547
        %1549 = vdwg.mxu0
        %v1550 = vld [vmem:[%s7] sm:$0xff]
        %s1551 = scalar_lea.vmem %s7, 8
        %v1552 = vld [vmem:[%s1551] sm:$0xff]
        %v1554 = vsel %vm712, %v1545, 0
        %v1557 = vsel %vm712, %v1548, 0
        %1559 = vmatpush.msra.mxu0 0.0
        %1560 = vmatpush.msra.mxu0 0.0
        %1561 = vmatpush.msra.mxu0 0.0
        %1562 = vmatpush.msra.mxu0 0.0
        %1563 = vmatpush.msra.mxu0 0.0
        %1564 = vmatpush.msra.mxu0 0.0
        %1565 = vmatpush.msra.mxu0 0.0
        %1566 = vmatpush.msra.mxu0 0.0
        %1567 = vmatpush.msra.mxu0 0.0
        %1568 = vmatpush.msra.mxu0 0.0
        %1569 = vmatpush.msra.mxu0 0.0
        %1570 = vmatpush.msra.mxu0 0.0
        %1571 = vmatpush.msra.mxu0 0.0
        %1572 = vmatpush.msra.mxu0 0.0
        %1573 = vmatpush.msra.mxu0 0.0
        %1574 = vmatpush.msra.mxu0 %v1552
        %1575 = vmatmul.f32.gmra.mxu0 %v1554
        %v1576 = vpop.f32.mrf.mxu0
        %v1577 = vadd.f32 0.0, %v1576
        %1578 = vmatmul.f32.gmra.mxu0 %v1557
        %v1579 = vpop.f32.mrf.mxu0
        %v1580 = vadd.f32 0.0, %v1579
        %1581 = vdwg.mxu0
        %v1583 = vsel %vm712, %v1481, 0
        %v1586 = vsel %vm712, %v1484, 0
        %1588 = vmatpush.msra.mxu0 0.0
        %1589 = vmatpush.msra.mxu0 0.0
        %1590 = vmatpush.msra.mxu0 0.0
        %1591 = vmatpush.msra.mxu0 0.0
        %1592 = vmatpush.msra.mxu0 0.0
        %1593 = vmatpush.msra.mxu0 0.0
        %1594 = vmatpush.msra.mxu0 0.0
        %1595 = vmatpush.msra.mxu0 0.0
        %1596 = vmatpush.msra.mxu0 0.0
        %1597 = vmatpush.msra.mxu0 0.0
        %1598 = vmatpush.msra.mxu0 0.0
        %1599 = vmatpush.msra.mxu0 0.0
        %1600 = vmatpush.msra.mxu0 0.0
        %1601 = vmatpush.msra.mxu0 0.0
        %1602 = vmatpush.msra.mxu0 0.0
        %1603 = vmatpush.msra.mxu0 %v1550
        %1604 = vmatmul.f32.gmra.mxu0 %v1583
        %v1605 = vpop.f32.mrf.mxu0
        %v1606 = vadd.f32 %v1577, %v1605
        %1607 = vmatmul.f32.gmra.mxu0 %v1586
        %v1608 = vpop.f32.mrf.mxu0
        %v1609 = vadd.f32 %v1580, %v1608
        %1610 = vdwg.mxu0
        %s1611 = scalar_lea.vmem %s7, 16
        %v1612 = vld [vmem:[%s1611] sm:$0xff]
        %1613 = vmatpush.msra.mxu0 0.0
        %1614 = vmatpush.msra.mxu0 0.0
        %1615 = vmatpush.msra.mxu0 0.0
        %1616 = vmatpush.msra.mxu0 0.0
        %1617 = vmatpush.msra.mxu0 0.0
        %1618 = vmatpush.msra.mxu0 0.0
        %1619 = vmatpush.msra.mxu0 0.0
        %1620 = vmatpush.msra.mxu0 0.0
        %1621 = vmatpush.msra.mxu0 0.0
        %1622 = vmatpush.msra.mxu0 0.0
        %1623 = vmatpush.msra.mxu0 0.0
        %1624 = vmatpush.msra.mxu0 0.0
        %1625 = vmatpush.msra.mxu0 0.0
        %1626 = vmatpush.msra.mxu0 0.0
        %1627 = vmatpush.msra.mxu0 0.0
        %1628 = vmatpush.msra.mxu0 %v1612
        %1629 = vmatmul.f32.gmra.mxu0 %v714
        %v1630 = vpop.f32.mrf.mxu0
        %v1631 = vadd.f32 0.0, %v1630
        %1632 = vmatmul.f32.gmra.mxu0 %v717
        %v1633 = vpop.f32.mrf.mxu0
        %v1634 = vadd.f32 0.0, %v1633
        %1635 = vdwg.mxu0
        %v1636 = vadd.f32 %v1606, %v1631
        %v1637 = vadd.f32 %v1609, %v1634
        %v1638 = vld [vmem:[%s8] sm:$0x1]
        %v1640 = vperm.slane %v1638, 0
        %v1642 = vadd.f32 %v1636, %v1640
        %v1643 = vadd.f32 %v1637, %v1640
        %v1644 = vxor.u32 %v1642, 2147483648
        %v1645 = vxor.u32 %v1643, 2147483648
        %v1646 = vmul.f32 %v1644, 1.442695
        %v1647 = vpow.pop %v1646
        %v1648 = vmul.f32 %v1645, 1.442695
        %v1649 = vpow.pop %v1648
        %v1650 = vadd.f32 %v1647, 1.0
        %v1651 = vadd.f32 %v1649, 1.0
        %v1652 = vrcp.pop %v1650
        %v1653 = vmul.f32 %v1650, %v1652
        %v1654 = vsub.f32 1.0, %v1653
        %v1655 = vmul.f32 %v1652, %v1654
        %v1656 = vadd.f32 %v1652, %v1655
        %vm1657 = vweird.f32 %v1650
        %vm1658 = vweird.f32 %v1652
        %vm1659 = vmor %vm1657, %vm1658
        %v1660 = vsel %vm1659, %v1652, %v1656
        %v1661 = vand.u32 2147483647, %v1650
        %vm1662 = vcmp.eq.f32.partialorder %v1661, 8.507059e+37
        %v1663 = vand.u32 %v1650, 2147483648
        %v1664 = vor.u32 1.1754944e-38, %v1663
        %v1665 = vsel %vm1662, %v1664, %v1660
        %v1666 = vmul.f32 1.0, %v1665
        %v1667 = vrcp.pop %v1651
        %v1668 = vmul.f32 %v1651, %v1667
        %v1669 = vsub.f32 1.0, %v1668
        %v1670 = vmul.f32 %v1667, %v1669
        %v1671 = vadd.f32 %v1667, %v1670
        %vm1672 = vweird.f32 %v1651
        %vm1673 = vweird.f32 %v1667
        %vm1674 = vmor %vm1672, %vm1673
        %v1675 = vsel %vm1674, %v1667, %v1671
        %v1676 = vand.u32 2147483647, %v1651
        %vm1677 = vcmp.eq.f32.partialorder %v1676, 8.507059e+37
        %v1678 = vand.u32 %v1651, 2147483648
        %v1679 = vor.u32 1.1754944e-38, %v1678
        %v1680 = vsel %vm1677, %v1679, %v1675
        %v1681 = vmul.f32 1.0, %v1680
        %v1682 = vld [vmem:[#allocation9] sm:$0xff]
        %s1683 = scalar_lea.vmem [#allocation9], 8
        %v1684 = vld [vmem:[%s1683] sm:$0xff]
        %1685 = vmatpush.msra.mxu0 0.0
        %1686 = vmatpush.msra.mxu0 0.0
        %1687 = vmatpush.msra.mxu0 0.0
        %1688 = vmatpush.msra.mxu0 0.0
        %1689 = vmatpush.msra.mxu0 0.0
        %1690 = vmatpush.msra.mxu0 0.0
        %1691 = vmatpush.msra.mxu0 0.0
        %1692 = vmatpush.msra.mxu0 0.0
        %1693 = vmatpush.msra.mxu0 0.0
        %1694 = vmatpush.msra.mxu0 0.0
        %1695 = vmatpush.msra.mxu0 0.0
        %1696 = vmatpush.msra.mxu0 0.0
        %1697 = vmatpush.msra.mxu0 0.0
        %1698 = vmatpush.msra.mxu0 0.0
        %1699 = vmatpush.msra.mxu0 0.0
        %1700 = vmatpush.msra.mxu0 %v1684
        %1701 = vmatmul.f32.gmra.mxu0 %v1554
        %v1702 = vpop.f32.mrf.mxu0
        %v1703 = vadd.f32 0.0, %v1702
        %1704 = vmatmul.f32.gmra.mxu0 %v1557
        %v1705 = vpop.f32.mrf.mxu0
        %v1706 = vadd.f32 0.0, %v1705
        %1707 = vdwg.mxu0
        %1708 = vmatpush.msra.mxu0 0.0
        %1709 = vmatpush.msra.mxu0 0.0
        %1710 = vmatpush.msra.mxu0 0.0
        %1711 = vmatpush.msra.mxu0 0.0
        %1712 = vmatpush.msra.mxu0 0.0
        %1713 = vmatpush.msra.mxu0 0.0
        %1714 = vmatpush.msra.mxu0 0.0
        %1715 = vmatpush.msra.mxu0 0.0
        %1716 = vmatpush.msra.mxu0 0.0
        %1717 = vmatpush.msra.mxu0 0.0
        %1718 = vmatpush.msra.mxu0 0.0
        %1719 = vmatpush.msra.mxu0 0.0
        %1720 = vmatpush.msra.mxu0 0.0
        %1721 = vmatpush.msra.mxu0 0.0
        %1722 = vmatpush.msra.mxu0 0.0
        %1723 = vmatpush.msra.mxu0 %v1682
        %1724 = vmatmul.f32.gmra.mxu0 %v1583
        %v1725 = vpop.f32.mrf.mxu0
        %v1726 = vadd.f32 %v1703, %v1725
        %1727 = vmatmul.f32.gmra.mxu0 %v1586
        %v1728 = vpop.f32.mrf.mxu0
        %v1729 = vadd.f32 %v1706, %v1728
        %1730 = vdwg.mxu0
        %1731 = vrot.lane.b32.xlu0 %v703, 8
        %v1732 = vpop.permute.xlu0 %1731
        %1733 = vrot.lane.b32.xlu0 %v704, 8
        %v1734 = vpop.permute.xlu0 %1733
        %v1737 = vmul.f32 %v1666, %v1732
        %v1738 = vmul.f32 %v1681, %v1734
        %s1739 = scalar_lea.vmem [#allocation9], 16
        %v1740 = vld [vmem:[%s1739] sm:$0xff]
        %1743 = vrot.lane.b32.xlu0 %v1737, 120
        %v1744 = vpop.permute.xlu0 %1743
        %1745 = vrot.lane.b32.xlu0 %v1738, 120
        %v1746 = vpop.permute.xlu0 %1745
        %v1747 = vsel %vm712, %v1744, 0
        %v1749 = vsel %vm712, %v1746, 0
        %1751 = vmatpush.msra.mxu0 0.0
        %1752 = vmatpush.msra.mxu0 0.0
        %1753 = vmatpush.msra.mxu0 0.0
        %1754 = vmatpush.msra.mxu0 0.0
        %1755 = vmatpush.msra.mxu0 0.0
        %1756 = vmatpush.msra.mxu0 0.0
        %1757 = vmatpush.msra.mxu0 0.0
        %1758 = vmatpush.msra.mxu0 0.0
        %1759 = vmatpush.msra.mxu0 0.0
        %1760 = vmatpush.msra.mxu0 0.0
        %1761 = vmatpush.msra.mxu0 0.0
        %1762 = vmatpush.msra.mxu0 0.0
        %1763 = vmatpush.msra.mxu0 0.0
        %1764 = vmatpush.msra.mxu0 0.0
        %1765 = vmatpush.msra.mxu0 0.0
        %1766 = vmatpush.msra.mxu0 %v1740
        %1767 = vmatmul.f32.gmra.mxu0 %v1747
        %v1768 = vpop.f32.mrf.mxu0
        %v1769 = vadd.f32 0.0, %v1768
        %1770 = vmatmul.f32.gmra.mxu0 %v1749
        %v1771 = vpop.f32.mrf.mxu0
        %v1772 = vadd.f32 0.0, %v1771
        %1773 = vdwg.mxu0
        %v1774 = vadd.f32 %v1726, %v1769
        %v1775 = vadd.f32 %v1729, %v1772
        %v1776 = vld [vmem:[%s10] sm:$0x1]
        %v1778 = vperm.slane %v1776, 0
        %v1780 = vadd.f32 %v1774, %v1778
        %v1781 = vadd.f32 %v1775, %v1778
        %v1782 = vtanh.pop %v1780
        %v1783 = vtanh.pop %v1781
        %v1784 = vsub.f32 1.0, %v1666
        %v1785 = vsub.f32 1.0, %v1681
        %v1786 = vmul.f32 %v1784, %v703
        %v1787 = vmul.f32 %v1785, %v704
        %v1788 = vmul.f32 %v1666, %v1782
        %v1789 = vmul.f32 %v1681, %v1783
        %v1790 = vadd.f32 %v1786, %v1788
        %v1791 = vadd.f32 %v1787, %v1789
        %v1793 = vsel %vm712, %v1790, 0
        %v1796 = vsel %vm712, %v1791, 0
        %1798 = vmatpush.msra.mxu0 0.0
        %1799 = vmatpush.msra.mxu0 0.0
        %1800 = vmatpush.msra.mxu0 0.0
        %1801 = vmatpush.msra.mxu0 0.0
        %1802 = vmatpush.msra.mxu0 0.0
        %1803 = vmatpush.msra.mxu0 0.0
        %1804 = vmatpush.msra.mxu0 0.0
        %1805 = vmatpush.msra.mxu0 0.0
        %1806 = vmatpush.msra.mxu0 0.0
        %1807 = vmatpush.msra.mxu0 0.0
        %1808 = vmatpush.msra.mxu0 0.0
        %1809 = vmatpush.msra.mxu0 0.0
        %1810 = vmatpush.msra.mxu0 0.0
        %1811 = vmatpush.msra.mxu0 0.0
        %1812 = vmatpush.msra.mxu0 0.0
        %1813 = vmatpush.msra.mxu0 %v707
        %1814 = vmatmul.f32.gmra.mxu0 %v1793
        %v1815 = vpop.f32.mrf.mxu0
        %v1816 = vadd.f32 %v710, %v1815
        %1817 = vmatmul.f32.gmra.mxu0 %v1796
        %v1818 = vpop.f32.mrf.mxu0
        %v1819 = vadd.f32 %v710, %v1818
        %1820 = vdwg.mxu0
        %1821 = vmatpush.msra.mxu0 0.0
        %1822 = vmatpush.msra.mxu0 0.0
        %1823 = vmatpush.msra.mxu0 0.0
        %1824 = vmatpush.msra.mxu0 0.0
        %1825 = vmatpush.msra.mxu0 0.0
        %1826 = vmatpush.msra.mxu0 0.0
        %1827 = vmatpush.msra.mxu0 0.0
        %1828 = vmatpush.msra.mxu0 0.0
        %1829 = vmatpush.msra.mxu0 0.0
        %1830 = vmatpush.msra.mxu0 0.0
        %1831 = vmatpush.msra.mxu0 0.0
        %1832 = vmatpush.msra.mxu0 0.0
        %1833 = vmatpush.msra.mxu0 0.0
        %1834 = vmatpush.msra.mxu0 0.0
        %1835 = vmatpush.msra.mxu0 0.0
        %1836 = vmatpush.msra.mxu0 %v743
        %1837 = vmatmul.f32.gmra.mxu0 %v1793
        %v1838 = vpop.f32.mrf.mxu0
        %v1839 = vadd.f32 %v747, %v1838
        %1840 = vmatmul.f32.gmra.mxu0 %v1796
        %v1841 = vpop.f32.mrf.mxu0
        %v1842 = vadd.f32 %v747, %v1841
        %1843 = vdwg.mxu0
        %v1844 = vsel %vm712, %v1816, 0.0
        %1845 = vadd.xlane.f32.xlu0 %v1844
        %v1846 = vpop.xlane.xlu0 %1845
        %v1847 = vsel %vm712, %v1819, 0.0
        %1848 = vadd.xlane.f32.xlu0 %v1847
        %v1849 = vpop.xlane.xlu0 %1848
        %v1850 = vmul.f32 %v1816, %v1816
        %v1851 = vmul.f32 %v1819, %v1819
        %v1852 = vsel %vm712, %v1850, 0.0
        %1853 = vadd.xlane.f32.xlu0 %v1852
        %v1854 = vpop.xlane.xlu0 %1853
        %v1855 = vsel %vm712, %v1851, 0.0
        %1856 = vadd.xlane.f32.xlu0 %v1855
        %v1857 = vpop.xlane.xlu0 %1856
        %v1858 = vsel %vm712, %v1839, 0.0
        %1859 = vadd.xlane.f32.xlu0 %v1858
        %v1860 = vpop.xlane.xlu0 %1859
        %v1861 = vsel %vm712, %v1842, 0.0
        %1862 = vadd.xlane.f32.xlu0 %v1861
        %v1863 = vpop.xlane.xlu0 %1862
        %v1864 = vadd.f32 %v1846, %v1860
        %v1865 = vadd.f32 %v1849, %v1863
        %v1866 = vmul.f32 %v1839, %v1839
        %v1867 = vmul.f32 %v1842, %v1842
        %v1868 = vsel %vm712, %v1866, 0.0
        %1869 = vadd.xlane.f32.xlu0 %v1868
        %v1870 = vpop.xlane.xlu0 %1869
        %v1871 = vsel %vm712, %v1867, 0.0
        %1872 = vadd.xlane.f32.xlu0 %v1871
        %v1873 = vpop.xlane.xlu0 %1872
        %v1874 = vadd.f32 %v1854, %v1870
        %v1875 = vadd.f32 %v1857, %v1873
        %v1876 = vsel %vm810, %v1864, 0.0
        %v1877 = vsel %vm810, %v1865, 0.0
        %v1878 = vadd.f32 %v1876, %v1877
        %1879 = vadd.xlane.f32.xlu0 %v1878
        %v1880 = vpop.xlane.xlu0 %1879
        %v1881 = vrot.slane %v1880, 4
        %v1882 = vadd.f32 %v1880, %v1881
        %v1883 = vrot.slane %v1882, 2
        %v1884 = vadd.f32 %v1882, %v1883
        %v1885 = vrot.slane %v1884, 1
        %v1886 = vadd.f32 %v1884, %v1885
        %s1887 = vtos %v1886
        %v1888 = vstv %s1887
        %v1889 = vsel %vm810, %v1874, 0.0
        %v1890 = vsel %vm810, %v1875, 0.0
        %v1891 = vadd.f32 %v1889, %v1890
        %1892 = vadd.xlane.f32.xlu0 %v1891
        %v1893 = vpop.xlane.xlu0 %1892
        %v1894 = vrot.slane %v1893, 4
        %v1895 = vadd.f32 %v1893, %v1894
        %v1896 = vrot.slane %v1895, 2
        %v1897 = vadd.f32 %v1895, %v1896
        %v1898 = vrot.slane %v1897, 1
        %v1899 = vadd.f32 %v1897, %v1898
        %s1900 = vtos %v1899
        %v1901 = vstv %s1900
        %v1902 = vmul.f32 %v1888, %v843
        %v1903 = vmul.f32 %v1902, 256.0
        %v1904 = vmul.f32 %v1903, %v1902
        %v1905 = vsub.f32 %v1901, %v1904
        %v1906 = vmul.f32 %v1905, %v854
        %v1907 = vmax.f32 %v1906, 1e-30
        %v1908 = vrsqrt.pop %v1907
        %v1909 = vmul.f32 %v1908, %v1907
        %v1910 = vmul.f32 %v1909, %v1908
        %v1911 = vmul.f32 0.5, %v1910
        %v1912 = vsub.f32 1.5, %v1911
        %v1913 = vmul.f32 %v1908, %v1912
        %v1914 = vmul.f32 %v1907, %v1913
        %vm1915 = vcmp.eq.f32.partialorder %v1907, inf
        %v1916 = vsel %vm1915, %v1907, %v1914
        %vm1917 = vcmp.eq.f32.partialorder %v1907, 0.0
        %v1918 = vand.u32 %v1907, 2147483648
        %v1919 = vsel %vm1917, %v1918, %v1916
        %v1920 = vrsqrt.pop %v1907
        %v1921 = vmul.f32 %v1920, %v1907
        %v1922 = vmul.f32 %v1921, %v1920
        %v1923 = vmul.f32 0.5, %v1922
        %v1924 = vsub.f32 1.5, %v1923
        %v1925 = vmul.f32 %v1920, %v1924
        %vm1926 = vweird.f32 %v1907
        %vm1927 = vweird.f32 %v1920
        %vm1928 = vmor %vm1926, %vm1927
        %v1929 = vsel %vm1928, %v1920, %v1925
        %v1930 = vlog2.pop %v1919
        %v1931 = vmul.f32 %v1930, 0.6931472
        %v1932 = vsub.f32 %v1816, %v1902
        %v1933 = vsub.f32 %v1819, %v1902
        %v1934 = vmul.f32 %v1932, %v1929
        %v1935 = vmul.f32 %v1933, %v1929
        %v1936 = vmul.f32 %v1934, %v1934
        %v1937 = vmul.f32 %v1935, %v1935
        %v1938 = vmul.f32 %v1936, -0.5
        %v1939 = vmul.f32 %v1937, -0.5
        %v1940 = vsub.f32 %v1938, %v1931
        %v1941 = vsub.f32 %v1939, %v1931
        %v1942 = vsub.f32 %v1940, 0.9189385
        %v1943 = vsub.f32 %v1941, 0.9189385
        %v1944 = vsub.f32 %v1839, %v1902
        %v1945 = vsub.f32 %v1842, %v1902
        %v1946 = vmul.f32 %v1944, %v1929
        %v1947 = vmul.f32 %v1945, %v1929
        %v1948 = vmul.f32 %v1946, %v1946
        %v1949 = vmul.f32 %v1947, %v1947
        %v1950 = vmul.f32 %v1948, -0.5
        %v1951 = vmul.f32 %v1949, -0.5
        %v1952 = vsub.f32 %v1950, %v1931
        %v1953 = vsub.f32 %v1951, %v1931
        %v1954 = vsub.f32 %v1952, 0.9189385
        %v1955 = vsub.f32 %v1953, 0.9189385
        %v1956 = vsel %vm712, %v1942, -inf
        %v1957 = vsel %vm712, %v1943, -inf
        %v1958 = vmax.f32 %v1956, %v1957
        %1959 = vmax.xlane.f32.xlu0 %v1958
        %v1960 = vpop.xlane.xlu0 %1959
        %v1961 = vrot.slane %v1960, 4
        %v1962 = vmax.f32 %v1960, %v1961
        %v1963 = vrot.slane %v1962, 2
        %v1964 = vmax.f32 %v1962, %v1963
        %v1965 = vrot.slane %v1964, 1
        %v1966 = vmax.f32 %v1964, %v1965
        %s1967 = vtos %v1966
        %v1968 = vstv %s1967
        %v1969 = vsel %vm712, %v1954, -inf
        %v1970 = vsel %vm712, %v1955, -inf
        %v1971 = vmax.f32 %v1969, %v1970
        %1972 = vmax.xlane.f32.xlu0 %v1971
        %v1973 = vpop.xlane.xlu0 %1972
        %v1974 = vrot.slane %v1973, 4
        %v1975 = vmax.f32 %v1973, %v1974
        %v1976 = vrot.slane %v1975, 2
        %v1977 = vmax.f32 %v1975, %v1976
        %v1978 = vrot.slane %v1977, 1
        %v1979 = vmax.f32 %v1977, %v1978
        %s1980 = vtos %v1979
        %v1981 = vstv %s1980
        %v1982 = vmax.f32 %v1968, %v1981
        %v1983 = vsub.f32 %v1942, %v1982
        %v1984 = vsub.f32 %v1943, %v1982
        %v1985 = vmul.f32 %v1983, 1.442695
        %v1986 = vpow.pop %v1985
        %v1987 = vmul.f32 %v1984, 1.442695
        %v1988 = vpow.pop %v1987
        %v1989 = vsel %vm712, %v1986, 0.0
        %v1990 = vsel %vm712, %v1988, 0.0
        %v1991 = vadd.f32 %v1989, %v1990
        %1992 = vadd.xlane.f32.xlu0 %v1991
        %v1993 = vpop.xlane.xlu0 %1992
        %v1994 = vrot.slane %v1993, 4
        %v1995 = vadd.f32 %v1993, %v1994
        %v1996 = vrot.slane %v1995, 2
        %v1997 = vadd.f32 %v1995, %v1996
        %v1998 = vrot.slane %v1997, 1
        %v1999 = vadd.f32 %v1997, %v1998
        %s2000 = vtos %v1999
        %v2001 = vstv %s2000
        %v2002 = vsub.f32 %v1954, %v1982
        %v2003 = vsub.f32 %v1955, %v1982
        %v2004 = vmul.f32 %v2002, 1.442695
        %v2005 = vpow.pop %v2004
        %v2006 = vmul.f32 %v2003, 1.442695
        %v2007 = vpow.pop %v2006
        %v2008 = vsel %vm712, %v2005, 0.0
        %v2009 = vsel %vm712, %v2007, 0.0
        %v2010 = vadd.f32 %v2008, %v2009
        %2011 = vadd.xlane.f32.xlu0 %v2010
        %v2012 = vpop.xlane.xlu0 %2011
        %v2013 = vrot.slane %v2012, 4
        %v2014 = vadd.f32 %v2012, %v2013
        %v2015 = vrot.slane %v2014, 2
        %v2016 = vadd.f32 %v2014, %v2015
        %v2017 = vrot.slane %v2016, 1
        %v2018 = vadd.f32 %v2016, %v2017
        %s2019 = vtos %v2018
        %v2020 = vstv %s2019
        %v2021 = vadd.f32 %v2001, %v2020
        %v2022 = vlog2.pop %v2021
        %v2023 = vmul.f32 %v2022, 0.6931472
        %v2024 = vadd.f32 %v1982, %v2023
        %v2025 = vmul.f32 %v1982, 1.442695
        %v2026 = vpow.pop %v2025
        %v2027 = vmul.f32 %v2026, %v2021
        %v2028 = vadd.f32 %v2027, 1.0
        %v2029 = vlog2.pop %v2028
        %v2030 = vmul.f32 %v2029, 0.6931472
        %v2031 = vsub.f32 0.0, %v1982
        %v2032 = vmul.f32 %v2031, 1.442695
        %v2033 = vpow.pop %v2032
        %v2034 = vadd.f32 %v2033, %v2021
        %v2035 = vlog2.pop %v2034
        %v2036 = vmul.f32 %v2035, 0.6931472
        %v2037 = vadd.f32 %v1982, %v2036
        %vm2038 = vcmp.lt.f32.partialorder %v1982, 0.0
        %v2039 = vsel %vm2038, %v2030, %v2037
        %v2040 = vsub.f32 %v2039, %v2024
        %v2041 = vmul.f32 %v1864, %v996
        %v2042 = vmul.f32 %v1865, %v996
        %v2043 = vmul.f32 %v1874, %v996
        %v2044 = vmul.f32 %v1875, %v996
        %v2045 = vmul.f32 %v2041, %v2041
        %v2046 = vmul.f32 %v2042, %v2042
        %v2047 = vsub.f32 %v2043, %v2045
        %v2048 = vsub.f32 %v2044, %v2046
        %v2049 = vmax.f32 %v2047, 0.0
        %v2050 = vmax.f32 %v2048, 0.0
        %v2051 = vmul.f32 %v2040, %v2040
        %v2052 = vmul.f32 %v2051, %v2049
        %v2053 = vmul.f32 %v2051, %v2050
        %v2054 = vadd.f32 %v2052, 1e-05
        %v2055 = vadd.f32 %v2053, 1e-05
        %v2056 = vrsqrt.pop %v2054
        %v2057 = vmul.f32 %v2056, %v2054
        %v2058 = vmul.f32 %v2057, %v2056
        %v2059 = vmul.f32 0.5, %v2058
        %v2060 = vsub.f32 1.5, %v2059
        %v2061 = vmul.f32 %v2056, %v2060
        %vm2062 = vweird.f32 %v2054
        %vm2063 = vweird.f32 %v2056
        %vm2064 = vmor %vm2062, %vm2063
        %v2065 = vsel %vm2064, %v2056, %v2061
        %v2066 = vrsqrt.pop %v2055
        %v2067 = vmul.f32 %v2066, %v2055
        %v2068 = vmul.f32 %v2067, %v2066
        %v2069 = vmul.f32 0.5, %v2068
        %v2070 = vsub.f32 1.5, %v2069
        %v2071 = vmul.f32 %v2066, %v2070
        %vm2072 = vweird.f32 %v2055
        %vm2073 = vweird.f32 %v2066
        %vm2074 = vmor %vm2072, %vm2073
        %v2075 = vsel %vm2074, %v2066, %v2071
        %v2076 = vmul.f32 %v2040, %v2041
        %v2077 = vmul.f32 %v2040, %v2042
        %v2078 = vmul.f32 %v2040, %v1816
        %v2079 = vmul.f32 %v2040, %v1819
        %v2080 = vsub.f32 %v2078, %v2076
        %v2081 = vsub.f32 %v2079, %v2077
        %v2082 = vmul.f32 %v2080, %v2065
        %v2083 = vmul.f32 %v2081, %v2075
        %v2084 = vmul.f32 %v2082, %v1041
        %v2085 = vmul.f32 %v2083, %v1041
        %v2086 = vadd.f32 %v2084, %v1046
        %v2087 = vadd.f32 %v2085, %v1046
        %v2088 = vmul.f32 %v2040, %v1839
        %v2089 = vmul.f32 %v2040, %v1842
        %v2090 = vsub.f32 %v2088, %v2076
        %v2091 = vsub.f32 %v2089, %v2077
        %v2092 = vmul.f32 %v2090, %v2065
        %v2093 = vmul.f32 %v2091, %v2075
        %v2094 = vmul.f32 %v2092, %v1057
        %v2095 = vmul.f32 %v2093, %v1057
        %v2096 = vadd.f32 %v2094, %v1062
        %v2097 = vadd.f32 %v2095, %v1062
        %v2098 = vsel %vm1066, %v1902, 0.0
        %v2099 = vsel %vm1068, %v1919, 0.0
        %v2100 = vadd.f32 %v2098, %v2099
        %v2101 = vadd.f32 %v2100, %v1072
        %v2102 = vsel %vm1074, %v2039, 0.0
        %v2103 = vadd.f32 %v2101, %v2102
        %v2104 = vsel %vm1077, %v2040, 0.0
        %v2105 = vadd.f32 %v2103, %v2104
        %2106 = vmatpush.msra.mxu0 0.0
        %2107 = vmatpush.msra.mxu0 0.0
        %2108 = vmatpush.msra.mxu0 0.0
        %2109 = vmatpush.msra.mxu0 0.0
        %2110 = vmatpush.msra.mxu0 0.0
        %2111 = vmatpush.msra.mxu0 0.0
        %2112 = vmatpush.msra.mxu0 0.0
        %2113 = vmatpush.msra.mxu0 0.0
        %2114 = vmatpush.msra.mxu0 0.0
        %2115 = vmatpush.msra.mxu0 0.0
        %2116 = vmatpush.msra.mxu0 0.0
        %2117 = vmatpush.msra.mxu0 0.0
        %2118 = vmatpush.msra.mxu0 0.0
        %2119 = vmatpush.msra.mxu0 0.0
        %2120 = vmatpush.msra.mxu0 0.0
        %2121 = vmatpush.msra.mxu0 %v1081
        %2122 = vmatmul.f32.gmra.mxu0 %v1793
        %v2123 = vpop.f32.mrf.mxu0
        %v2124 = vadd.f32 %v1085, %v2123
        %2125 = vmatmul.f32.gmra.mxu0 %v1796
        %v2126 = vpop.f32.mrf.mxu0
        %v2127 = vadd.f32 %v1085, %v2126
        %2128 = vdwg.mxu0
        %2129 = vmatpush.msra.mxu0 0.0
        %2130 = vmatpush.msra.mxu0 0.0
        %2131 = vmatpush.msra.mxu0 0.0
        %2132 = vmatpush.msra.mxu0 0.0
        %2133 = vmatpush.msra.mxu0 0.0
        %2134 = vmatpush.msra.mxu0 0.0
        %2135 = vmatpush.msra.mxu0 0.0
        %2136 = vmatpush.msra.mxu0 0.0
        %2137 = vmatpush.msra.mxu0 0.0
        %2138 = vmatpush.msra.mxu0 0.0
        %2139 = vmatpush.msra.mxu0 0.0
        %2140 = vmatpush.msra.mxu0 0.0
        %2141 = vmatpush.msra.mxu0 0.0
        %2142 = vmatpush.msra.mxu0 0.0
        %2143 = vmatpush.msra.mxu0 0.0
        %2144 = vmatpush.msra.mxu0 %v1111
        %2145 = vmatmul.f32.gmra.mxu0 %v1793
        %v2146 = vpop.f32.mrf.mxu0
        %v2147 = vadd.f32 %v1115, %v2146
        %2148 = vmatmul.f32.gmra.mxu0 %v1796
        %v2149 = vpop.f32.mrf.mxu0
        %v2150 = vadd.f32 %v1115, %v2149
        %2151 = vdwg.mxu0
        %v2152 = vsel %vm712, %v2124, 0.0
        %2153 = vadd.xlane.f32.xlu0 %v2152
        %v2154 = vpop.xlane.xlu0 %2153
        %v2155 = vsel %vm712, %v2127, 0.0
        %2156 = vadd.xlane.f32.xlu0 %v2155
        %v2157 = vpop.xlane.xlu0 %2156
        %v2158 = vmul.f32 %v2124, %v2124
        %v2159 = vmul.f32 %v2127, %v2127
        %v2160 = vsel %vm712, %v2158, 0.0
        %2161 = vadd.xlane.f32.xlu0 %v2160
        %v2162 = vpop.xlane.xlu0 %2161
        %v2163 = vsel %vm712, %v2159, 0.0
        %2164 = vadd.xlane.f32.xlu0 %v2163
        %v2165 = vpop.xlane.xlu0 %2164
        %v2166 = vsel %vm712, %v2147, 0.0
        %2167 = vadd.xlane.f32.xlu0 %v2166
        %v2168 = vpop.xlane.xlu0 %2167
        %v2169 = vsel %vm712, %v2150, 0.0
        %2170 = vadd.xlane.f32.xlu0 %v2169
        %v2171 = vpop.xlane.xlu0 %2170
        %v2172 = vadd.f32 %v2154, %v2168
        %v2173 = vadd.f32 %v2157, %v2171
        %v2174 = vmul.f32 %v2147, %v2147
        %v2175 = vmul.f32 %v2150, %v2150
        %v2176 = vsel %vm712, %v2174, 0.0
        %2177 = vadd.xlane.f32.xlu0 %v2176
        %v2178 = vpop.xlane.xlu0 %2177
        %v2179 = vsel %vm712, %v2175, 0.0
        %2180 = vadd.xlane.f32.xlu0 %v2179
        %v2181 = vpop.xlane.xlu0 %2180
        %v2182 = vadd.f32 %v2162, %v2178
        %v2183 = vadd.f32 %v2165, %v2181
        %v2184 = vsel %vm810, %v2172, 0.0
        %v2185 = vsel %vm810, %v2173, 0.0
        %v2186 = vadd.f32 %v2184, %v2185
        %2187 = vadd.xlane.f32.xlu0 %v2186
        %v2188 = vpop.xlane.xlu0 %2187
        %v2189 = vrot.slane %v2188, 4
        %v2190 = vadd.f32 %v2188, %v2189
        %v2191 = vrot.slane %v2190, 2
        %v2192 = vadd.f32 %v2190, %v2191
        %v2193 = vrot.slane %v2192, 1
        %v2194 = vadd.f32 %v2192, %v2193
        %s2195 = vtos %v2194
        %v2196 = vstv %s2195
        %v2197 = vsel %vm810, %v2182, 0.0
        %v2198 = vsel %vm810, %v2183, 0.0
        %v2199 = vadd.f32 %v2197, %v2198
        %2200 = vadd.xlane.f32.xlu0 %v2199
        %v2201 = vpop.xlane.xlu0 %2200
        %v2202 = vrot.slane %v2201, 4
        %v2203 = vadd.f32 %v2201, %v2202
        %v2204 = vrot.slane %v2203, 2
        %v2205 = vadd.f32 %v2203, %v2204
        %v2206 = vrot.slane %v2205, 1
        %v2207 = vadd.f32 %v2205, %v2206
        %s2208 = vtos %v2207
        %v2209 = vstv %s2208
        %v2210 = vmul.f32 %v2196, %v843
        %v2211 = vmul.f32 %v2210, 256.0
        %v2212 = vmul.f32 %v2211, %v2210
        %v2213 = vsub.f32 %v2209, %v2212
        %v2214 = vmul.f32 %v2213, %v854
        %v2215 = vmax.f32 %v2214, 1e-30
        %v2216 = vrsqrt.pop %v2215
        %v2217 = vmul.f32 %v2216, %v2215
        %v2218 = vmul.f32 %v2217, %v2216
        %v2219 = vmul.f32 0.5, %v2218
        %v2220 = vsub.f32 1.5, %v2219
        %v2221 = vmul.f32 %v2216, %v2220
        %v2222 = vmul.f32 %v2215, %v2221
        %vm2223 = vcmp.eq.f32.partialorder %v2215, inf
        %v2224 = vsel %vm2223, %v2215, %v2222
        %vm2225 = vcmp.eq.f32.partialorder %v2215, 0.0
        %v2226 = vand.u32 %v2215, 2147483648
        %v2227 = vsel %vm2225, %v2226, %v2224
        %v2228 = vrsqrt.pop %v2215
        %v2229 = vmul.f32 %v2228, %v2215
        %v2230 = vmul.f32 %v2229, %v2228
        %v2231 = vmul.f32 0.5, %v2230
        %v2232 = vsub.f32 1.5, %v2231
        %v2233 = vmul.f32 %v2228, %v2232
        %vm2234 = vweird.f32 %v2215
        %vm2235 = vweird.f32 %v2228
        %vm2236 = vmor %vm2234, %vm2235
        %v2237 = vsel %vm2236, %v2228, %v2233
        %v2238 = vlog2.pop %v2227
        %v2239 = vmul.f32 %v2238, 0.6931472
        %v2240 = vsub.f32 %v2124, %v2210
        %v2241 = vsub.f32 %v2127, %v2210
        %v2242 = vmul.f32 %v2240, %v2237
        %v2243 = vmul.f32 %v2241, %v2237
        %v2244 = vmul.f32 %v2242, %v2242
        %v2245 = vmul.f32 %v2243, %v2243
        %v2246 = vmul.f32 %v2244, -0.5
        %v2247 = vmul.f32 %v2245, -0.5
        %v2248 = vsub.f32 %v2246, %v2239
        %v2249 = vsub.f32 %v2247, %v2239
        %v2250 = vsub.f32 %v2248, 0.9189385
        %v2251 = vsub.f32 %v2249, 0.9189385
        %v2252 = vsub.f32 %v2147, %v2210
        %v2253 = vsub.f32 %v2150, %v2210
        %v2254 = vmul.f32 %v2252, %v2237
        %v2255 = vmul.f32 %v2253, %v2237
        %v2256 = vmul.f32 %v2254, %v2254
        %v2257 = vmul.f32 %v2255, %v2255
        %v2258 = vmul.f32 %v2256, -0.5
        %v2259 = vmul.f32 %v2257, -0.5
        %v2260 = vsub.f32 %v2258, %v2239
        %v2261 = vsub.f32 %v2259, %v2239
        %v2262 = vsub.f32 %v2260, 0.9189385
        %v2263 = vsub.f32 %v2261, 0.9189385
        %v2264 = vsel %vm712, %v2250, -inf
        %v2265 = vsel %vm712, %v2251, -inf
        %v2266 = vmax.f32 %v2264, %v2265
        %2267 = vmax.xlane.f32.xlu0 %v2266
        %v2268 = vpop.xlane.xlu0 %2267
        %v2269 = vrot.slane %v2268, 4
        %v2270 = vmax.f32 %v2268, %v2269
        %v2271 = vrot.slane %v2270, 2
        %v2272 = vmax.f32 %v2270, %v2271
        %v2273 = vrot.slane %v2272, 1
        %v2274 = vmax.f32 %v2272, %v2273
        %s2275 = vtos %v2274
        %v2276 = vstv %s2275
        %v2277 = vsel %vm712, %v2262, -inf
        %v2278 = vsel %vm712, %v2263, -inf
        %v2279 = vmax.f32 %v2277, %v2278
        %2280 = vmax.xlane.f32.xlu0 %v2279
        %v2281 = vpop.xlane.xlu0 %2280
        %v2282 = vrot.slane %v2281, 4
        %v2283 = vmax.f32 %v2281, %v2282
        %v2284 = vrot.slane %v2283, 2
        %v2285 = vmax.f32 %v2283, %v2284
        %v2286 = vrot.slane %v2285, 1
        %v2287 = vmax.f32 %v2285, %v2286
        %s2288 = vtos %v2287
        %v2289 = vstv %s2288
        %v2290 = vmax.f32 %v2276, %v2289
        %v2291 = vsub.f32 %v2250, %v2290
        %v2292 = vsub.f32 %v2251, %v2290
        %v2293 = vmul.f32 %v2291, 1.442695
        %v2294 = vpow.pop %v2293
        %v2295 = vmul.f32 %v2292, 1.442695
        %v2296 = vpow.pop %v2295
        %v2297 = vsel %vm712, %v2294, 0.0
        %v2298 = vsel %vm712, %v2296, 0.0
        %v2299 = vadd.f32 %v2297, %v2298
        %2300 = vadd.xlane.f32.xlu0 %v2299
        %v2301 = vpop.xlane.xlu0 %2300
        %v2302 = vrot.slane %v2301, 4
        %v2303 = vadd.f32 %v2301, %v2302
        %v2304 = vrot.slane %v2303, 2
        %v2305 = vadd.f32 %v2303, %v2304
        %v2306 = vrot.slane %v2305, 1
        %v2307 = vadd.f32 %v2305, %v2306
        %s2308 = vtos %v2307
        %v2309 = vstv %s2308
        %v2310 = vsub.f32 %v2262, %v2290
        %v2311 = vsub.f32 %v2263, %v2290
        %v2312 = vmul.f32 %v2310, 1.442695
        %v2313 = vpow.pop %v2312
        %v2314 = vmul.f32 %v2311, 1.442695
        %v2315 = vpow.pop %v2314
        %v2316 = vsel %vm712, %v2313, 0.0
        %v2317 = vsel %vm712, %v2315, 0.0
        %v2318 = vadd.f32 %v2316, %v2317
        %2319 = vadd.xlane.f32.xlu0 %v2318
        %v2320 = vpop.xlane.xlu0 %2319
        %v2321 = vrot.slane %v2320, 4
        %v2322 = vadd.f32 %v2320, %v2321
        %v2323 = vrot.slane %v2322, 2
        %v2324 = vadd.f32 %v2322, %v2323
        %v2325 = vrot.slane %v2324, 1
        %v2326 = vadd.f32 %v2324, %v2325
        %s2327 = vtos %v2326
        %v2328 = vstv %s2327
        %v2329 = vadd.f32 %v2309, %v2328
        %v2330 = vlog2.pop %v2329
        %v2331 = vmul.f32 %v2330, 0.6931472
        %v2332 = vadd.f32 %v2290, %v2331
        %v2333 = vmul.f32 %v2290, 1.442695
        %v2334 = vpow.pop %v2333
        %v2335 = vmul.f32 %v2334, %v2329
        %v2336 = vadd.f32 %v2335, 1.0
        %v2337 = vlog2.pop %v2336
        %v2338 = vmul.f32 %v2337, 0.6931472
        %v2339 = vsub.f32 0.0, %v2290
        %v2340 = vmul.f32 %v2339, 1.442695
        %v2341 = vpow.pop %v2340
        %v2342 = vadd.f32 %v2341, %v2329
        %v2343 = vlog2.pop %v2342
        %v2344 = vmul.f32 %v2343, 0.6931472
        %v2345 = vadd.f32 %v2290, %v2344
        %vm2346 = vcmp.lt.f32.partialorder %v2290, 0.0
        %v2347 = vsel %vm2346, %v2338, %v2345
        %v2348 = vsub.f32 %v2347, %v2332
        %v2349 = vmul.f32 %v2172, %v996
        %v2350 = vmul.f32 %v2173, %v996
        %v2351 = vmul.f32 %v2182, %v996
        %v2352 = vmul.f32 %v2183, %v996
        %v2353 = vmul.f32 %v2349, %v2349
        %v2354 = vmul.f32 %v2350, %v2350
        %v2355 = vsub.f32 %v2351, %v2353
        %v2356 = vsub.f32 %v2352, %v2354
        %v2357 = vmax.f32 %v2355, 0.0
        %v2358 = vmax.f32 %v2356, 0.0
        %v2359 = vmul.f32 %v2348, %v2348
        %v2360 = vmul.f32 %v2359, %v2357
        %v2361 = vmul.f32 %v2359, %v2358
        %v2362 = vadd.f32 %v2360, 1e-05
        %v2363 = vadd.f32 %v2361, 1e-05
        %v2364 = vrsqrt.pop %v2362
        %v2365 = vmul.f32 %v2364, %v2362
        %v2366 = vmul.f32 %v2365, %v2364
        %v2367 = vmul.f32 0.5, %v2366
        %v2368 = vsub.f32 1.5, %v2367
        %v2369 = vmul.f32 %v2364, %v2368
        %vm2370 = vweird.f32 %v2362
        %vm2371 = vweird.f32 %v2364
        %vm2372 = vmor %vm2370, %vm2371
        %v2373 = vsel %vm2372, %v2364, %v2369
        %v2374 = vrsqrt.pop %v2363
        %v2375 = vmul.f32 %v2374, %v2363
        %v2376 = vmul.f32 %v2375, %v2374
        %v2377 = vmul.f32 0.5, %v2376
        %v2378 = vsub.f32 1.5, %v2377
        %v2379 = vmul.f32 %v2374, %v2378
        %vm2380 = vweird.f32 %v2363
        %vm2381 = vweird.f32 %v2374
        %vm2382 = vmor %vm2380, %vm2381
        %v2383 = vsel %vm2382, %v2374, %v2379
        %v2384 = vmul.f32 %v2348, %v2349
        %v2385 = vmul.f32 %v2348, %v2350
        %v2386 = vmul.f32 %v2348, %v2124
        %v2387 = vmul.f32 %v2348, %v2127
        %v2388 = vsub.f32 %v2386, %v2384
        %v2389 = vsub.f32 %v2387, %v2385
        %v2390 = vmul.f32 %v2388, %v2373
        %v2391 = vmul.f32 %v2389, %v2383
        %v2392 = vmul.f32 %v2390, %v1389
        %v2393 = vmul.f32 %v2391, %v1389
        %v2394 = vadd.f32 %v2392, %v1394
        %v2395 = vadd.f32 %v2393, %v1394
        %v2396 = vmul.f32 %v2348, %v2147
        %v2397 = vmul.f32 %v2348, %v2150
        %v2398 = vsub.f32 %v2396, %v2384
        %v2399 = vsub.f32 %v2397, %v2385
        %v2400 = vmul.f32 %v2398, %v2373
        %v2401 = vmul.f32 %v2399, %v2383
        %v2402 = vmul.f32 %v2400, %v1405
        %v2403 = vmul.f32 %v2401, %v1405
        %v2404 = vadd.f32 %v2402, %v1410
        %v2405 = vadd.f32 %v2403, %v1410
        %v2406 = vsel %vm1066, %v2210, 0.0
        %v2407 = vsel %vm1068, %v2227, 0.0
        %v2408 = vadd.f32 %v2406, %v2407
        %v2409 = vadd.f32 %v2408, %v1072
        %v2410 = vsel %vm1074, %v2347, 0.0
        %v2411 = vadd.f32 %v2409, %v2410
        %v2412 = vsel %vm1077, %v2348, 0.0
        %v2413 = vadd.f32 %v2411, %v2412
        %2414 = vmatpush.msra.mxu0 0.0
        %2415 = vmatpush.msra.mxu0 0.0
        %2416 = vmatpush.msra.mxu0 0.0
        %2417 = vmatpush.msra.mxu0 0.0
        %2418 = vmatpush.msra.mxu0 0.0
        %2419 = vmatpush.msra.mxu0 0.0
        %2420 = vmatpush.msra.mxu0 0.0
        %2421 = vmatpush.msra.mxu0 0.0
        %2422 = vmatpush.msra.mxu0 0.0
        %2423 = vmatpush.msra.mxu0 0.0
        %2424 = vmatpush.msra.mxu0 0.0
        %2425 = vmatpush.msra.mxu0 0.0
        %2426 = vmatpush.msra.mxu0 0.0
        %2427 = vmatpush.msra.mxu0 0.0
        %2428 = vmatpush.msra.mxu0 %v2097
        %2429 = vmatpush.msra.mxu0 %v2096
        %2430 = vmatmul.f32.gmra.mxu0 %v1429
        %v2431 = vpop.f32.mrf.mxu0
        %v2432 = vadd.f32 0.0, %v2431
        %2433 = vmatmul.f32.gmra.mxu0 %v1432
        %v2434 = vpop.f32.mrf.mxu0
        %v2435 = vadd.f32 0.0, %v2434
        %2436 = vdwg.mxu0
        %2437 = vmatpush.msra.mxu0 0.0
        %2438 = vmatpush.msra.mxu0 0.0
        %2439 = vmatpush.msra.mxu0 0.0
        %2440 = vmatpush.msra.mxu0 0.0
        %2441 = vmatpush.msra.mxu0 0.0
        %2442 = vmatpush.msra.mxu0 0.0
        %2443 = vmatpush.msra.mxu0 0.0
        %2444 = vmatpush.msra.mxu0 0.0
        %2445 = vmatpush.msra.mxu0 0.0
        %2446 = vmatpush.msra.mxu0 0.0
        %2447 = vmatpush.msra.mxu0 0.0
        %2448 = vmatpush.msra.mxu0 0.0
        %2449 = vmatpush.msra.mxu0 0.0
        %2450 = vmatpush.msra.mxu0 0.0
        %2451 = vmatpush.msra.mxu0 %v2087
        %2452 = vmatpush.msra.mxu0 %v2086
        %2453 = vmatmul.f32.gmra.mxu0 %v1458
        %v2454 = vpop.f32.mrf.mxu0
        %v2455 = vadd.f32 %v2432, %v2454
        %2456 = vmatmul.f32.gmra.mxu0 %v1461
        %v2457 = vpop.f32.mrf.mxu0
        %v2458 = vadd.f32 %v2435, %v2457
        %2459 = vdwg.mxu0
        %2460 = vmatpush.msra.mxu0 0.0
        %2461 = vmatpush.msra.mxu0 0.0
        %2462 = vmatpush.msra.mxu0 0.0
        %2463 = vmatpush.msra.mxu0 0.0
        %2464 = vmatpush.msra.mxu0 0.0
        %2465 = vmatpush.msra.mxu0 0.0
        %2466 = vmatpush.msra.mxu0 0.0
        %2467 = vmatpush.msra.mxu0 0.0
        %2468 = vmatpush.msra.mxu0 0.0
        %2469 = vmatpush.msra.mxu0 0.0
        %2470 = vmatpush.msra.mxu0 0.0
        %2471 = vmatpush.msra.mxu0 0.0
        %2472 = vmatpush.msra.mxu0 0.0
        %2473 = vmatpush.msra.mxu0 0.0
        %2474 = vmatpush.msra.mxu0 %v2405
        %2475 = vmatpush.msra.mxu0 %v2404
        %2476 = vmatmul.f32.gmra.mxu0 %v1493
        %v2477 = vpop.f32.mrf.mxu0
        %v2478 = vadd.f32 0.0, %v2477
        %2479 = vmatmul.f32.gmra.mxu0 %v1496
        %v2480 = vpop.f32.mrf.mxu0
        %v2481 = vadd.f32 0.0, %v2480
        %2482 = vdwg.mxu0
        %2483 = vmatpush.msra.mxu0 0.0
        %2484 = vmatpush.msra.mxu0 0.0
        %2485 = vmatpush.msra.mxu0 0.0
        %2486 = vmatpush.msra.mxu0 0.0
        %2487 = vmatpush.msra.mxu0 0.0
        %2488 = vmatpush.msra.mxu0 0.0
        %2489 = vmatpush.msra.mxu0 0.0
        %2490 = vmatpush.msra.mxu0 0.0
        %2491 = vmatpush.msra.mxu0 0.0
        %2492 = vmatpush.msra.mxu0 0.0
        %2493 = vmatpush.msra.mxu0 0.0
        %2494 = vmatpush.msra.mxu0 0.0
        %2495 = vmatpush.msra.mxu0 0.0
        %2496 = vmatpush.msra.mxu0 0.0
        %2497 = vmatpush.msra.mxu0 %v2395
        %2498 = vmatpush.msra.mxu0 %v2394
        %2499 = vmatmul.f32.gmra.mxu0 %v1522
        %v2500 = vpop.f32.mrf.mxu0
        %v2501 = vadd.f32 %v2478, %v2500
        %2502 = vmatmul.f32.gmra.mxu0 %v1525
        %v2503 = vpop.f32.mrf.mxu0
        %v2504 = vadd.f32 %v2481, %v2503
        %2505 = vdwg.mxu0
        %v2507 = vsel %vm712, %v2501, 0
        %v2510 = vsel %vm712, %v2504, 0
        %2512 = vmatpush.msra.mxu0 0.0
        %2513 = vmatpush.msra.mxu0 0.0
        %2514 = vmatpush.msra.mxu0 0.0
        %2515 = vmatpush.msra.mxu0 0.0
        %2516 = vmatpush.msra.mxu0 0.0
        %2517 = vmatpush.msra.mxu0 0.0
        %2518 = vmatpush.msra.mxu0 0.0
        %2519 = vmatpush.msra.mxu0 0.0
        %2520 = vmatpush.msra.mxu0 0.0
        %2521 = vmatpush.msra.mxu0 0.0
        %2522 = vmatpush.msra.mxu0 0.0
        %2523 = vmatpush.msra.mxu0 0.0
        %2524 = vmatpush.msra.mxu0 0.0
        %2525 = vmatpush.msra.mxu0 0.0
        %2526 = vmatpush.msra.mxu0 0.0
        %2527 = vmatpush.msra.mxu0 %v1552
        %2528 = vmatmul.f32.gmra.mxu0 %v2507
        %v2529 = vpop.f32.mrf.mxu0
        %v2530 = vadd.f32 0.0, %v2529
        %2531 = vmatmul.f32.gmra.mxu0 %v2510
        %v2532 = vpop.f32.mrf.mxu0
        %v2533 = vadd.f32 0.0, %v2532
        %2534 = vdwg.mxu0
        %v2536 = vsel %vm712, %v2455, 0
        %v2539 = vsel %vm712, %v2458, 0
        %2541 = vmatpush.msra.mxu0 0.0
        %2542 = vmatpush.msra.mxu0 0.0
        %2543 = vmatpush.msra.mxu0 0.0
        %2544 = vmatpush.msra.mxu0 0.0
        %2545 = vmatpush.msra.mxu0 0.0
        %2546 = vmatpush.msra.mxu0 0.0
        %2547 = vmatpush.msra.mxu0 0.0
        %2548 = vmatpush.msra.mxu0 0.0
        %2549 = vmatpush.msra.mxu0 0.0
        %2550 = vmatpush.msra.mxu0 0.0
        %2551 = vmatpush.msra.mxu0 0.0
        %2552 = vmatpush.msra.mxu0 0.0
        %2553 = vmatpush.msra.mxu0 0.0
        %2554 = vmatpush.msra.mxu0 0.0
        %2555 = vmatpush.msra.mxu0 0.0
        %2556 = vmatpush.msra.mxu0 %v1550
        %2557 = vmatmul.f32.gmra.mxu0 %v2536
        %v2558 = vpop.f32.mrf.mxu0
        %v2559 = vadd.f32 %v2530, %v2558
        %2560 = vmatmul.f32.gmra.mxu0 %v2539
        %v2561 = vpop.f32.mrf.mxu0
        %v2562 = vadd.f32 %v2533, %v2561
        %2563 = vdwg.mxu0
        %2564 = vmatpush.msra.mxu0 0.0
        %2565 = vmatpush.msra.mxu0 0.0
        %2566 = vmatpush.msra.mxu0 0.0
        %2567 = vmatpush.msra.mxu0 0.0
        %2568 = vmatpush.msra.mxu0 0.0
        %2569 = vmatpush.msra.mxu0 0.0
        %2570 = vmatpush.msra.mxu0 0.0
        %2571 = vmatpush.msra.mxu0 0.0
        %2572 = vmatpush.msra.mxu0 0.0
        %2573 = vmatpush.msra.mxu0 0.0
        %2574 = vmatpush.msra.mxu0 0.0
        %2575 = vmatpush.msra.mxu0 0.0
        %2576 = vmatpush.msra.mxu0 0.0
        %2577 = vmatpush.msra.mxu0 0.0
        %2578 = vmatpush.msra.mxu0 0.0
        %2579 = vmatpush.msra.mxu0 %v1612
        %2580 = vmatmul.f32.gmra.mxu0 %v1793
        %v2581 = vpop.f32.mrf.mxu0
        %v2582 = vadd.f32 0.0, %v2581
        %2583 = vmatmul.f32.gmra.mxu0 %v1796
        %v2584 = vpop.f32.mrf.mxu0
        %v2585 = vadd.f32 0.0, %v2584
        %2586 = vdwg.mxu0
        %v2587 = vadd.f32 %v2559, %v2582
        %v2588 = vadd.f32 %v2562, %v2585
        %v2589 = vadd.f32 %v2587, %v1640
        %v2590 = vadd.f32 %v2588, %v1640
        %v2591 = vxor.u32 %v2589, 2147483648
        %v2592 = vxor.u32 %v2590, 2147483648
        %v2593 = vmul.f32 %v2591, 1.442695
        %v2594 = vpow.pop %v2593
        %v2595 = vmul.f32 %v2592, 1.442695
        %v2596 = vpow.pop %v2595
        %v2597 = vadd.f32 %v2594, 1.0
        %v2598 = vadd.f32 %v2596, 1.0
        %v2599 = vrcp.pop %v2597
        %v2600 = vmul.f32 %v2597, %v2599
        %v2601 = vsub.f32 1.0, %v2600
        %v2602 = vmul.f32 %v2599, %v2601
        %v2603 = vadd.f32 %v2599, %v2602
        %vm2604 = vweird.f32 %v2597
        %vm2605 = vweird.f32 %v2599
        %vm2606 = vmor %vm2604, %vm2605
        %v2607 = vsel %vm2606, %v2599, %v2603
        %v2608 = vand.u32 2147483647, %v2597
        %vm2609 = vcmp.eq.f32.partialorder %v2608, 8.507059e+37
        %v2610 = vand.u32 %v2597, 2147483648
        %v2611 = vor.u32 1.1754944e-38, %v2610
        %v2612 = vsel %vm2609, %v2611, %v2607
        %v2613 = vmul.f32 1.0, %v2612
        %v2614 = vrcp.pop %v2598
        %v2615 = vmul.f32 %v2598, %v2614
        %v2616 = vsub.f32 1.0, %v2615
        %v2617 = vmul.f32 %v2614, %v2616
        %v2618 = vadd.f32 %v2614, %v2617
        %vm2619 = vweird.f32 %v2598
        %vm2620 = vweird.f32 %v2614
        %vm2621 = vmor %vm2619, %vm2620
        %v2622 = vsel %vm2621, %v2614, %v2618
        %v2623 = vand.u32 2147483647, %v2598
        %vm2624 = vcmp.eq.f32.partialorder %v2623, 8.507059e+37
        %v2625 = vand.u32 %v2598, 2147483648
        %v2626 = vor.u32 1.1754944e-38, %v2625
        %v2627 = vsel %vm2624, %v2626, %v2622
        %v2628 = vmul.f32 1.0, %v2627
        %2629 = vmatpush.msra.mxu0 0.0
        %2630 = vmatpush.msra.mxu0 0.0
        %2631 = vmatpush.msra.mxu0 0.0
        %2632 = vmatpush.msra.mxu0 0.0
        %2633 = vmatpush.msra.mxu0 0.0
        %2634 = vmatpush.msra.mxu0 0.0
        %2635 = vmatpush.msra.mxu0 0.0
        %2636 = vmatpush.msra.mxu0 0.0
        %2637 = vmatpush.msra.mxu0 0.0
        %2638 = vmatpush.msra.mxu0 0.0
        %2639 = vmatpush.msra.mxu0 0.0
        %2640 = vmatpush.msra.mxu0 0.0
        %2641 = vmatpush.msra.mxu0 0.0
        %2642 = vmatpush.msra.mxu0 0.0
        %2643 = vmatpush.msra.mxu0 0.0
        %2644 = vmatpush.msra.mxu0 %v1684
        %2645 = vmatmul.f32.gmra.mxu0 %v2507
        %v2646 = vpop.f32.mrf.mxu0
        %v2647 = vadd.f32 0.0, %v2646
        %2648 = vmatmul.f32.gmra.mxu0 %v2510
        %v2649 = vpop.f32.mrf.mxu0
        %v2650 = vadd.f32 0.0, %v2649
        %2651 = vdwg.mxu0
        %2652 = vmatpush.msra.mxu0 0.0
        %2653 = vmatpush.msra.mxu0 0.0
        %2654 = vmatpush.msra.mxu0 0.0
        %2655 = vmatpush.msra.mxu0 0.0
        %2656 = vmatpush.msra.mxu0 0.0
        %2657 = vmatpush.msra.mxu0 0.0
        %2658 = vmatpush.msra.mxu0 0.0
        %2659 = vmatpush.msra.mxu0 0.0
        %2660 = vmatpush.msra.mxu0 0.0
        %2661 = vmatpush.msra.mxu0 0.0
        %2662 = vmatpush.msra.mxu0 0.0
        %2663 = vmatpush.msra.mxu0 0.0
        %2664 = vmatpush.msra.mxu0 0.0
        %2665 = vmatpush.msra.mxu0 0.0
        %2666 = vmatpush.msra.mxu0 0.0
        %2667 = vmatpush.msra.mxu0 %v1682
        %2668 = vmatmul.f32.gmra.mxu0 %v2536
        %v2669 = vpop.f32.mrf.mxu0
        %v2670 = vadd.f32 %v2647, %v2669
        %2671 = vmatmul.f32.gmra.mxu0 %v2539
        %v2672 = vpop.f32.mrf.mxu0
        %v2673 = vadd.f32 %v2650, %v2672
        %2674 = vdwg.mxu0
        %2675 = vrot.lane.b32.xlu0 %v1790, 8
        %v2676 = vpop.permute.xlu0 %2675
        %2677 = vrot.lane.b32.xlu0 %v1791, 8
        %v2678 = vpop.permute.xlu0 %2677
        %v2681 = vmul.f32 %v2613, %v2676
        %v2682 = vmul.f32 %v2628, %v2678
        %2685 = vrot.lane.b32.xlu0 %v2681, 120
        %v2686 = vpop.permute.xlu0 %2685
        %2687 = vrot.lane.b32.xlu0 %v2682, 120
        %v2688 = vpop.permute.xlu0 %2687
        %v2689 = vsel %vm712, %v2686, 0
        %v2691 = vsel %vm712, %v2688, 0
        %2693 = vmatpush.msra.mxu0 0.0
        %2694 = vmatpush.msra.mxu0 0.0
        %2695 = vmatpush.msra.mxu0 0.0
        %2696 = vmatpush.msra.mxu0 0.0
        %2697 = vmatpush.msra.mxu0 0.0
        %2698 = vmatpush.msra.mxu0 0.0
        %2699 = vmatpush.msra.mxu0 0.0
        %2700 = vmatpush.msra.mxu0 0.0
        %2701 = vmatpush.msra.mxu0 0.0
        %2702 = vmatpush.msra.mxu0 0.0
        %2703 = vmatpush.msra.mxu0 0.0
        %2704 = vmatpush.msra.mxu0 0.0
        %2705 = vmatpush.msra.mxu0 0.0
        %2706 = vmatpush.msra.mxu0 0.0
        %2707 = vmatpush.msra.mxu0 0.0
        %2708 = vmatpush.msra.mxu0 %v1740
        %2709 = vmatmul.f32.gmra.mxu0 %v2689
        %v2710 = vpop.f32.mrf.mxu0
        %v2711 = vadd.f32 0.0, %v2710
        %2712 = vmatmul.f32.gmra.mxu0 %v2691
        %v2713 = vpop.f32.mrf.mxu0
        %v2714 = vadd.f32 0.0, %v2713
        %2715 = vdwg.mxu0
        %v2716 = vadd.f32 %v2670, %v2711
        %v2717 = vadd.f32 %v2673, %v2714
        %v2718 = vadd.f32 %v2716, %v1778
        %v2719 = vadd.f32 %v2717, %v1778
        %v2720 = vtanh.pop %v2718
        %v2721 = vtanh.pop %v2719
        %v2722 = vsub.f32 1.0, %v2613
        %v2723 = vsub.f32 1.0, %v2628
        %v2724 = vmul.f32 %v2722, %v1790
        %v2725 = vmul.f32 %v2723, %v1791
        %v2726 = vmul.f32 %v2613, %v2720
        %v2727 = vmul.f32 %v2628, %v2721
        %v2728 = vadd.f32 %v2724, %v2726
        %v2729 = vadd.f32 %v2725, %v2727
        %v2730 = vld [vmem:[%s697] sm:$0xff]
        %v2731 = vld [vmem:[%s697 + $0x8] sm:$0xff]
        %v2732 = vld [vmem:[%s11] sm:$0xff]
        %v2733 = vld [vmem:[#allocation11] sm:$0x1]
        %2735 = vset.pattern.permute.xlu0 0
        %2736 = vperm.xlu0 %2735, %v2730
        %v2737 = vpop.permute.xlu0 %2736
        %2740 = vset.pattern.permute.xlu0 0
        %2741 = vperm.xlu0 %2740, %v2731
        %v2742 = vpop.permute.xlu0 %2741
        %v2745 = vperm.slane %v2733, 0
        %v2747 = vmul.f32 %v2737, %v2745
        %v2748 = vmul.f32 %v2742, %v2745
        %v2750 = vsel %vm712, %v2728, 0
        %v2753 = vsel %vm712, %v2729, 0
        %2755 = vmatpush.msra.mxu0 0.0
        %2756 = vmatpush.msra.mxu0 0.0
        %2757 = vmatpush.msra.mxu0 0.0
        %2758 = vmatpush.msra.mxu0 0.0
        %2759 = vmatpush.msra.mxu0 0.0
        %2760 = vmatpush.msra.mxu0 0.0
        %2761 = vmatpush.msra.mxu0 0.0
        %2762 = vmatpush.msra.mxu0 0.0
        %2763 = vmatpush.msra.mxu0 0.0
        %2764 = vmatpush.msra.mxu0 0.0
        %2765 = vmatpush.msra.mxu0 0.0
        %2766 = vmatpush.msra.mxu0 0.0
        %2767 = vmatpush.msra.mxu0 0.0
        %2768 = vmatpush.msra.mxu0 0.0
        %2769 = vmatpush.msra.mxu0 0.0
        %2770 = vmatpush.msra.mxu0 %v2732
        %2771 = vmatmul.f32.gmra.mxu0 %v2750
        %v2772 = vpop.f32.mrf.mxu0
        %v2773 = vadd.f32 %v2747, %v2772
        %2774 = vmatmul.f32.gmra.mxu0 %v2753
        %v2775 = vpop.f32.mrf.mxu0
        %v2776 = vadd.f32 %v2748, %v2775
        %2777 = vdwg.mxu0
        %v2778 = vld [vmem:[#allocation12] sm:$0x1]
        %v2780 = vperm.slane %v2778, 0
        %v2782 = vadd.f32 %v2773, %v2780
        %v2783 = vadd.f32 %v2776, %v2780
        %v2784 = vtanh.pop %v2782
        %v2785 = vtanh.pop %v2783
        %v2786 = vld [vmem:[%s14] sm:$0xff]
        %v2787 = vld [vmem:[#allocation2] sm:$0x1]
        %v2789 = vperm.slane %v2787, 0
        %v2792 = vsel %vm712, %v2784, 0
        %v2795 = vsel %vm712, %v2785, 0
        %2797 = vmatpush.msra.mxu0 0.0
        %2798 = vmatpush.msra.mxu0 0.0
        %2799 = vmatpush.msra.mxu0 0.0
        %2800 = vmatpush.msra.mxu0 0.0
        %2801 = vmatpush.msra.mxu0 0.0
        %2802 = vmatpush.msra.mxu0 0.0
        %2803 = vmatpush.msra.mxu0 0.0
        %2804 = vmatpush.msra.mxu0 0.0
        %2805 = vmatpush.msra.mxu0 0.0
        %2806 = vmatpush.msra.mxu0 0.0
        %2807 = vmatpush.msra.mxu0 0.0
        %2808 = vmatpush.msra.mxu0 0.0
        %2809 = vmatpush.msra.mxu0 0.0
        %2810 = vmatpush.msra.mxu0 0.0
        %2811 = vmatpush.msra.mxu0 0.0
        %2812 = vmatpush.msra.mxu0 %v2786
        %2813 = vmatmul.f32.gmra.mxu0 %v2792
        %v2814 = vpop.f32.mrf.mxu0
        %v2815 = vadd.f32 %v2789, %v2814
        %2816 = vmatmul.f32.gmra.mxu0 %v2795
        %v2817 = vpop.f32.mrf.mxu0
        %v2818 = vadd.f32 %v2789, %v2817
        %2819 = vdwg.mxu0
        %2820 = vst.msk [vmem:[%s702] sm:$0xff] %vm810, %v2815
        %2821 = vst.msk [vmem:[%s702 + $0x8] sm:$0xff] %vm810, %v2818
        %vm2822 = vcmask 1040384
        %v2823 = vsel %vm2822, %v1079, %v1421
        %vm2824 = vcmask 1041408
        %v2825 = vsel %vm2824, %v2823, %v2105
        %vm2826 = vcmask 1042432
        %v2827 = vsel %vm2826, %v2825, %v2413
        %vm2828 = vcmask 60416
        %2829 = vst.msk [vmem:[%s687] sm:$0xf] %vm2828, %v2827
        %p2830 = scmp.lt.s32.totalorder %s40, 7
        %s2831 = scalar_select %p2830, %s40, 7
        %s2832 = smul.addr %s2831, 2
        %s2833 = smul.addr %s2832, 8
        %s2834 = scalar_lea.vmem %s16, %s2833
        %s2835 = sand.u32 %s425, 1
        %s2836 = scalar_lea.sflag [#allocation5], %s2835
        %s2837 = sand.u32 %s425, 1
        %s2838 = smul.addr %s2837, 4
        %s2839 = scalar_lea.vmem [#allocation14], %s2838
        // Predicated region
        $region109: #{ggnn_fused_batched.1} parent=83 // pred_check
          %p2840 = pneg %p409
        $region110: #{ggnn_fused_batched.1} parent=83 // pred_check_branch
          %2842 = sbr.rel (%p2840) target = $region112
        $region111: #{ggnn_fused_batched.1} parent=83 // pred_region
          _
        $region112: #{ggnn_fused_batched.1} parent=83 // pred_fallthru
          _
        // Predicated region
        $region113: #{ggnn_fused_batched.1} parent=83 // pred_check
          %p2843 = pneg %p435
        $region114: #{ggnn_fused_batched.1} parent=83 // pred_check_branch
          %2845 = sbr.rel (%p2843) target = $region116
        $region115: #{ggnn_fused_batched.1} parent=83 // pred_region
          %2847 = vsyncadd %s2836, 0
          %s2848 = smul.addr %s40, 4
          %s2849 = scalar_lea.hbm %s17, %s2848
          %s2851 = sshll.u32 %s2839, 4
          %s2852 = int_to_ptr.vmem [resolvable:$true] %s2851
          %s2853 = sshll.u32 %s2849, 4
          %s2854 = int_to_ptr.hbm [resolvable:$true] %s2853
          %2856 = dma.vmem_to_hbm [thread:$0]  %s2852, 64, %s2854, %s2836
        $region116: #{ggnn_fused_batched.1} parent=83 // pred_fallthru
          _
      $region84: #{ggnn_fused_batched.1} parent=5 // pred_fallthru
        _
      %p2857 = scmp.le.s32.totalorder 2, %s35
      // Predicated region
      $region117: #{ggnn_fused_batched.1} parent=5 // pred_check
        %p2858 = pneg %p2857
      $region118: #{ggnn_fused_batched.1} parent=5 // pred_check_branch
        %2860 = sbr.rel (%p2858) target = $region120
      $region119: #{ggnn_fused_batched.1} parent=5 // pred_region
        %s2861 = ssub.s32 %s35, 2
        // Predicated region
        $region121: #{ggnn_fused_batched.1} parent=119 // pred_check
          %p2862 = pneg %p415
        $region122: #{ggnn_fused_batched.1} parent=119 // pred_check_branch
          %2864 = sbr.rel (%p2862) target = $region124
        $region123: #{ggnn_fused_batched.1} parent=119 // pred_region
          %p2865 = scmp.lt.s32.totalorder %s41, 7
          %s2866 = scalar_select %p2865, %s41, 7
          %s2867 = smul.addr %s2866, 2
          %s2868 = smul.addr %s2867, 8
          %s2869 = scalar_lea.vmem %s16, %s2868
        $region124: #{ggnn_fused_batched.1} parent=119 // pred_fallthru
          _
        // Predicated region
        $region125: #{ggnn_fused_batched.1} parent=119 // pred_check
          %p2870 = pneg %p441
        $region126: #{ggnn_fused_batched.1} parent=119 // pred_check_branch
          %2872 = sbr.rel (%p2870) target = $region128
        $region127: #{ggnn_fused_batched.1} parent=119 // pred_region
          %s2873 = sand.u32 %s426, 1
          %s2874 = scalar_lea.sflag [#allocation5], %s2873
          %s2875 = sand.u32 %s426, 1
          %s2876 = smul.addr %s2875, 4
          %s2877 = scalar_lea.vmem [#allocation14], %s2876
          %2879 = dma.done %s2874, 64
        $region128: #{ggnn_fused_batched.1} parent=119 // pred_fallthru
          _
      $region120: #{ggnn_fused_batched.1} parent=5 // pred_fallthru
        _
    $region6: #{ggnn_fused_batched.1} parent=1 // loop_footer
      %s39 = sadd.s32 1, %s35
    $region7: #{ggnn_fused_batched.1} parent=1 // loop_footer_branch
      %34 = sbr.rel target = $region3
    $region8: #{ggnn_fused_batched.1} parent=1 // loop_exit
      _
    %2880 = vsyncpa [#allocation4], 1
    %s2881 = scalar_lea.sflag [#allocation4], 1
    %2882 = vsyncpa %s2881, 1
    %2883 = vsyncpa [#allocation7], 1
    %2884 = vsyncpa [#allocation10], 1
    %2885 = vsyncpa [#allocation13], 1
    %2886 = vsyncpa [#allocation5], 1
    %s2887 = scalar_lea.sflag [#allocation5], 1
    %2888 = vsyncpa %s2887, 1

</llo_original>
